<compile_context>
chip_gen: v7x
topology: tpu7x:2x2x1
jax: 0.10.0
libtpu: 0.0.40
codegen_flags: <defaults>
</compile_context>

<pallas_src>
import functools
import math

import jax
import jax.numpy as jnp
from jax.experimental import pallas as pl
from jax.experimental.pallas import tpu as pltpu


def _round_up(x, m):
    return (x + m - 1) // m * m


def _pick_row_tile(m):
    # Cap at 256 so M >= 512 yields >= 2 parallel row tiles (v7x has 2 TCs).
    if m >= 512:
        return 256
    if m >= 256:
        return 128
    return _round_up(m, 8)


def _cparams(*sem):
    return pltpu.CompilerParams(dimension_semantics=sem,
                                vmem_limit_bytes=32 * 1024 * 1024)


# ----------------------------------------------------------------------------
# Matmul kernels: y = act(x @ w + b) [+ residual], bf16 MXU inputs, f32 accum.
# ----------------------------------------------------------------------------
def _mm_kernel_nk1(*refs, act, has_res):
    """Single-K-block fast path: no accumulator scratch."""
    if has_res:
        x_ref, w_ref, b_ref, r_ref, o_ref = refs
    else:
        x_ref, w_ref, b_ref, o_ref = refs
        r_ref = None
    y = jnp.dot(x_ref[...].astype(jnp.bfloat16), w_ref[...],
                preferred_element_type=jnp.float32)
    y = y + b_ref[...]
    if act == "relu":
        y = jnp.maximum(y, 0.0)
    if r_ref is not None:
        y = y + r_ref[...].astype(jnp.float32)
    o_ref[...] = y.astype(o_ref.dtype)


def _mm_kernel_acc(*refs, act, nk, has_res):
    """General path: K reduction with a VMEM accumulator (unused at toy sizes)."""
    if has_res:
        x_ref, w_ref, b_ref, r_ref, o_ref, acc_ref = refs
    else:
        x_ref, w_ref, b_ref, o_ref, acc_ref = refs
        r_ref = None
    k = pl.program_id(2)

    @pl.when(k == 0)
    def _():
        acc_ref[...] = jnp.zeros_like(acc_ref)

    acc_ref[...] += jnp.dot(x_ref[...].astype(jnp.bfloat16),
                            w_ref[...].astype(jnp.bfloat16),
                            preferred_element_type=jnp.float32)

    @pl.when(k == nk - 1)
    def _():
        y = acc_ref[...] + b_ref[...]
        if act == "relu":
            y = jnp.maximum(y, 0.0)
        if r_ref is not None:
            y = y + r_ref[...].astype(jnp.float32)
        o_ref[...] = y.astype(o_ref.dtype)


def matmul_bias(x, wp, bp, n_out, *, act="none", residual=None,
                out_dtype=jnp.bfloat16, out_pad=False):
    """act(x @ wp + bp)(+res).  wp: pre-padded (K, Np) bf16, bp: (1, Np) f32."""
    M, K = x.shape
    Np = wp.shape[1]
    TM = _pick_row_tile(M)
    Mp = _round_up(M, TM)
    TN = 256 if Np % 256 == 0 else 128          # v6e: prefer 256-wide N tiles
    TK = 256 if (K > 512 and K % 256 == 0) else K
    nk = K // TK

    xp = x if Mp == M else jnp.pad(x, ((0, Mp - M), (0, 0)))
    has_res = residual is not None
    inputs = [xp, wp, bp]
    if has_res:
        r = residual
        if r.dtype != jnp.bfloat16:
            r = r.astype(jnp.bfloat16)
        if r.shape != (Mp, Np):
            r = jnp.pad(r, ((0, Mp - M), (0, Np - r.shape[1])))
        inputs.append(r)

    if nk == 1:
        in_specs = [pl.BlockSpec((TM, K), lambda m, n: (m, 0)),
                    pl.BlockSpec((K, TN), lambda m, n: (0, n)),
                    pl.BlockSpec((1, TN), lambda m, n: (0, n))]
        if has_res:
            in_specs.append(pl.BlockSpec((TM, TN), lambda m, n: (m, n)))
        out = pl.pallas_call(
            functools.partial(_mm_kernel_nk1, act=act, has_res=has_res),
            out_shape=jax.ShapeDtypeStruct((Mp, Np), out_dtype),
            grid=(Mp // TM, Np // TN),
            in_specs=in_specs,
            out_specs=pl.BlockSpec((TM, TN), lambda m, n: (m, n)),
            compiler_params=_cparams("parallel", "parallel"),
        )(*inputs)
    else:
        in_specs = [pl.BlockSpec((TM, TK), lambda m, n, k: (m, k)),
                    pl.BlockSpec((TK, TN), lambda m, n, k: (k, n)),
                    pl.BlockSpec((1, TN), lambda m, n, k: (0, n))]
        if has_res:
            in_specs.append(pl.BlockSpec((TM, TN), lambda m, n, k: (m, n)))
        out = pl.pallas_call(
            functools.partial(_mm_kernel_acc, act=act, nk=nk, has_res=has_res),
            out_shape=jax.ShapeDtypeStruct((Mp, Np), out_dtype),
            grid=(Mp // TM, Np // TN, nk),
            in_specs=in_specs,
            out_specs=pl.BlockSpec((TM, TN), lambda m, n, k: (m, n)),
            scratch_shapes=[pltpu.VMEM((TM, TN), jnp.float32)],
            compiler_params=_cparams("parallel", "parallel", "arbitrary"),
        )(*inputs)

    out = out[:M]
    if not out_pad:
        out = out[:, :n_out]
    return out


# ----------------------------------------------------------------------------
# Fused MSE(norm(img), out): the (img - mean)/std affine is applied in-kernel;
# sum of squares accumulated into a (1,1) output across the grid.
# ----------------------------------------------------------------------------
def _mse_kernel(img_ref, out_ref, s_ref, t_ref, o_ref, *, rows, tr):
    i = pl.program_id(0)

    @pl.when(i == 0)
    def _():
        o_ref[...] = jnp.zeros_like(o_ref)

    target = img_ref[...] * s_ref[...] + t_ref[...]
    d = target - out_ref[...]
    row = jax.lax.broadcasted_iota(jnp.int32, d.shape, 0) + i * tr
    d = jnp.where(row < rows, d, 0.0)
    o_ref[...] += jnp.sum(jnp.sum(d * d, axis=1, keepdims=True),
                          axis=0, keepdims=True)


def mse_normalized(img_nhwc, out_nhwc, means, stds):
    B, H, W, C = img_nhwc.shape
    rows, cols = B * H, W * C
    TR = _pick_row_tile(rows)
    Rp = _round_up(rows, TR)
    a = img_nhwc.reshape(rows, cols)
    b = out_nhwc.astype(jnp.float32).reshape(rows, cols)
    if Rp != rows:
        a = jnp.pad(a, ((0, Rp - rows), (0, 0)))
        b = jnp.pad(b, ((0, Rp - rows), (0, 0)))
    means = jnp.asarray(means, jnp.float32)
    stds = jnp.asarray(stds, jnp.float32)
    s_row = jnp.tile(1.0 / stds, W).reshape(1, cols)   # constant-folded under jit
    t_row = jnp.tile(-means / stds, W).reshape(1, cols)
    ssq = pl.pallas_call(
        functools.partial(_mse_kernel, rows=rows, tr=TR),
        out_shape=jax.ShapeDtypeStruct((1, 1), jnp.float32),
        grid=(Rp // TR,),
        in_specs=[pl.BlockSpec((TR, cols), lambda i: (i, 0)),
                  pl.BlockSpec((TR, cols), lambda i: (i, 0)),
                  pl.BlockSpec((1, cols), lambda i: (0, 0)),
                  pl.BlockSpec((1, cols), lambda i: (0, 0))],
        out_specs=pl.BlockSpec((1, 1), lambda i: (0, 0)),
        compiler_params=_cparams("arbitrary"),
    )(a, b, s_row, t_row)
    return ssq[0, 0] / (rows * cols)


# ----------------------------------------------------------------------------
# Fused Gumbel-softmax (soft) + codebook matmul + KL(q || uniform).
# Gumbel noise is pre-drawn with jax.random (no in-kernel PRNG); the token axis
# is padded to 128 and masked; the KL is reduced to a scalar in-kernel.
# ----------------------------------------------------------------------------
def _gumbel_kernel(logit_ref, noise_ref, cb_ref, samp_ref, kl_ref, *,
                   inv_temp, num_tokens, log_uniform, rows, tm):
    i = pl.program_id(0)
    x = logit_ref[...]                                         # (TM, NTp) f32
    lane = jax.lax.broadcasted_iota(jnp.int32, x.shape, 1)
    row = jax.lax.broadcasted_iota(jnp.int32, x.shape, 0) + i * tm
    valid = lane < num_tokens
    live = jnp.logical_and(valid, row < rows)
    neg = jnp.float32(-1e30)
    xm = jnp.where(valid, x, neg)

    # log-softmax of the raw logits -> KL vs uniform, scalar-accumulated.
    m0 = jnp.max(xm, axis=-1, keepdims=True)
    e0 = jnp.where(valid, jnp.exp(xm - m0), 0.0)
    s0 = jnp.sum(e0, axis=-1, keepdims=True)
    log_qy = (xm - m0) - jnp.log(s0)
    q = e0 / s0
    kl_elem = jnp.where(live, q * (log_qy - log_uniform), 0.0)
    kl_part = jnp.sum(jnp.sum(kl_elem, axis=-1, keepdims=True),
                      axis=0, keepdims=True)                   # (1, 1)

    @pl.when(i == 0)
    def _():
        kl_ref[...] = jnp.zeros_like(kl_ref)
    kl_ref[...] += kl_part

    # softmax((logits + gumbel) / temp) over tokens, then @ codebook (MXU).
    y = jnp.where(valid, (x + noise_ref[...]) * inv_temp, neg)
    m1 = jnp.max(y, axis=-1, keepdims=True)
    e1 = jnp.where(valid, jnp.exp(y - m1), 0.0)
    s1 = jnp.sum(e1, axis=-1, keepdims=True)
    p = e1 / s1
    samp_ref[...] = jnp.dot(p.astype(jnp.bfloat16), cb_ref[...],
                            preferred_element_type=jnp.float32
                            ).astype(samp_ref.dtype)


def gumbel_codebook(logits_pad, noise, codebook_pad, *, temperature, num_tokens,
                    codebook_dim):
    """logits_pad/noise: (M, NTp) f32; codebook_pad: (NTp, Dp) bf16."""
    M, NTp = logits_pad.shape
    Dp = codebook_pad.shape[1]
    TM = _pick_row_tile(M)
    Mp = _round_up(M, TM)
    lp = logits_pad if Mp == M else jnp.pad(logits_pad, ((0, Mp - M), (0, 0)))
    gp = noise if Mp == M else jnp.pad(noise, ((0, Mp - M), (0, 0)))

    kernel = functools.partial(
        _gumbel_kernel, inv_temp=1.0 / temperature, num_tokens=num_tokens,
        log_uniform=math.log(1.0 / num_tokens), rows=M, tm=TM)

    sampled, kl = pl.pallas_call(
        kernel,
        out_shape=(jax.ShapeDtypeStruct((Mp, Dp), jnp.bfloat16),
                   jax.ShapeDtypeStruct((1, 1), jnp.float32)),
        grid=(Mp // TM,),
        in_specs=[pl.BlockSpec((TM, NTp), lambda i: (i, 0)),
                  pl.BlockSpec((TM, NTp), lambda i: (i, 0)),
                  pl.BlockSpec((NTp, Dp), lambda i: (0, 0))],
        out_specs=(pl.BlockSpec((TM, Dp), lambda i: (i, 0)),
                   pl.BlockSpec((1, 1), lambda i: (0, 0))),
        compiler_params=_cparams("arbitrary"),   # kl accumulates across the grid
    )(lp, gp, codebook_pad)

    # NOTE: F.kl_div(..., reduction='batchmean') divides by input.size(0) == 1
    # here (the log-uniform tensor has shape (1,)), so the plain sum matches.
    return sampled[:M, :codebook_dim], kl[0, 0]


# ----------------------------------------------------------------------------
# Conv layers built on the Pallas matmul kernel (im2col glue in plain JAX).
# ----------------------------------------------------------------------------
def conv2d(x, pw, n_out, *, kh, kw, stride=1, pad=0, act="none", residual=None,
           out_dtype=jnp.bfloat16, pad_value=0.0):
    B, H, W, C = x.shape
    if x.dtype != jnp.bfloat16:
        x = x.astype(jnp.bfloat16)
    if pad:
        x = jnp.pad(x, ((0, 0), (pad, pad), (pad, pad), (0, 0)),
                    constant_values=pad_value)
    Hp, Wp = H + 2 * pad, W + 2 * pad
    Ho = (Hp - kh) // stride + 1
    Wo = (Wp - kw) // stride + 1
    if kh == 1 and kw == 1 and stride == 1:
        patches = x.reshape(B * Ho * Wo, C)
    else:
        # TODO(synk): move im2col into the matmul kernel (shifted in-kernel
        # reads) to avoid the kh*kw-times-larger patch tensor in HBM.
        cols = [x[:, i:i + stride * Ho:stride, j:j + stride * Wo:stride, :]
                for i in range(kh) for j in range(kw)]
        patches = jnp.concatenate(cols, axis=-1).reshape(B * Ho * Wo, kh * kw * C)
    res_flat = (residual.reshape(B * Ho * Wo, n_out)
                if residual is not None else None)
    y = matmul_bias(patches, pw["w"], pw["b"], n_out, act=act,
                    residual=res_flat, out_dtype=out_dtype)
    return y.reshape(B, Ho, Wo, n_out)


def conv_transpose2d(x, pw, cout, *, act="relu", out_dtype=jnp.bfloat16):
    """ConvTranspose2d(4, stride=2, pad=1) via a pre-packed sub-pixel weight."""
    B, H, W, C = x.shape
    if x.dtype != jnp.bfloat16:
        x = x.astype(jnp.bfloat16)
    xpad = jnp.pad(x, ((0, 0), (1, 1), (1, 1), (0, 0)))
    cols = [xpad[:, dy:dy + H, dx:dx + W, :] for dy in range(3) for dx in range(3)]
    patches = jnp.concatenate(cols, axis=-1).reshape(B * H * W, 9 * C)
    y = matmul_bias(patches, pw["w"], pw["b"], 4 * cout, act=act,
                    out_dtype=out_dtype)
    y = y.reshape(B, H, W, 2, 2, cout).transpose(0, 1, 3, 2, 4, 5)
    return y.reshape(B, 2 * H, 2 * W, cout)


def res_block(x, pr, c):
    y = conv2d(x, pr["c1"], c, kh=3, kw=3, pad=1, act="relu")
    y = conv2d(y, pr["c2"], c, kh=3, kw=3, pad=1, act="relu")
    # residual add fused into the 1x1 conv's matmul epilogue
    return conv2d(y, pr["c3"], c, kh=1, kw=1, act="none", residual=x)


# ----------------------------------------------------------------------------
# Parameters: synthetic init (HWIO) + one-time packing for the Pallas kernels.
# ----------------------------------------------------------------------------
def init_params(key, *, channels, hidden_dim, num_tokens, codebook_dim,
                num_layers, num_resnet_blocks):
    keys = iter(jax.random.split(key, 256))

    def conv_p(kh, kw, cin, cout):
        fan_in = kh * kw * cin
        w = jax.random.normal(next(keys), (kh, kw, cin, cout), jnp.float32)
        w = w / jnp.sqrt(float(fan_in))
        b = 0.01 * jax.random.normal(next(keys), (cout,), jnp.float32)
        return {"w": w, "b": b}

    def res_p(c):
        p1, p2, p3 = conv_p(3, 3, c, c), conv_p(3, 3, c, c), conv_p(1, 1, c, c)
        return {"w1": p1["w"], "b1": p1["b"], "w2": p2["w"], "b2": p2["b"],
                "w3": p3["w"], "b3": p3["b"]}

    has_res = num_resnet_blocks > 0
    enc_channels = [channels] + [hidden_dim] * num_layers
    dec_channels = [hidden_dim if has_res else codebook_dim] + \
        list(reversed(enc_channels[1:]))

    return {
        "enc_convs": [conv_p(4, 4, ci, co)
                      for ci, co in zip(enc_channels[:-1], enc_channels[1:])],
        "enc_res": [res_p(enc_channels[-1]) for _ in range(num_resnet_blocks)],
        "enc_out": conv_p(1, 1, enc_channels[-1], num_tokens),
        "codebook": jax.random.normal(next(keys), (num_tokens, codebook_dim),
                                      jnp.float32),
        "dec_in": conv_p(1, 1, codebook_dim, hidden_dim) if has_res else None,
        "dec_res": [res_p(hidden_dim) for _ in range(num_resnet_blocks)],
        "dec_deconvs": [conv_p(4, 4, ci, co)
                        for ci, co in zip(dec_channels[:-1], dec_channels[1:])],
        "dec_out": conv_p(1, 1, dec_channels[-1], channels),
    }


def _pack_matmul_weight(wmat, b):
    K, N = wmat.shape
    Np = _round_up(N, 128)
    wp = jnp.pad(wmat, ((0, 0), (0, Np - N))).astype(jnp.bfloat16)
    bp = jnp.pad(b.astype(jnp.float32), (0, Np - N)).reshape(1, Np)
    return {"w": wp, "b": bp}


def _pack_conv(w, b):
    kh, kw, cin, cout = w.shape
    return _pack_matmul_weight(w.reshape(kh * kw * cin, cout), b)


def _pack_deconv(w, b):
    """ConvTranspose2d(4,2,1) -> sub-pixel 3x3 weight (9*cin, 4*cout).

    Tap convention (direct transposed conv, no flip): out[2u+a, 2v+c] +=
    x[i, j] * w[ty, tx] with ty = 2u+a+1-2i, tx = 2v+c+1-2j.
    """
    kh, kw, cin, cout = w.shape
    assert kh == 4 and kw == 4, "only the 4x4/stride-2/pad-1 deconv is supported"
    taps = {0: (3, 1), 1: (2, 0)}        # parity -> kernel tap at window offset 0,1
    wbig = jnp.zeros((3, 3, cin, 2, 2, cout), w.dtype)
    for a in (0, 1):
        for c in (0, 1):
            for sy in (0, 1):
                for sx in (0, 1):
                    wbig = wbig.at[a + sy, c + sx, :, a, c, :].set(
                        w[taps[a][sy], taps[c][sx]])
    return _pack_matmul_weight(wbig.reshape(9 * cin, 4 * cout), jnp.tile(b, 4))


def _pack_res(p):
    return {"c1": _pack_conv(p["w1"], p["b1"]),
            "c2": _pack_conv(p["w2"], p["b2"]),
            "c3": _pack_conv(p["w3"], p["b3"])}


def prepare_params(raw, *, channels, num_tokens, codebook_dim, means, stds):
    """One-time weight packing / padding / bf16 cast / constant folds (no jit)."""
    means = jnp.asarray(means, jnp.float32)
    stds = jnp.asarray(stds, jnp.float32)

    packed = {}
    enc = []
    for li, p in enumerate(raw["enc_convs"]):
        w, b = p["w"], p["b"]
        if li == 0:
            # fold (x - mean) / std into the first conv; the forward pads the
            # raw image with `mean` so border taps still see normalized zeros.
            w = w / stds.reshape(1, 1, channels, 1)
            b = b - jnp.einsum("hwio,i->o", w, means)
        enc.append(_pack_conv(w, b))
    packed["enc_convs"] = enc
    packed["enc_res"] = [_pack_res(p) for p in raw["enc_res"]]
    packed["enc_out"] = _pack_conv(raw["enc_out"]["w"], raw["enc_out"]["b"])

    nt_p = _round_up(num_tokens, 128)
    d_p = _round_up(codebook_dim, 128)
    packed["codebook"] = jnp.pad(
        raw["codebook"],
        ((0, nt_p - num_tokens), (0, d_p - codebook_dim))).astype(jnp.bfloat16)

    packed["dec_in"] = (_pack_conv(raw["dec_in"]["w"], raw["dec_in"]["b"])
                        if raw["dec_in"] is not None else None)
    packed["dec_res"] = [_pack_res(p) for p in raw["dec_res"]]
    packed["dec_deconvs"] = [_pack_deconv(p["w"], p["b"])
                             for p in raw["dec_deconvs"]]

    # final 1x1 conv: fold the output denormalization out*std + mean.
    w_out = raw["dec_out"]["w"] * stds.reshape(1, 1, 1, channels)
    b_out = raw["dec_out"]["b"] * stds + means
    packed["dec_out"] = _pack_conv(w_out, b_out)
    return packed


# ----------------------------------------------------------------------------
# DiscreteVAE forward (return_loss=True, return_recons=True path)
# ----------------------------------------------------------------------------
def discrete_vae_forward(packed, img_nchw, rng_key, *, channels, hidden_dim,
                         num_tokens, codebook_dim, num_layers,
                         num_resnet_blocks, temperature, kl_div_loss_weight,
                         normalization):
    B, C, H, W = img_nchw.shape
    means = normalization[0][:channels]
    stds = normalization[1][:channels]
    assert all(m == means[0] for m in means), "mean-padding needs equal means"
    pad_val = float(means[0])

    x = jnp.transpose(img_nchw, (0, 2, 3, 1)).astype(jnp.float32)   # NHWC

    # ---- encoder (input normalization folded into the first conv) ----
    enc_channels = [channels] + [hidden_dim] * num_layers
    h = x
    for li, pw in enumerate(packed["enc_convs"]):
        h = conv2d(h, pw, enc_channels[li + 1], kh=4, kw=4, stride=2, pad=1,
                   act="relu", pad_value=pad_val if li == 0 else 0.0)
    for pr in packed["enc_res"]:
        h = res_block(h, pr, hidden_dim)

    Bh, Hh, Wh, Ch = h.shape
    h_flat = h.reshape(Bh * Hh * Wh, Ch)
    # 1x1 conv -> logits; keep the token axis lane-padded (128) for the fused kernel
    logits_pad = matmul_bias(h_flat, packed["enc_out"]["w"],
                             packed["enc_out"]["b"], num_tokens,
                             act="none", out_dtype=jnp.float32, out_pad=True)

    # ---- fused gumbel-softmax (soft) + codebook matmul + KL(log_softmax) ----
    # TODO(synk): noise is jax.random Gumbel, not bit-identical to torch's RNG.
    noise = jax.random.gumbel(rng_key, logits_pad.shape, jnp.float32)
    sampled, kl_div = gumbel_codebook(logits_pad, noise, packed["codebook"],
                                      temperature=temperature,
                                      num_tokens=num_tokens,
                                      codebook_dim=codebook_dim)
    d = sampled.reshape(Bh, Hh, Wh, codebook_dim)

    # ---- decoder ----
    has_res = num_resnet_blocks > 0
    if has_res:
        d = conv2d(d, packed["dec_in"], hidden_dim, kh=1, kw=1, act="none")
    for pr in packed["dec_res"]:
        d = res_block(d, pr, hidden_dim)
    dec_channels = [hidden_dim if has_res else codebook_dim] + \
        list(reversed(enc_channels[1:]))
    for li, pw in enumerate(packed["dec_deconvs"]):
        d = conv_transpose2d(d, pw, dec_channels[li + 1], act="relu")

    # final 1x1 conv with the denormalization folded into its weights (f32 out)
    out = conv2d(d, packed["dec_out"], channels, kh=1, kw=1, act="none",
                 out_dtype=jnp.float32)

    # ---- losses:  F.mse_loss(norm(img), denorm(decoder(...)))  + KL term ----
    recon_loss = mse_normalized(x, out, means, stds)
    loss = recon_loss + kl_div * kl_div_loss_weight

    out_nchw = jnp.transpose(out, (0, 3, 1, 2))                      # NCHW
    return loss, out_nchw


# ----------------------------------------------------------------------------
if __name__ == "__main__":
    key = jax.random.PRNGKey(0)
    k_param, k_img, k_gumbel = jax.random.split(key, 3)

    # Small DiscreteVAE config: image_size=16, channels=3, num_layers=2,
    # num_resnet_blocks=1, hidden_dim=32, num_tokens=64, codebook_dim=32.
    cfg = dict(channels=3, hidden_dim=32, num_tokens=64, codebook_dim=32,
               num_layers=2, num_resnet_blocks=1)
    normalization = ((0.5,) * 3, (0.5,) * 3)

    raw_params = init_params(k_param, **cfg)
    packed = prepare_params(raw_params,
                            channels=cfg["channels"],
                            num_tokens=cfg["num_tokens"],
                            codebook_dim=cfg["codebook_dim"],
                            means=normalization[0][:cfg["channels"]],
                            stds=normalization[1][:cfg["channels"]])

    img = jax.random.uniform(k_img, (2, 3, 16, 16), jnp.float32)   # NCHW input

    fwd = jax.jit(functools.partial(
        discrete_vae_forward, temperature=0.9, kl_div_loss_weight=0.0,
        normalization=normalization, **cfg))

    loss, recon = fwd(packed, img, k_gumbel)
    jax.block_until_ready((loss, recon))

    assert recon.shape == (2, 3, 16, 16)
    assert recon.dtype == jnp.float32
    assert loss.shape == ()
    assert bool(jnp.isfinite(loss))
    print("KERNEL_OK")
</pallas_src>

<mosaic_0001>
module attributes {stable_mosaic.version = 11 : i64} {
  func.func @_mm_kernel_nk1(%arg0: i32, %arg1: i32, %arg2: memref<128x48xbf16, #tpu.memory_space<vmem>>, %arg3: memref<48x128xbf16, #tpu.memory_space<vmem>>, %arg4: memref<1x128xf32, #tpu.memory_space<vmem>>, %arg5: memref<128x128xbf16, #tpu.memory_space<vmem>>) attributes {dimension_semantics = [#tpu.dimension_semantics<parallel>, #tpu.dimension_semantics<parallel>], iteration_bounds = array<i64: 1, 1>, scalar_prefetch = 0 : i64, scratch_operands = 0 : i64, tpu.core_type = #tpu.core_type<tc>, window_params = [{transform_indices = @transform_0, window_bounds = array<i64: 128, 48>}, {transform_indices = @transform_1, window_bounds = array<i64: 48, 128>}, {transform_indices = @transform_2, window_bounds = array<i64: 1, 128>}, {transform_indices = @transform_3, window_bounds = array<i64: 128, 128>}]} {
    %c0 = arith.constant 0 : index
    %c0_0 = arith.constant 0 : index
    %0 = vector.load %arg2[%c0, %c0_0] : memref<128x48xbf16, #tpu.memory_space<vmem>>, vector<128x48xbf16>
    %c0_1 = arith.constant 0 : index
    %c0_2 = arith.constant 0 : index
    %1 = vector.load %arg3[%c0_1, %c0_2] : memref<48x128xbf16, #tpu.memory_space<vmem>>, vector<48x128xbf16>
    %cst = arith.constant dense<0.000000e+00> : vector<128x128xf32>
    %2 = tpu.matmul %0, %1, %cst {dimension_numbers = #tpu.dot_dimension_numbers<[1], [0], [0], [1], [0, 0, 1, 1], [], []>} : vector<128x48xbf16>, vector<48x128xbf16>, vector<128x128xf32> -> vector<128x128xf32>
    %c0_3 = arith.constant 0 : index
    %c0_4 = arith.constant 0 : index
    %3 = vector.load %arg4[%c0_3, %c0_4] : memref<1x128xf32, #tpu.memory_space<vmem>>, vector<1x128xf32>
    %4 = vector.broadcast %3 : vector<1x128xf32> to vector<128x128xf32>
    %5 = arith.addf %2, %4 : vector<128x128xf32>
    %cst_5 = arith.constant 0.000000e+00 : f32
    %6 = vector.broadcast %cst_5 : f32 to vector<128x128xf32>
    %7 = arith.maximumf %5, %6 : vector<128x128xf32>
    %8 = arith.truncf %7 : vector<128x128xf32> to vector<128x128xbf16>
    %c0_6 = arith.constant 0 : index
    %c0_7 = arith.constant 0 : index
    %9 = vector.load %arg5[%c0_6, %c0_7] : memref<128x128xbf16, #tpu.memory_space<vmem>>, vector<128x128xbf16>
    tpu.vector_store %arg5[%c0_6, %c0_7], %8 {strides = array<i32>} : memref<128x128xbf16, #tpu.memory_space<vmem>>, vector<128x128xbf16>,
    return
  }
  func.func @transform_0(%arg0: i32, %arg1: i32) -> (i32, i32) {
    %c0_i32 = arith.constant 0 : i32
    %c0_i32_0 = arith.constant 0 : i32
    return %arg0, %c0_i32 : i32, i32
  }
  func.func @transform_1(%arg0: i32, %arg1: i32) -> (i32, i32) {
    %c0_i32 = arith.constant 0 : i32
    %c0_i32_0 = arith.constant 0 : i32
    return %c0_i32, %arg1 : i32, i32
  }
  func.func @transform_2(%arg0: i32, %arg1: i32) -> (i32, i32) {
    %c0_i32 = arith.constant 0 : i32
    %c0_i32_0 = arith.constant 0 : i32
    return %c0_i32, %arg1 : i32, i32
  }
  func.func @transform_3(%arg0: i32, %arg1: i32) -> (i32, i32) {
    %c0_i32 = arith.constant 0 : i32
    return %arg0, %arg1 : i32, i32
  }
}

module attributes {stable_mosaic.version = 11 : i64} {
  func.func @_mm_kernel_nk1(%arg0: i32, %arg1: i32, %arg2: memref<32x512xbf16, #tpu.memory_space<vmem>>, %arg3: memref<512x128xbf16, #tpu.memory_space<vmem>>, %arg4: memref<1x128xf32, #tpu.memory_space<vmem>>, %arg5: memref<32x128xbf16, #tpu.memory_space<vmem>>) attributes {dimension_semantics = [#tpu.dimension_semantics<parallel>, #tpu.dimension_semantics<parallel>], iteration_bounds = array<i64: 1, 1>, scalar_prefetch = 0 : i64, scratch_operands = 0 : i64, tpu.core_type = #tpu.core_type<tc>, window_params = [{transform_indices = @transform_0, window_bounds = array<i64: 32, 512>}, {transform_indices = @transform_1, window_bounds = array<i64: 512, 128>}, {transform_indices = @transform_2, window_bounds = array<i64: 1, 128>}, {transform_indices = @transform_3, window_bounds = array<i64: 32, 128>}]} {
    %c0 = arith.constant 0 : index
    %c0_0 = arith.constant 0 : index
    %0 = vector.load %arg2[%c0, %c0_0] : memref<32x512xbf16, #tpu.memory_space<vmem>>, vector<32x512xbf16>
    %c0_1 = arith.constant 0 : index
    %c0_2 = arith.constant 0 : index
    %1 = vector.load %arg3[%c0_1, %c0_2] : memref<512x128xbf16, #tpu.memory_space<vmem>>, vector<512x128xbf16>
    %cst = arith.constant dense<0.000000e+00> : vector<32x128xf32>
    %2 = tpu.matmul %0, %1, %cst {dimension_numbers = #tpu.dot_dimension_numbers<[1], [0], [0], [1], [0, 0, 1, 1], [], []>} : vector<32x512xbf16>, vector<512x128xbf16>, vector<32x128xf32> -> vector<32x128xf32>
    %c0_3 = arith.constant 0 : index
    %c0_4 = arith.constant 0 : index
    %3 = vector.load %arg4[%c0_3, %c0_4] : memref<1x128xf32, #tpu.memory_space<vmem>>, vector<1x128xf32>
    %4 = vector.broadcast %3 : vector<1x128xf32> to vector<32x128xf32>
    %5 = arith.addf %2, %4 : vector<32x128xf32>
    %cst_5 = arith.constant 0.000000e+00 : f32
    %6 = vector.broadcast %cst_5 : f32 to vector<32x128xf32>
    %7 = arith.maximumf %5, %6 : vector<32x128xf32>
    %8 = arith.truncf %7 : vector<32x128xf32> to vector<32x128xbf16>
    %c0_6 = arith.constant 0 : index
    %c0_7 = arith.constant 0 : index
    %9 = vector.load %arg5[%c0_6, %c0_7] : memref<32x128xbf16, #tpu.memory_space<vmem>>, vector<32x128xbf16>
    tpu.vector_store %arg5[%c0_6, %c0_7], %8 {strides = array<i32>} : memref<32x128xbf16, #tpu.memory_space<vmem>>, vector<32x128xbf16>,
    return
  }
  func.func @transform_0(%arg0: i32, %arg1: i32) -> (i32, i32) {
    %c0_i32 = arith.constant 0 : i32
    %c0_i32_0 = arith.constant 0 : i32
    return %arg0, %c0_i32 : i32, i32
  }
  func.func @transform_1(%arg0: i32, %arg1: i32) -> (i32, i32) {
    %c0_i32 = arith.constant 0 : i32
    %c0_i32_0 = arith.constant 0 : i32
    return %c0_i32, %arg1 : i32, i32
  }
  func.func @transform_2(%arg0: i32, %arg1: i32) -> (i32, i32) {
    %c0_i32 = arith.constant 0 : i32
    %c0_i32_0 = arith.constant 0 : i32
    return %c0_i32, %arg1 : i32, i32
  }
  func.func @transform_3(%arg0: i32, %arg1: i32) -> (i32, i32) {
    %c0_i32 = arith.constant 0 : i32
    return %arg0, %arg1 : i32, i32
  }
}

module attributes {stable_mosaic.version = 11 : i64} {
  func.func @_mm_kernel_nk1(%arg0: i32, %arg1: i32, %arg2: memref<32x288xbf16, #tpu.memory_space<vmem>>, %arg3: memref<288x128xbf16, #tpu.memory_space<vmem>>, %arg4: memref<1x128xf32, #tpu.memory_space<vmem>>, %arg5: memref<32x128xbf16, #tpu.memory_space<vmem>>) attributes {dimension_semantics = [#tpu.dimension_semantics<parallel>, #tpu.dimension_semantics<parallel>], iteration_bounds = array<i64: 1, 1>, scalar_prefetch = 0 : i64, scratch_operands = 0 : i64, tpu.core_type = #tpu.core_type<tc>, window_params = [{transform_indices = @transform_0, window_bounds = array<i64: 32, 288>}, {transform_indices = @transform_1, window_bounds = array<i64: 288, 128>}, {transform_indices = @transform_2, window_bounds = array<i64: 1, 128>}, {transform_indices = @transform_3, window_bounds = array<i64: 32, 128>}]} {
    %c0 = arith.constant 0 : index
    %c0_0 = arith.constant 0 : index
    %0 = vector.load %arg2[%c0, %c0_0] : memref<32x288xbf16, #tpu.memory_space<vmem>>, vector<32x288xbf16>
    %c0_1 = arith.constant 0 : index
    %c0_2 = arith.constant 0 : index
    %1 = vector.load %arg3[%c0_1, %c0_2] : memref<288x128xbf16, #tpu.memory_space<vmem>>, vector<288x128xbf16>
    %cst = arith.constant dense<0.000000e+00> : vector<32x128xf32>
    %2 = tpu.matmul %0, %1, %cst {dimension_numbers = #tpu.dot_dimension_numbers<[1], [0], [0], [1], [0, 0, 1, 1], [], []>} : vector<32x288xbf16>, vector<288x128xbf16>, vector<32x128xf32> -> vector<32x128xf32>
    %c0_3 = arith.constant 0 : index
    %c0_4 = arith.constant 0 : index
    %3 = vector.load %arg4[%c0_3, %c0_4] : memref<1x128xf32, #tpu.memory_space<vmem>>, vector<1x128xf32>
    %4 = vector.broadcast %3 : vector<1x128xf32> to vector<32x128xf32>
    %5 = arith.addf %2, %4 : vector<32x128xf32>
    %cst_5 = arith.constant 0.000000e+00 : f32
    %6 = vector.broadcast %cst_5 : f32 to vector<32x128xf32>
    %7 = arith.maximumf %5, %6 : vector<32x128xf32>
    %8 = arith.truncf %7 : vector<32x128xf32> to vector<32x128xbf16>
    %c0_6 = arith.constant 0 : index
    %c0_7 = arith.constant 0 : index
    %9 = vector.load %arg5[%c0_6, %c0_7] : memref<32x128xbf16, #tpu.memory_space<vmem>>, vector<32x128xbf16>
    tpu.vector_store %arg5[%c0_6, %c0_7], %8 {strides = array<i32>} : memref<32x128xbf16, #tpu.memory_space<vmem>>, vector<32x128xbf16>,
    return
  }
  func.func @transform_0(%arg0: i32, %arg1: i32) -> (i32, i32) {
    %c0_i32 = arith.constant 0 : i32
    %c0_i32_0 = arith.constant 0 : i32
    return %arg0, %c0_i32 : i32, i32
  }
  func.func @transform_1(%arg0: i32, %arg1: i32) -> (i32, i32) {
    %c0_i32 = arith.constant 0 : i32
    %c0_i32_0 = arith.constant 0 : i32
    return %c0_i32, %arg1 : i32, i32
  }
  func.func @transform_2(%arg0: i32, %arg1: i32) -> (i32, i32) {
    %c0_i32 = arith.constant 0 : i32
    %c0_i32_0 = arith.constant 0 : i32
    return %c0_i32, %arg1 : i32, i32
  }
  func.func @transform_3(%arg0: i32, %arg1: i32) -> (i32, i32) {
    %c0_i32 = arith.constant 0 : i32
    return %arg0, %arg1 : i32, i32
  }
}

module attributes {stable_mosaic.version = 11 : i64} {
  func.func @_mm_kernel_nk1(%arg0: i32, %arg1: i32, %arg2: memref<32x32xbf16, #tpu.memory_space<vmem>>, %arg3: memref<32x128xbf16, #tpu.memory_space<vmem>>, %arg4: memref<1x128xf32, #tpu.memory_space<vmem>>, %arg5: memref<32x128xbf16, #tpu.memory_space<vmem>>, %arg6: memref<32x128xbf16, #tpu.memory_space<vmem>>) attributes {dimension_semantics = [#tpu.dimension_semantics<parallel>, #tpu.dimension_semantics<parallel>], iteration_bounds = array<i64: 1, 1>, scalar_prefetch = 0 : i64, scratch_operands = 0 : i64, tpu.core_type = #tpu.core_type<tc>, window_params = [{transform_indices = @transform_0, window_bounds = array<i64: 32, 32>}, {transform_indices = @transform_1, window_bounds = array<i64: 32, 128>}, {transform_indices = @transform_2, window_bounds = array<i64: 1, 128>}, {transform_indices = @transform_3, window_bounds = array<i64: 32, 128>}, {transform_indices = @transform_4, window_bounds = array<i64: 32, 128>}]} {
    %c0 = arith.constant 0 : index
    %c0_0 = arith.constant 0 : index
    %0 = vector.load %arg2[%c0, %c0_0] : memref<32x32xbf16, #tpu.memory_space<vmem>>, vector<32x32xbf16>
    %c0_1 = arith.constant 0 : index
    %c0_2 = arith.constant 0 : index
    %1 = vector.load %arg3[%c0_1, %c0_2] : memref<32x128xbf16, #tpu.memory_space<vmem>>, vector<32x128xbf16>
    %cst = arith.constant dense<0.000000e+00> : vector<32x128xf32>
    %2 = tpu.matmul %0, %1, %cst {dimension_numbers = #tpu.dot_dimension_numbers<[1], [0], [0], [1], [0, 0, 1, 1], [], []>} : vector<32x32xbf16>, vector<32x128xbf16>, vector<32x128xf32> -> vector<32x128xf32>
    %c0_3 = arith.constant 0 : index
    %c0_4 = arith.constant 0 : index
    %3 = vector.load %arg4[%c0_3, %c0_4] : memref<1x128xf32, #tpu.memory_space<vmem>>, vector<1x128xf32>
    %4 = vector.broadcast %3 : vector<1x128xf32> to vector<32x128xf32>
    %5 = arith.addf %2, %4 : vector<32x128xf32>
    %c0_5 = arith.constant 0 : index
    %c0_6 = arith.constant 0 : index
    %6 = vector.load %arg5[%c0_5, %c0_6] : memref<32x128xbf16, #tpu.memory_space<vmem>>, vector<32x128xbf16>
    %7 = arith.extf %6 : vector<32x128xbf16> to vector<32x128xf32>
    %8 = arith.addf %5, %7 : vector<32x128xf32>
    %9 = arith.truncf %8 : vector<32x128xf32> to vector<32x128xbf16>
    %c0_7 = arith.constant 0 : index
    %c0_8 = arith.constant 0 : index
    %10 = vector.load %arg6[%c0_7, %c0_8] : memref<32x128xbf16, #tpu.memory_space<vmem>>, vector<32x128xbf16>
    tpu.vector_store %arg6[%c0_7, %c0_8], %9 {strides = array<i32>} : memref<32x128xbf16, #tpu.memory_space<vmem>>, vector<32x128xbf16>,
    return
  }
  func.func @transform_0(%arg0: i32, %arg1: i32) -> (i32, i32) {
    %c0_i32 = arith.constant 0 : i32
    %c0_i32_0 = arith.constant 0 : i32
    return %arg0, %c0_i32 : i32, i32
  }
  func.func @transform_1(%arg0: i32, %arg1: i32) -> (i32, i32) {
    %c0_i32 = arith.constant 0 : i32
    %c0_i32_0 = arith.constant 0 : i32
    return %c0_i32, %arg1 : i32, i32
  }
  func.func @transform_2(%arg0: i32, %arg1: i32) -> (i32, i32) {
    %c0_i32 = arith.constant 0 : i32
    %c0_i32_0 = arith.constant 0 : i32
    return %c0_i32, %arg1 : i32, i32
  }
  func.func @transform_3(%arg0: i32, %arg1: i32) -> (i32, i32) {
    %c0_i32 = arith.constant 0 : i32
    return %arg0, %arg1 : i32, i32
  }
  func.func @transform_4(%arg0: i32, %arg1: i32) -> (i32, i32) {
    %c0_i32 = arith.constant 0 : i32
    return %arg0, %arg1 : i32, i32
  }
}

module attributes {stable_mosaic.version = 11 : i64} {
  func.func @_mm_kernel_nk1(%arg0: i32, %arg1: i32, %arg2: memref<32x32xbf16, #tpu.memory_space<vmem>>, %arg3: memref<32x128xbf16, #tpu.memory_space<vmem>>, %arg4: memref<1x128xf32, #tpu.memory_space<vmem>>, %arg5: memref<32x128xf32, #tpu.memory_space<vmem>>) attributes {dimension_semantics = [#tpu.dimension_semantics<parallel>, #tpu.dimension_semantics<parallel>], iteration_bounds = array<i64: 1, 1>, scalar_prefetch = 0 : i64, scratch_operands = 0 : i64, tpu.core_type = #tpu.core_type<tc>, window_params = [{transform_indices = @transform_0, window_bounds = array<i64: 32, 32>}, {transform_indices = @transform_1, window_bounds = array<i64: 32, 128>}, {transform_indices = @transform_2, window_bounds = array<i64: 1, 128>}, {transform_indices = @transform_3, window_bounds = array<i64: 32, 128>}]} {
    %c0 = arith.constant 0 : index
    %c0_0 = arith.constant 0 : index
    %0 = vector.load %arg2[%c0, %c0_0] : memref<32x32xbf16, #tpu.memory_space<vmem>>, vector<32x32xbf16>
    %c0_1 = arith.constant 0 : index
    %c0_2 = arith.constant 0 : index
    %1 = vector.load %arg3[%c0_1, %c0_2] : memref<32x128xbf16, #tpu.memory_space<vmem>>, vector<32x128xbf16>
    %cst = arith.constant dense<0.000000e+00> : vector<32x128xf32>
    %2 = tpu.matmul %0, %1, %cst {dimension_numbers = #tpu.dot_dimension_numbers<[1], [0], [0], [1], [0, 0, 1, 1], [], []>} : vector<32x32xbf16>, vector<32x128xbf16>, vector<32x128xf32> -> vector<32x128xf32>
    %c0_3 = arith.constant 0 : index
    %c0_4 = arith.constant 0 : index
    %3 = vector.load %arg4[%c0_3, %c0_4] : memref<1x128xf32, #tpu.memory_space<vmem>>, vector<1x128xf32>
    %4 = vector.broadcast %3 : vector<1x128xf32> to vector<32x128xf32>
    %5 = arith.addf %2, %4 : vector<32x128xf32>
    %c0_5 = arith.constant 0 : index
    %c0_6 = arith.constant 0 : index
    %6 = vector.load %arg5[%c0_5, %c0_6] : memref<32x128xf32, #tpu.memory_space<vmem>>, vector<32x128xf32>
    tpu.vector_store %arg5[%c0_5, %c0_6], %5 {strides = array<i32>} : memref<32x128xf32, #tpu.memory_space<vmem>>, vector<32x128xf32>,
    return
  }
  func.func @transform_0(%arg0: i32, %arg1: i32) -> (i32, i32) {
    %c0_i32 = arith.constant 0 : i32
    %c0_i32_0 = arith.constant 0 : i32
    return %arg0, %c0_i32 : i32, i32
  }
  func.func @transform_1(%arg0: i32, %arg1: i32) -> (i32, i32) {
    %c0_i32 = arith.constant 0 : i32
    %c0_i32_0 = arith.constant 0 : i32
    return %c0_i32, %arg1 : i32, i32
  }
  func.func @transform_2(%arg0: i32, %arg1: i32) -> (i32, i32) {
    %c0_i32 = arith.constant 0 : i32
    %c0_i32_0 = arith.constant 0 : i32
    return %c0_i32, %arg1 : i32, i32
  }
  func.func @transform_3(%arg0: i32, %arg1: i32) -> (i32, i32) {
    %c0_i32 = arith.constant 0 : i32
    return %arg0, %arg1 : i32, i32
  }
}

module attributes {stable_mosaic.version = 11 : i64} {
  func.func @_mm_kernel_nk1(%arg0: i32, %arg1: i32, %arg2: memref<32x32xbf16, #tpu.memory_space<vmem>>, %arg3: memref<32x128xbf16, #tpu.memory_space<vmem>>, %arg4: memref<1x128xf32, #tpu.memory_space<vmem>>, %arg5: memref<32x128xbf16, #tpu.memory_space<vmem>>) attributes {dimension_semantics = [#tpu.dimension_semantics<parallel>, #tpu.dimension_semantics<parallel>], iteration_bounds = array<i64: 1, 1>, scalar_prefetch = 0 : i64, scratch_operands = 0 : i64, tpu.core_type = #tpu.core_type<tc>, window_params = [{transform_indices = @transform_0, window_bounds = array<i64: 32, 32>}, {transform_indices = @transform_1, window_bounds = array<i64: 32, 128>}, {transform_indices = @transform_2, window_bounds = array<i64: 1, 128>}, {transform_indices = @transform_3, window_bounds = array<i64: 32, 128>}]} {
    %c0 = arith.constant 0 : index
    %c0_0 = arith.constant 0 : index
    %0 = vector.load %arg2[%c0, %c0_0] : memref<32x32xbf16, #tpu.memory_space<vmem>>, vector<32x32xbf16>
    %c0_1 = arith.constant 0 : index
    %c0_2 = arith.constant 0 : index
    %1 = vector.load %arg3[%c0_1, %c0_2] : memref<32x128xbf16, #tpu.memory_space<vmem>>, vector<32x128xbf16>
    %cst = arith.constant dense<0.000000e+00> : vector<32x128xf32>
    %2 = tpu.matmul %0, %1, %cst {dimension_numbers = #tpu.dot_dimension_numbers<[1], [0], [0], [1], [0, 0, 1, 1], [], []>} : vector<32x32xbf16>, vector<32x128xbf16>, vector<32x128xf32> -> vector<32x128xf32>
    %c0_3 = arith.constant 0 : index
    %c0_4 = arith.constant 0 : index
    %3 = vector.load %arg4[%c0_3, %c0_4] : memref<1x128xf32, #tpu.memory_space<vmem>>, vector<1x128xf32>
    %4 = vector.broadcast %3 : vector<1x128xf32> to vector<32x128xf32>
    %5 = arith.addf %2, %4 : vector<32x128xf32>
    %6 = arith.truncf %5 : vector<32x128xf32> to vector<32x128xbf16>
    %c0_5 = arith.constant 0 : index
    %c0_6 = arith.constant 0 : index
    %7 = vector.load %arg5[%c0_5, %c0_6] : memref<32x128xbf16, #tpu.memory_space<vmem>>, vector<32x128xbf16>
    tpu.vector_store %arg5[%c0_5, %c0_6], %6 {strides = array<i32>} : memref<32x128xbf16, #tpu.memory_space<vmem>>, vector<32x128xbf16>,
    return
  }
  func.func @transform_0(%arg0: i32, %arg1: i32) -> (i32, i32) {
    %c0_i32 = arith.constant 0 : i32
    %c0_i32_0 = arith.constant 0 : i32
    return %arg0, %c0_i32 : i32, i32
  }
  func.func @transform_1(%arg0: i32, %arg1: i32) -> (i32, i32) {
    %c0_i32 = arith.constant 0 : i32
    %c0_i32_0 = arith.constant 0 : i32
    return %c0_i32, %arg1 : i32, i32
  }
  func.func @transform_2(%arg0: i32, %arg1: i32) -> (i32, i32) {
    %c0_i32 = arith.constant 0 : i32
    %c0_i32_0 = arith.constant 0 : i32
    return %c0_i32, %arg1 : i32, i32
  }
  func.func @transform_3(%arg0: i32, %arg1: i32) -> (i32, i32) {
    %c0_i32 = arith.constant 0 : i32
    return %arg0, %arg1 : i32, i32
  }
}

module attributes {stable_mosaic.version = 11 : i64} {
  func.func @_gumbel_kernel(%arg0: i32, %arg1: memref<32x128xf32, #tpu.memory_space<vmem>>, %arg2: memref<32x128xf32, #tpu.memory_space<vmem>>, %arg3: memref<128x128xbf16, #tpu.memory_space<vmem>>, %arg4: memref<32x128xbf16, #tpu.memory_space<vmem>>, %arg5: memref<1x1xf32, #tpu.memory_space<vmem>>) attributes {dimension_semantics = [#tpu.dimension_semantics<arbitrary>], iteration_bounds = array<i64: 1>, scalar_prefetch = 0 : i64, scratch_operands = 0 : i64, tpu.core_type = #tpu.core_type<tc>, window_params = [{transform_indices = @transform_0, window_bounds = array<i64: 32, 128>}, {transform_indices = @transform_1, window_bounds = array<i64: 32, 128>}, {pipeline_mode = #tpu.pipeline_mode<synchronous>, transform_indices = @transform_2, window_bounds = array<i64: 128, 128>}, {transform_indices = @transform_3, window_bounds = array<i64: 32, 128>}, {pipeline_mode = #tpu.pipeline_mode<synchronous>, transform_indices = @transform_4, window_bounds = array<i64: 1, 1>}]} {
    %c0 = arith.constant 0 : index
    %c0_0 = arith.constant 0 : index
    %0 = vector.load %arg1[%c0, %c0_0] : memref<32x128xf32, #tpu.memory_space<vmem>>, vector<32x128xf32>
    %1 = tpu.iota {dimensions = array<i32: 1>} : vector<32x128xi32>
    %2 = tpu.iota {dimensions = array<i32: 0>} : vector<32x128xi32>
    %c32_i32 = arith.constant 32 : i32
    %3 = arith.muli %arg0, %c32_i32 : i32
    %4 = vector.broadcast %3 : i32 to vector<32x128xi32>
    %5 = arith.addi %2, %4 : vector<32x128xi32>
    %c64_i32 = arith.constant 64 : i32
    %6 = vector.broadcast %c64_i32 : i32 to vector<32x128xi32>
    %7 = arith.cmpi slt, %1, %6 : vector<32x128xi32>
    %c32_i32_1 = arith.constant 32 : i32
    %8 = vector.broadcast %c32_i32_1 : i32 to vector<32x128xi32>
    %9 = arith.cmpi slt, %5, %8 : vector<32x128xi32>
    %10 = arith.andi %7, %9 : vector<32x128xi1>
    %cst = arith.constant -1.000000e+30 : f32
    %11 = vector.broadcast %cst : f32 to vector<32x128xf32>
    %12 = arith.select %7, %0, %11 : vector<32x128xi1>, vector<32x128xf32>
    %cst_2 = arith.constant dense<0xFF800000> : vector<32xf32>
    %13 = vector.multi_reduction <maximumf>, %12, %cst_2 [1] : vector<32x128xf32> to vector<32xf32>
    %14 = vector.shape_cast %13 : vector<32xf32> to vector<32x1xf32>
    %15 = vector.broadcast %14 : vector<32x1xf32> to vector<32x128xf32>
    %16 = arith.subf %12, %15 : vector<32x128xf32>
    %17 = math.exp %16 : vector<32x128xf32>
    %cst_3 = arith.constant 0.000000e+00 : f32
    %18 = vector.broadcast %cst_3 : f32 to vector<32x128xf32>
    %19 = arith.select %7, %17, %18 : vector<32x128xi1>, vector<32x128xf32>
    %cst_4 = arith.constant dense<0.000000e+00> : vector<32xf32>
    %20 = vector.multi_reduction <add>, %19, %cst_4 [1] : vector<32x128xf32> to vector<32xf32>
    %21 = vector.shape_cast %20 : vector<32xf32> to vector<32x1xf32>
    %22 = vector.broadcast %14 : vector<32x1xf32> to vector<32x128xf32>
    %23 = arith.subf %12, %22 : vector<32x128xf32>
    %24 = math.log %21 : vector<32x1xf32>
    %25 = vector.broadcast %24 : vector<32x1xf32> to vector<32x128xf32>
    %26 = arith.subf %23, %25 : vector<32x128xf32>
    %27 = vector.broadcast %21 : vector<32x1xf32> to vector<32x128xf32>
    %28 = arith.divf %19, %27 : vector<32x128xf32>
    %cst_5 = arith.constant -4.15888309 : f32
    %29 = vector.broadcast %cst_5 : f32 to vector<32x128xf32>
    %30 = arith.subf %26, %29 : vector<32x128xf32>
    %31 = arith.mulf %28, %30 : vector<32x128xf32>
    %cst_6 = arith.constant 0.000000e+00 : f32
    %32 = vector.broadcast %cst_6 : f32 to vector<32x128xf32>
    %33 = arith.select %10, %31, %32 : vector<32x128xi1>, vector<32x128xf32>
    %cst_7 = arith.constant dense<0.000000e+00> : vector<32xf32>
    %34 = vector.multi_reduction <add>, %33, %cst_7 [1] : vector<32x128xf32> to vector<32xf32>
    %35 = vector.shape_cast %34 : vector<32xf32> to vector<32x1xf32>
    %cst_8 = arith.constant dense<0.000000e+00> : vector<1xf32>
    %36 = vector.multi_reduction <add>, %35, %cst_8 [0] : vector<32x1xf32> to vector<1xf32>
    %37 = vector.shape_cast %36 : vector<1xf32> to vector<1x1xf32>
    %c0_i32 = arith.constant 0 : i32
    %38 = arith.cmpi eq, %arg0, %c0_i32 : i32
    %39 = arith.extui %38 : i1 to i32
    %c0_i32_9 = arith.constant 0 : i32
    %40 = arith.cmpi ne, %39, %c0_i32_9 : i32
    scf.if %40 {
      %cst_26 = arith.constant 0.000000e+00 : f32
      %66 = vector.broadcast %cst_26 : f32 to vector<1x1xf32>
      %c0_27 = arith.constant 0 : index
      %c0_28 = arith.constant 0 : index
      %67 = vector.load %arg5[%c0_27, %c0_28] : memref<1x1xf32, #tpu.memory_space<vmem>>, vector<1x1xf32>
      tpu.vector_store %arg5[%c0_27, %c0_28], %66 {strides = array<i32>} : memref<1x1xf32, #tpu.memory_space<vmem>>, vector<1x1xf32>,
    } else {
    }
    %c0_10 = arith.constant 0 : index
    %c0_11 = arith.constant 0 : index
    %41 = vector.load %arg5[%c0_10, %c0_11] : memref<1x1xf32, #tpu.memory_space<vmem>>, vector<1x1xf32>
    %42 = arith.addf %41, %37 : vector<1x1xf32>
    %c0_12 = arith.constant 0 : index
    %c0_13 = arith.constant 0 : index
    %43 = vector.load %arg5[%c0_12, %c0_13] : memref<1x1xf32, #tpu.memory_space<vmem>>, vector<1x1xf32>
    tpu.vector_store %arg5[%c0_12, %c0_13], %42 {strides = array<i32>} : memref<1x1xf32, #tpu.memory_space<vmem>>, vector<1x1xf32>,
    %c0_14 = arith.constant 0 : index
    %c0_15 = arith.constant 0 : index
    %44 = vector.load %arg2[%c0_14, %c0_15] : memref<32x128xf32, #tpu.memory_space<vmem>>, vector<32x128xf32>
    %45 = arith.addf %0, %44 : vector<32x128xf32>
    %cst_16 = arith.constant 1.11111116 : f32
    %46 = vector.broadcast %cst_16 : f32 to vector<32x128xf32>
    %47 = arith.mulf %45, %46 : vector<32x128xf32>
    %cst_17 = arith.constant -1.000000e+30 : f32
    %48 = vector.broadcast %cst_17 : f32 to vector<32x128xf32>
    %49 = arith.select %7, %47, %48 : vector<32x128xi1>, vector<32x128xf32>
    %cst_18 = arith.constant dense<0xFF800000> : vector<32xf32>
    %50 = vector.multi_reduction <maximumf>, %49, %cst_18 [1] : vector<32x128xf32> to vector<32xf32>
    %51 = vector.shape_cast %50 : vector<32xf32> to vector<32x1xf32>
    %52 = vector.broadcast %51 : vector<32x1xf32> to vector<32x128xf32>
    %53 = arith.subf %49, %52 : vector<32x128xf32>
    %54 = math.exp %53 : vector<32x128xf32>
    %cst_19 = arith.constant 0.000000e+00 : f32
    %55 = vector.broadcast %cst_19 : f32 to vector<32x128xf32>
    %56 = arith.select %7, %54, %55 : vector<32x128xi1>, vector<32x128xf32>
    %cst_20 = arith.constant dense<0.000000e+00> : vector<32xf32>
    %57 = vector.multi_reduction <add>, %56, %cst_20 [1] : vector<32x128xf32> to vector<32xf32>
    %58 = vector.shape_cast %57 : vector<32xf32> to vector<32x1xf32>
    %59 = vector.broadcast %58 : vector<32x1xf32> to vector<32x128xf32>
    %60 = arith.divf %56, %59 : vector<32x128xf32>
    %61 = arith.truncf %60 : vector<32x128xf32> to vector<32x128xbf16>
    %c0_21 = arith.constant 0 : index
    %c0_22 = arith.constant 0 : index
    %62 = vector.load %arg3[%c0_21, %c0_22] : memref<128x128xbf16, #tpu.memory_space<vmem>>, vector<128x128xbf16>
    %cst_23 = arith.constant dense<0.000000e+00> : vector<32x128xf32>
    %63 = tpu.matmul %61, %62, %cst_23 {dimension_numbers = #tpu.dot_dimension_numbers<[1], [0], [0], [1], [0, 0, 1, 1], [], []>} : vector<32x128xbf16>, vector<128x128xbf16>, vector<32x128xf32> -> vector<32x128xf32>
    %64 = arith.truncf %63 : vector<32x128xf32> to vector<32x128xbf16>
    %c0_24 = arith.constant 0 : index
    %c0_25 = arith.constant 0 : index
    %65 = vector.load %arg4[%c0_24, %c0_25] : memref<32x128xbf16, #tpu.memory_space<vmem>>, vector<32x128xbf16>
    tpu.vector_store %arg4[%c0_24, %c0_25], %64 {strides = array<i32>} : memref<32x128xbf16, #tpu.memory_space<vmem>>, vector<32x128xbf16>,
    return
  }
  func.func @transform_0(%arg0: i32) -> (i32, i32) {
    %c0_i32 = arith.constant 0 : i32
    %c0_i32_0 = arith.constant 0 : i32
    return %arg0, %c0_i32 : i32, i32
  }
  func.func @transform_1(%arg0: i32) -> (i32, i32) {
    %c0_i32 = arith.constant 0 : i32
    %c0_i32_0 = arith.constant 0 : i32
    return %arg0, %c0_i32 : i32, i32
  }
  func.func @transform_2(%arg0: i32) -> (i32, i32) {
    %c0_i32 = arith.constant 0 : i32
    %c0_i32_0 = arith.constant 0 : i32
    %c0_i32_1 = arith.constant 0 : i32
    return %c0_i32, %c0_i32_0 : i32, i32
  }
  func.func @transform_3(%arg0: i32) -> (i32, i32) {
    %c0_i32 = arith.constant 0 : i32
    %c0_i32_0 = arith.constant 0 : i32
    return %arg0, %c0_i32 : i32, i32
  }
  func.func @transform_4(%arg0: i32) -> (i32, i32) {
    %c0_i32 = arith.constant 0 : i32
    %c0_i32_0 = arith.constant 0 : i32
    %c0_i32_1 = arith.constant 0 : i32
    return %c0_i32, %c0_i32_0 : i32, i32
  }
}

module attributes {stable_mosaic.version = 11 : i64} {
  func.func @_mm_kernel_nk1(%arg0: i32, %arg1: i32, %arg2: memref<128x288xbf16, #tpu.memory_space<vmem>>, %arg3: memref<288x128xbf16, #tpu.memory_space<vmem>>, %arg4: memref<1x128xf32, #tpu.memory_space<vmem>>, %arg5: memref<128x128xbf16, #tpu.memory_space<vmem>>) attributes {dimension_semantics = [#tpu.dimension_semantics<parallel>, #tpu.dimension_semantics<parallel>], iteration_bounds = array<i64: 1, 1>, scalar_prefetch = 0 : i64, scratch_operands = 0 : i64, tpu.core_type = #tpu.core_type<tc>, window_params = [{transform_indices = @transform_0, window_bounds = array<i64: 128, 288>}, {transform_indices = @transform_1, window_bounds = array<i64: 288, 128>}, {transform_indices = @transform_2, window_bounds = array<i64: 1, 128>}, {transform_indices = @transform_3, window_bounds = array<i64: 128, 128>}]} {
    %c0 = arith.constant 0 : index
    %c0_0 = arith.constant 0 : index
    %0 = vector.load %arg2[%c0, %c0_0] : memref<128x288xbf16, #tpu.memory_space<vmem>>, vector<128x288xbf16>
    %c0_1 = arith.constant 0 : index
    %c0_2 = arith.constant 0 : index
    %1 = vector.load %arg3[%c0_1, %c0_2] : memref<288x128xbf16, #tpu.memory_space<vmem>>, vector<288x128xbf16>
    %cst = arith.constant dense<0.000000e+00> : vector<128x128xf32>
    %2 = tpu.matmul %0, %1, %cst {dimension_numbers = #tpu.dot_dimension_numbers<[1], [0], [0], [1], [0, 0, 1, 1], [], []>} : vector<128x288xbf16>, vector<288x128xbf16>, vector<128x128xf32> -> vector<128x128xf32>
    %c0_3 = arith.constant 0 : index
    %c0_4 = arith.constant 0 : index
    %3 = vector.load %arg4[%c0_3, %c0_4] : memref<1x128xf32, #tpu.memory_space<vmem>>, vector<1x128xf32>
    %4 = vector.broadcast %3 : vector<1x128xf32> to vector<128x128xf32>
    %5 = arith.addf %2, %4 : vector<128x128xf32>
    %cst_5 = arith.constant 0.000000e+00 : f32
    %6 = vector.broadcast %cst_5 : f32 to vector<128x128xf32>
    %7 = arith.maximumf %5, %6 : vector<128x128xf32>
    %8 = arith.truncf %7 : vector<128x128xf32> to vector<128x128xbf16>
    %c0_6 = arith.constant 0 : index
    %c0_7 = arith.constant 0 : index
    %9 = vector.load %arg5[%c0_6, %c0_7] : memref<128x128xbf16, #tpu.memory_space<vmem>>, vector<128x128xbf16>
    tpu.vector_store %arg5[%c0_6, %c0_7], %8 {strides = array<i32>} : memref<128x128xbf16, #tpu.memory_space<vmem>>, vector<128x128xbf16>,
    return
  }
  func.func @transform_0(%arg0: i32, %arg1: i32) -> (i32, i32) {
    %c0_i32 = arith.constant 0 : i32
    %c0_i32_0 = arith.constant 0 : i32
    return %arg0, %c0_i32 : i32, i32
  }
  func.func @transform_1(%arg0: i32, %arg1: i32) -> (i32, i32) {
    %c0_i32 = arith.constant 0 : i32
    %c0_i32_0 = arith.constant 0 : i32
    return %c0_i32, %arg1 : i32, i32
  }
  func.func @transform_2(%arg0: i32, %arg1: i32) -> (i32, i32) {
    %c0_i32 = arith.constant 0 : i32
    %c0_i32_0 = arith.constant 0 : i32
    return %c0_i32, %arg1 : i32, i32
  }
  func.func @transform_3(%arg0: i32, %arg1: i32) -> (i32, i32) {
    %c0_i32 = arith.constant 0 : i32
    return %arg0, %arg1 : i32, i32
  }
}

module attributes {stable_mosaic.version = 11 : i64} {
  func.func @_mm_kernel_nk1(%arg0: i32, %arg1: i32, %arg2: memref<256x32xbf16, #tpu.memory_space<vmem>>, %arg3: memref<32x128xbf16, #tpu.memory_space<vmem>>, %arg4: memref<1x128xf32, #tpu.memory_space<vmem>>, %arg5: memref<256x128xf32, #tpu.memory_space<vmem>>) attributes {dimension_semantics = [#tpu.dimension_semantics<parallel>, #tpu.dimension_semantics<parallel>], iteration_bounds = array<i64: 2, 1>, scalar_prefetch = 0 : i64, scratch_operands = 0 : i64, tpu.core_type = #tpu.core_type<tc>, window_params = [{transform_indices = @transform_0, window_bounds = array<i64: 256, 32>}, {transform_indices = @transform_1, window_bounds = array<i64: 32, 128>}, {transform_indices = @transform_2, window_bounds = array<i64: 1, 128>}, {transform_indices = @transform_3, window_bounds = array<i64: 256, 128>}]} {
    %c0 = arith.constant 0 : index
    %c0_0 = arith.constant 0 : index
    %0 = vector.load %arg2[%c0, %c0_0] : memref<256x32xbf16, #tpu.memory_space<vmem>>, vector<256x32xbf16>
    %c0_1 = arith.constant 0 : index
    %c0_2 = arith.constant 0 : index
    %1 = vector.load %arg3[%c0_1, %c0_2] : memref<32x128xbf16, #tpu.memory_space<vmem>>, vector<32x128xbf16>
    %cst = arith.constant dense<0.000000e+00> : vector<256x128xf32>
    %2 = tpu.matmul %0, %1, %cst {dimension_numbers = #tpu.dot_dimension_numbers<[1], [0], [0], [1], [0, 0, 1, 1], [], []>} : vector<256x32xbf16>, vector<32x128xbf16>, vector<256x128xf32> -> vector<256x128xf32>
    %c0_3 = arith.constant 0 : index
    %c0_4 = arith.constant 0 : index
    %3 = vector.load %arg4[%c0_3, %c0_4] : memref<1x128xf32, #tpu.memory_space<vmem>>, vector<1x128xf32>
    %4 = vector.broadcast %3 : vector<1x128xf32> to vector<256x128xf32>
    %5 = arith.addf %2, %4 : vector<256x128xf32>
    %c0_5 = arith.constant 0 : index
    %c0_6 = arith.constant 0 : index
    %6 = vector.load %arg5[%c0_5, %c0_6] : memref<256x128xf32, #tpu.memory_space<vmem>>, vector<256x128xf32>
    tpu.vector_store %arg5[%c0_5, %c0_6], %5 {strides = array<i32>} : memref<256x128xf32, #tpu.memory_space<vmem>>, vector<256x128xf32>,
    return
  }
  func.func @transform_0(%arg0: i32, %arg1: i32) -> (i32, i32) {
    %c0_i32 = arith.constant 0 : i32
    %c0_i32_0 = arith.constant 0 : i32
    return %arg0, %c0_i32 : i32, i32
  }
  func.func @transform_1(%arg0: i32, %arg1: i32) -> (i32, i32) {
    %c0_i32 = arith.constant 0 : i32
    %c0_i32_0 = arith.constant 0 : i32
    return %c0_i32, %arg1 : i32, i32
  }
  func.func @transform_2(%arg0: i32, %arg1: i32) -> (i32, i32) {
    %c0_i32 = arith.constant 0 : i32
    %c0_i32_0 = arith.constant 0 : i32
    return %c0_i32, %arg1 : i32, i32
  }
  func.func @transform_3(%arg0: i32, %arg1: i32) -> (i32, i32) {
    %c0_i32 = arith.constant 0 : i32
    return %arg0, %arg1 : i32, i32
  }
}

module attributes {stable_mosaic.version = 11 : i64} {
  func.func @_mse_kernel(%arg0: i32, %arg1: memref<32x48xf32, #tpu.memory_space<vmem>>, %arg2: memref<32x48xf32, #tpu.memory_space<vmem>>, %arg3: memref<1x48xf32, #tpu.memory_space<vmem>>, %arg4: memref<1x48xf32, #tpu.memory_space<vmem>>, %arg5: memref<1x1xf32, #tpu.memory_space<vmem>>) attributes {dimension_semantics = [#tpu.dimension_semantics<arbitrary>], iteration_bounds = array<i64: 1>, scalar_prefetch = 0 : i64, scratch_operands = 0 : i64, tpu.core_type = #tpu.core_type<tc>, window_params = [{transform_indices = @transform_0, window_bounds = array<i64: 32, 48>}, {transform_indices = @transform_1, window_bounds = array<i64: 32, 48>}, {pipeline_mode = #tpu.pipeline_mode<synchronous>, transform_indices = @transform_2, window_bounds = array<i64: 1, 48>}, {pipeline_mode = #tpu.pipeline_mode<synchronous>, transform_indices = @transform_3, window_bounds = array<i64: 1, 48>}, {pipeline_mode = #tpu.pipeline_mode<synchronous>, transform_indices = @transform_4, window_bounds = array<i64: 1, 1>}]} {
    %c0_i32 = arith.constant 0 : i32
    %0 = arith.cmpi eq, %arg0, %c0_i32 : i32
    %1 = arith.extui %0 : i1 to i32
    %c0_i32_0 = arith.constant 0 : i32
    %2 = arith.cmpi ne, %1, %c0_i32_0 : i32
    scf.if %2 {
      %cst_15 = arith.constant 0.000000e+00 : f32
      %28 = vector.broadcast %cst_15 : f32 to vector<1x1xf32>
      %c0_16 = arith.constant 0 : index
      %c0_17 = arith.constant 0 : index
      %29 = vector.load %arg5[%c0_16, %c0_17] : memref<1x1xf32, #tpu.memory_space<vmem>>, vector<1x1xf32>
      tpu.vector_store %arg5[%c0_16, %c0_17], %28 {strides = array<i32>} : memref<1x1xf32, #tpu.memory_space<vmem>>, vector<1x1xf32>,
    } else {
    }
    %c0 = arith.constant 0 : index
    %c0_1 = arith.constant 0 : index
    %3 = vector.load %arg1[%c0, %c0_1] : memref<32x48xf32, #tpu.memory_space<vmem>>, vector<32x48xf32>
    %c0_2 = arith.constant 0 : index
    %c0_3 = arith.constant 0 : index
    %4 = vector.load %arg3[%c0_2, %c0_3] : memref<1x48xf32, #tpu.memory_space<vmem>>, vector<1x48xf32>
    %5 = vector.broadcast %4 : vector<1x48xf32> to vector<32x48xf32>
    %6 = arith.mulf %3, %5 : vector<32x48xf32>
    %c0_4 = arith.constant 0 : index
    %c0_5 = arith.constant 0 : index
    %7 = vector.load %arg4[%c0_4, %c0_5] : memref<1x48xf32, #tpu.memory_space<vmem>>, vector<1x48xf32>
    %8 = vector.broadcast %7 : vector<1x48xf32> to vector<32x48xf32>
    %9 = arith.addf %6, %8 : vector<32x48xf32>
    %c0_6 = arith.constant 0 : index
    %c0_7 = arith.constant 0 : index
    %10 = vector.load %arg2[%c0_6, %c0_7] : memref<32x48xf32, #tpu.memory_space<vmem>>, vector<32x48xf32>
    %11 = arith.subf %9, %10 : vector<32x48xf32>
    %12 = tpu.iota {dimensions = array<i32: 0>} : vector<32x48xi32>
    %c32_i32 = arith.constant 32 : i32
    %13 = arith.muli %arg0, %c32_i32 : i32
    %14 = vector.broadcast %13 : i32 to vector<32x48xi32>
    %15 = arith.addi %12, %14 : vector<32x48xi32>
    %c32_i32_8 = arith.constant 32 : i32
    %16 = vector.broadcast %c32_i32_8 : i32 to vector<32x48xi32>
    %17 = arith.cmpi slt, %15, %16 : vector<32x48xi32>
    %cst = arith.constant 0.000000e+00 : f32
    %18 = vector.broadcast %cst : f32 to vector<32x48xf32>
    %19 = arith.select %17, %11, %18 : vector<32x48xi1>, vector<32x48xf32>
    %c0_9 = arith.constant 0 : index
    %c0_10 = arith.constant 0 : index
    %20 = vector.load %arg5[%c0_9, %c0_10] : memref<1x1xf32, #tpu.memory_space<vmem>>, vector<1x1xf32>
    %21 = arith.mulf %19, %19 : vector<32x48xf32>
    %cst_11 = arith.constant dense<0.000000e+00> : vector<32xf32>
    %22 = vector.multi_reduction <add>, %21, %cst_11 [1] : vector<32x48xf32> to vector<32xf32>
    %23 = vector.shape_cast %22 : vector<32xf32> to vector<32x1xf32>
    %cst_12 = arith.constant dense<0.000000e+00> : vector<1xf32>
    %24 = vector.multi_reduction <add>, %23, %cst_12 [0] : vector<32x1xf32> to vector<1xf32>
    %25 = vector.shape_cast %24 : vector<1xf32> to vector<1x1xf32>
    %26 = arith.addf %20, %25 : vector<1x1xf32>
    %c0_13 = arith.constant 0 : index
    %c0_14 = arith.constant 0 : index
    %27 = vector.load %arg5[%c0_13, %c0_14] : memref<1x1xf32, #tpu.memory_space<vmem>>, vector<1x1xf32>
    tpu.vector_store %arg5[%c0_13, %c0_14], %26 {strides = array<i32>} : memref<1x1xf32, #tpu.memory_space<vmem>>, vector<1x1xf32>,
    return
  }
  func.func @transform_0(%arg0: i32) -> (i32, i32) {
    %c0_i32 = arith.constant 0 : i32
    %c0_i32_0 = arith.constant 0 : i32
    return %arg0, %c0_i32 : i32, i32
  }
  func.func @transform_1(%arg0: i32) -> (i32, i32) {
    %c0_i32 = arith.constant 0 : i32
    %c0_i32_0 = arith.constant 0 : i32
    return %arg0, %c0_i32 : i32, i32
  }
  func.func @transform_2(%arg0: i32) -> (i32, i32) {
    %c0_i32 = arith.constant 0 : i32
    %c0_i32_0 = arith.constant 0 : i32
    %c0_i32_1 = arith.constant 0 : i32
    return %c0_i32, %c0_i32_0 : i32, i32
  }
  func.func @transform_3(%arg0: i32) -> (i32, i32) {
    %c0_i32 = arith.constant 0 : i32
    %c0_i32_0 = arith.constant 0 : i32
    %c0_i32_1 = arith.constant 0 : i32
    return %c0_i32, %c0_i32_0 : i32, i32
  }
  func.func @transform_4(%arg0: i32) -> (i32, i32) {
    %c0_i32 = arith.constant 0 : i32
    %c0_i32_0 = arith.constant 0 : i32
    %c0_i32_1 = arith.constant 0 : i32
    return %c0_i32, %c0_i32_0 : i32, i32
  }
}

</mosaic_0001>

<llo_original>
// kernel: discrete_vae_forward.15
$region0: #{discrete_vae_forward.15}
  #allocation0 [shape = 'u32[]', space=smem, size = 0x4, offset = 0x4, fixed_abs, tag = 'smem constant byte address 0x4 - core index']
  #allocation1 [shape = 'u32[144,128]{1,0:T(1,128)}', space=vmem, size = 0x12000, scoped, tag = 'internal scratch']
  %s0 = inlined_call_operand.vmem [shape: bf16[128,48], index: 0, kind: input, shape index: {}]
  %s1 = inlined_call_operand.vmem [shape: bf16[48,128], index: 1, kind: input, shape index: {}]
  %s2 = inlined_call_operand.vmem [shape: f32[1,128], index: 2, kind: input, shape index: {}]
  %s3 = inlined_call_operand.vmem [shape: bf16[128,128], index: 3, kind: output, shape index: {}]
  %s4 = sld [smem:[#allocation0]]
  $region22: #{discrete_vae_forward.15} parent=0
    _
  %s6 = ssub.s32 1, %s4
  %s7 = scalar_select 0, %s6, %s4
  // Predicated region
  $region2: #{discrete_vae_forward.15} parent=0 // pred_check
    _
  $region3: #{discrete_vae_forward.15} parent=0 // pred_check_branch
    %9 = sbr.rel (0) target = $region5
  $region4: #{discrete_vae_forward.15} parent=0 // pred_region
    _
  $region5: #{discrete_vae_forward.15} parent=0 // pred_fallthru
    _
  // Predicated region
  $region6: #{discrete_vae_forward.15} parent=0 // pred_check
    _
  $region7: #{discrete_vae_forward.15} parent=0 // pred_check_branch
    %11 = sbr.rel (0) target = $region9
  $region8: #{discrete_vae_forward.15} parent=0 // pred_region
    _
  $region9: #{discrete_vae_forward.15} parent=0 // pred_fallthru
    _
  // Predicated region
  $region10: #{discrete_vae_forward.15} parent=0 // pred_check
    _
  $region11: #{discrete_vae_forward.15} parent=0 // pred_check_branch
    %13 = sbr.rel (0) target = $region13
  $region12: #{discrete_vae_forward.15} parent=0 // pred_region
    _
  $region13: #{discrete_vae_forward.15} parent=0 // pred_fallthru
    _
  %v15 = vld [vmem:[%s0] sm:$0xf]
  %v16 = vld [vmem:[%s0 + $0x4] sm:$0xf]
  %v17 = vld [vmem:[%s0 + $0x8] sm:$0xf]
  %v18 = vld [vmem:[%s0 + $0xc] sm:$0xf]
  %v19 = vld [vmem:[%s0 + $0x10] sm:$0xf]
  %v20 = vld [vmem:[%s0 + $0x14] sm:$0xf]
  %v21 = vld [vmem:[%s0 + $0x18] sm:$0xf]
  %v22 = vld [vmem:[%s0 + $0x1c] sm:$0xf]
  %v23 = vld [vmem:[%s0 + $0x20] sm:$0xf]
  %v24 = vld [vmem:[%s0 + $0x24] sm:$0xf]
  %v25 = vld [vmem:[%s0 + $0x28] sm:$0xf]
  %v26 = vld [vmem:[%s0 + $0x2c] sm:$0xf]
  %v27 = vld [vmem:[%s0 + $0x30] sm:$0xf]
  %v28 = vld [vmem:[%s0 + $0x34] sm:$0xf]
  %v29 = vld [vmem:[%s0 + $0x38] sm:$0xf]
  %v30 = vld [vmem:[%s0 + $0x3c] sm:$0xf]
  %v31 = vld [vmem:[%s1] sm:$0xf]
  %v32 = vld [vmem:[%s1 + $0x4] sm:$0xf]
  %v33 = vld [vmem:[%s1 + $0x8] sm:$0xf]
  %v34 = vld [vmem:[%s1 + $0xc] sm:$0xf]
  %v35 = vld [vmem:[%s1 + $0x10] sm:$0xf]
  %v36 = vld [vmem:[%s1 + $0x14] sm:$0xf]
  %v37 = vld [vmem:[%s2] sm:$0x1]
  %v39 = vlaneseq
  %v40 = vshrl.u32 %v39, 7
  %v41 = vsub.s32 0, %v40
  %v42 = vrot.slane %v37, %v41
  %v60 = vunpack.c.l.b16 %v15
  %v61 = vunpack.c.l.b16 %v16
  %v62 = vunpack.c.l.b16 %v17
  %v63 = vunpack.c.l.b16 %v18
  %v64 = vunpack.c.l.b16 %v19
  %v65 = vunpack.c.l.b16 %v20
  %v66 = vunpack.c.l.b16 %v21
  %v67 = vunpack.c.l.b16 %v22
  %v68 = vunpack.c.l.b16 %v23
  %v69 = vunpack.c.l.b16 %v24
  %v70 = vunpack.c.l.b16 %v25
  %v71 = vunpack.c.l.b16 %v26
  %v72 = vunpack.c.l.b16 %v27
  %v73 = vunpack.c.l.b16 %v28
  %v74 = vunpack.c.l.b16 %v29
  %v75 = vunpack.c.l.b16 %v30
  %v76 = vpack.c.b16 %v61, %v60
  %v77 = vpack.c.b16 %v63, %v62
  %v78 = vpack.c.b16 %v65, %v64
  %v79 = vpack.c.b16 %v67, %v66
  %v80 = vpack.c.b16 %v69, %v68
  %v81 = vpack.c.b16 %v71, %v70
  %v82 = vpack.c.b16 %v73, %v72
  %v83 = vpack.c.b16 %v75, %v74
  %v90 = vunpack.c.l.b16 %v31
  %v91 = vunpack.c.l.b16 %v32
  %v92 = vunpack.c.l.b16 %v33
  %v93 = vunpack.c.l.b16 %v34
  %v94 = vunpack.c.l.b16 %v35
  %v95 = vunpack.c.l.b16 %v36
  %v96 = vpack.c.b16 %v91, %v90
  %v97 = vpack.c.b16 %v93, %v92
  %v98 = vpack.c.b16 %v95, %v94
  %vm102 = vcmask 392192
  %v104 = vsel %vm102, %v76, 0
  %v107 = vsel %vm102, %v77, 0
  %v110 = vsel %vm102, %v78, 0
  %v113 = vsel %vm102, %v79, 0
  %v116 = vsel %vm102, %v80, 0
  %v119 = vsel %vm102, %v81, 0
  %v122 = vsel %vm102, %v82, 0
  %v125 = vsel %vm102, %v83, 0
  %127 = vmatprep.subr.bf16.mxu0 0
  %128 = vmatpush1.bf16.msra.mxu0 %v96
  %129 = vmatprep.subr.bf16.mxu0 0
  %130 = vmatpush1.bf16.msra.mxu0 %v97
  %131 = vmatprep.subr.bf16.mxu0 0
  %132 = vmatpush1.bf16.msra.mxu0 %v98
  %133 = vmatprep.subr.bf16.mxu0 0
  %134 = vmatpush1.bf16.msra.mxu0 0
  %135 = vmatprep.subr.bf16.mxu0 0
  %136 = vmatpush1.bf16.msra.mxu0 0
  %137 = vmatprep.subr.bf16.mxu0 0
  %138 = vmatpush1.bf16.msra.mxu0 0
  %139 = vmatprep.subr.bf16.mxu0 0
  %140 = vmatpush1.bf16.msra.mxu0 0
  %141 = vmatprep.subr.bf16.mxu0 0
  %142 = vmatpush1.bf16.msra.mxu0 0
  %143 = vmatprep.subr.bf16.mxu0 0
  %144 = vmatpush1.bf16.msra.mxu0 0
  %145 = vmatprep.subr.bf16.mxu0 0
  %146 = vmatpush1.bf16.msra.mxu0 0
  %147 = vmatprep.subr.bf16.mxu0 0
  %148 = vmatpush1.bf16.msra.mxu0 0
  %149 = vmatprep.subr.bf16.mxu0 0
  %150 = vmatpush1.bf16.msra.mxu0 0
  %151 = vmatprep.subr.bf16.mxu0 0
  %152 = vmatpush1.bf16.msra.mxu0 0
  %153 = vmatprep.subr.bf16.mxu0 0
  %154 = vmatpush1.bf16.msra.mxu0 0
  %155 = vmatprep.subr.bf16.mxu0 0
  %156 = vmatpush1.bf16.msra.mxu0 0
  %157 = vmatprep.subr.bf16.mxu0 0
  %158 = vmatpush1.bf16.msra.mxu0 0
  %159 = vmatprep.mubr.bf16.mxu0 0
  %160 = vmatmul.mubr.bf16.gmra.mrb[0].mxu0 %v104
  %v161 = vpop.f32.mrb[0].mxu0
  %v162 = vadd.f32 %v42, %v161
  %v163 = vpop.f32.mrb[0].mxu0
  %v164 = vpop.f32.mrb[0].mxu0
  %v165 = vadd.f32 %v42, %v164
  %v166 = vpop.f32.mrb[0].mxu0
  %167 = vmatprep.mubr.bf16.mxu0 0
  %168 = vmatmul.mubr.bf16.gmra.mrb[0].mxu0 %v107
  %v169 = vpop.f32.mrb[0].mxu0
  %v170 = vadd.f32 %v42, %v169
  %v171 = vpop.f32.mrb[0].mxu0
  %v172 = vpop.f32.mrb[0].mxu0
  %v173 = vadd.f32 %v42, %v172
  %v174 = vpop.f32.mrb[0].mxu0
  %175 = vmatprep.mubr.bf16.mxu0 0
  %176 = vmatmul.mubr.bf16.gmra.mrb[0].mxu0 %v110
  %v177 = vpop.f32.mrb[0].mxu0
  %v178 = vadd.f32 %v42, %v177
  %v179 = vpop.f32.mrb[0].mxu0
  %v180 = vpop.f32.mrb[0].mxu0
  %v181 = vadd.f32 %v42, %v180
  %v182 = vpop.f32.mrb[0].mxu0
  %183 = vmatprep.mubr.bf16.mxu0 0
  %184 = vmatmul.mubr.bf16.gmra.mrb[0].mxu0 %v113
  %v185 = vpop.f32.mrb[0].mxu0
  %v186 = vadd.f32 %v42, %v185
  %v187 = vpop.f32.mrb[0].mxu0
  %v188 = vpop.f32.mrb[0].mxu0
  %v189 = vadd.f32 %v42, %v188
  %v190 = vpop.f32.mrb[0].mxu0
  %191 = vmatprep.mubr.bf16.mxu0 0
  %192 = vmatmul.mubr.bf16.gmra.mrb[0].mxu0 %v116
  %v193 = vpop.f32.mrb[0].mxu0
  %v194 = vadd.f32 %v42, %v193
  %v195 = vpop.f32.mrb[0].mxu0
  %v196 = vpop.f32.mrb[0].mxu0
  %v197 = vadd.f32 %v42, %v196
  %v198 = vpop.f32.mrb[0].mxu0
  %199 = vmatprep.mubr.bf16.mxu0 0
  %200 = vmatmul.mubr.bf16.gmra.mrb[0].mxu0 %v119
  %v201 = vpop.f32.mrb[0].mxu0
  %v202 = vadd.f32 %v42, %v201
  %v203 = vpop.f32.mrb[0].mxu0
  %v204 = vpop.f32.mrb[0].mxu0
  %v205 = vadd.f32 %v42, %v204
  %v206 = vpop.f32.mrb[0].mxu0
  %207 = vmatprep.mubr.bf16.mxu0 0
  %208 = vmatmul.mubr.bf16.gmra.mrb[0].mxu0 %v122
  %v209 = vpop.f32.mrb[0].mxu0
  %v210 = vadd.f32 %v42, %v209
  %v211 = vpop.f32.mrb[0].mxu0
  %v212 = vpop.f32.mrb[0].mxu0
  %v213 = vadd.f32 %v42, %v212
  %v214 = vpop.f32.mrb[0].mxu0
  %215 = vmatprep.mubr.bf16.mxu0 0
  %216 = vmatmul.mubr.bf16.gmra.mrb[0].mxu0 %v125
  %v217 = vpop.f32.mrb[0].mxu0
  %v218 = vadd.f32 %v42, %v217
  %v219 = vpop.f32.mrb[0].mxu0
  %v220 = vpop.f32.mrb[0].mxu0
  %v221 = vadd.f32 %v42, %v220
  %v222 = vpop.f32.mrb[0].mxu0
  %223 = vdwg.mxu0
  %v224 = vmax.f32 %v162, 0.0
  %v225 = vmax.f32 %v165, 0.0
  %v226 = vmax.f32 %v170, 0.0
  %v227 = vmax.f32 %v173, 0.0
  %v228 = vmax.f32 %v178, 0.0
  %v229 = vmax.f32 %v181, 0.0
  %v230 = vmax.f32 %v186, 0.0
  %v231 = vmax.f32 %v189, 0.0
  %v232 = vmax.f32 %v194, 0.0
  %v233 = vmax.f32 %v197, 0.0
  %v234 = vmax.f32 %v202, 0.0
  %v235 = vmax.f32 %v205, 0.0
  %v236 = vmax.f32 %v210, 0.0
  %v237 = vmax.f32 %v213, 0.0
  %v238 = vmax.f32 %v218, 0.0
  %v239 = vmax.f32 %v221, 0.0
  %v240 = vpack.c.bf16 %v225, %v224
  %v241 = vpack.c.bf16 %v227, %v226
  %v242 = vpack.c.bf16 %v229, %v228
  %v243 = vpack.c.bf16 %v231, %v230
  %v244 = vpack.c.bf16 %v233, %v232
  %v245 = vpack.c.bf16 %v235, %v234
  %v246 = vpack.c.bf16 %v237, %v236
  %v247 = vpack.c.bf16 %v239, %v238
  %v256 = vunpack.c.l.b16 %v240
  %v257 = vunpack.c.h.b16 %v240
  %v258 = vunpack.c.l.b16 %v241
  %v259 = vunpack.c.h.b16 %v241
  %v260 = vunpack.c.l.b16 %v242
  %v261 = vunpack.c.h.b16 %v242
  %v262 = vunpack.c.l.b16 %v243
  %v263 = vunpack.c.h.b16 %v243
  %v264 = vunpack.c.l.b16 %v244
  %v265 = vunpack.c.h.b16 %v244
  %v266 = vunpack.c.l.b16 %v245
  %v267 = vunpack.c.h.b16 %v245
  %v268 = vunpack.c.l.b16 %v246
  %v269 = vunpack.c.h.b16 %v246
  %v270 = vunpack.c.l.b16 %v247
  %v271 = vunpack.c.h.b16 %v247
  %v272 = vpack.c.b16 %v256, %v256
  %v273 = vpack.c.b16 %v257, %v257
  %v274 = vpack.c.b16 %v258, %v258
  %v275 = vpack.c.b16 %v259, %v259
  %v276 = vpack.c.b16 %v260, %v260
  %v277 = vpack.c.b16 %v261, %v261
  %v278 = vpack.c.b16 %v262, %v262
  %v279 = vpack.c.b16 %v263, %v263
  %v280 = vpack.c.b16 %v264, %v264
  %v281 = vpack.c.b16 %v265, %v265
  %v282 = vpack.c.b16 %v266, %v266
  %v283 = vpack.c.b16 %v267, %v267
  %v284 = vpack.c.b16 %v268, %v268
  %v285 = vpack.c.b16 %v269, %v269
  %v286 = vpack.c.b16 %v270, %v270
  %v287 = vpack.c.b16 %v271, %v271
  %304 = vst [vmem:[%s3] sm:$0xf] %v272
  %305 = vst [vmem:[%s3 + $0x4] sm:$0xf] %v273
  %306 = vst [vmem:[%s3 + $0x8] sm:$0xf] %v274
  %307 = vst [vmem:[%s3 + $0xc] sm:$0xf] %v275
  %308 = vst [vmem:[%s3 + $0x10] sm:$0xf] %v276
  %309 = vst [vmem:[%s3 + $0x14] sm:$0xf] %v277
  %310 = vst [vmem:[%s3 + $0x18] sm:$0xf] %v278
  %311 = vst [vmem:[%s3 + $0x1c] sm:$0xf] %v279
  %312 = vst [vmem:[%s3 + $0x20] sm:$0xf] %v280
  %313 = vst [vmem:[%s3 + $0x24] sm:$0xf] %v281
  %314 = vst [vmem:[%s3 + $0x28] sm:$0xf] %v282
  %315 = vst [vmem:[%s3 + $0x2c] sm:$0xf] %v283
  %316 = vst [vmem:[%s3 + $0x30] sm:$0xf] %v284
  %317 = vst [vmem:[%s3 + $0x34] sm:$0xf] %v285
  %318 = vst [vmem:[%s3 + $0x38] sm:$0xf] %v286
  %319 = vst [vmem:[%s3 + $0x3c] sm:$0xf] %v287
  // Predicated region
  $region14: #{discrete_vae_forward.15} parent=0 // pred_check
    _
  $region15: #{discrete_vae_forward.15} parent=0 // pred_check_branch
    %321 = sbr.rel (0) target = $region17
  $region16: #{discrete_vae_forward.15} parent=0 // pred_region
    _
  $region17: #{discrete_vae_forward.15} parent=0 // pred_fallthru
    _
  // Predicated region
  $region18: #{discrete_vae_forward.15} parent=0 // pred_check
    _
  $region19: #{discrete_vae_forward.15} parent=0 // pred_check_branch
    %323 = sbr.rel (0) target = $region21
  $region20: #{discrete_vae_forward.15} parent=0 // pred_region
    _
  $region21: #{discrete_vae_forward.15} parent=0 // pred_fallthru
    _

// kernel: discrete_vae_forward.16
$region0: #{discrete_vae_forward.16}
  #allocation0 [shape = 'u32[]', space=smem, size = 0x4, offset = 0x4, fixed_abs, tag = 'smem constant byte address 0x4 - core index']
  #allocation1 [shape = 'u32[144,128]{1,0:T(1,128)}', space=vmem, size = 0x12000, scoped, tag = 'internal scratch']
  %s0 = inlined_call_operand.vmem [shape: bf16[32,512], index: 0, kind: input, shape index: {}]
  %s1 = inlined_call_operand.vmem [shape: bf16[512,128], index: 1, kind: input, shape index: {}]
  %s2 = inlined_call_operand.vmem [shape: f32[1,128], index: 2, kind: input, shape index: {}]
  %s3 = inlined_call_operand.vmem [shape: bf16[32,128], index: 3, kind: output, shape index: {}]
  %s4 = sld [smem:[#allocation0]]
  $region22: #{discrete_vae_forward.16} parent=0
    _
  %s6 = ssub.s32 1, %s4
  %s7 = scalar_select 0, %s6, %s4
  // Predicated region
  $region2: #{discrete_vae_forward.16} parent=0 // pred_check
    _
  $region3: #{discrete_vae_forward.16} parent=0 // pred_check_branch
    %9 = sbr.rel (0) target = $region5
  $region4: #{discrete_vae_forward.16} parent=0 // pred_region
    _
  $region5: #{discrete_vae_forward.16} parent=0 // pred_fallthru
    _
  // Predicated region
  $region6: #{discrete_vae_forward.16} parent=0 // pred_check
    _
  $region7: #{discrete_vae_forward.16} parent=0 // pred_check_branch
    %11 = sbr.rel (0) target = $region9
  $region8: #{discrete_vae_forward.16} parent=0 // pred_region
    _
  $region9: #{discrete_vae_forward.16} parent=0 // pred_fallthru
    _
  // Predicated region
  $region10: #{discrete_vae_forward.16} parent=0 // pred_check
    _
  $region11: #{discrete_vae_forward.16} parent=0 // pred_check_branch
    %13 = sbr.rel (0) target = $region13
  $region12: #{discrete_vae_forward.16} parent=0 // pred_region
    _
  $region13: #{discrete_vae_forward.16} parent=0 // pred_fallthru
    _
  %v15 = vld [vmem:[%s0] sm:$0xff]
  %v16 = vld [vmem:[%s0 + $0x8] sm:$0xff]
  %v17 = vld [vmem:[%s0 + $0x10] sm:$0xff]
  %v18 = vld [vmem:[%s0 + $0x18] sm:$0xff]
  %v19 = vld [vmem:[%s0 + $0x20] sm:$0xff]
  %v20 = vld [vmem:[%s0 + $0x28] sm:$0xff]
  %v21 = vld [vmem:[%s0 + $0x30] sm:$0xff]
  %v22 = vld [vmem:[%s0 + $0x38] sm:$0xff]
  %v23 = vld [vmem:[%s1] sm:$0xf]
  %v24 = vld [vmem:[%s1 + $0x4] sm:$0xf]
  %v25 = vld [vmem:[%s1 + $0x8] sm:$0xf]
  %v26 = vld [vmem:[%s1 + $0xc] sm:$0xf]
  %v27 = vld [vmem:[%s1 + $0x10] sm:$0xf]
  %v28 = vld [vmem:[%s1 + $0x14] sm:$0xf]
  %v29 = vld [vmem:[%s1 + $0x18] sm:$0xf]
  %v30 = vld [vmem:[%s1 + $0x1c] sm:$0xf]
  %v31 = vld [vmem:[%s1 + $0x20] sm:$0xf]
  %v32 = vld [vmem:[%s1 + $0x24] sm:$0xf]
  %v33 = vld [vmem:[%s1 + $0x28] sm:$0xf]
  %v34 = vld [vmem:[%s1 + $0x2c] sm:$0xf]
  %v35 = vld [vmem:[%s1 + $0x30] sm:$0xf]
  %v36 = vld [vmem:[%s1 + $0x34] sm:$0xf]
  %v37 = vld [vmem:[%s1 + $0x38] sm:$0xf]
  %v38 = vld [vmem:[%s1 + $0x3c] sm:$0xf]
  %v39 = vld [vmem:[%s1 + $0x40] sm:$0xf]
  %v40 = vld [vmem:[%s1 + $0x44] sm:$0xf]
  %v41 = vld [vmem:[%s1 + $0x48] sm:$0xf]
  %v42 = vld [vmem:[%s1 + $0x4c] sm:$0xf]
  %v43 = vld [vmem:[%s1 + $0x50] sm:$0xf]
  %v44 = vld [vmem:[%s1 + $0x54] sm:$0xf]
  %v45 = vld [vmem:[%s1 + $0x58] sm:$0xf]
  %v46 = vld [vmem:[%s1 + $0x5c] sm:$0xf]
  %v47 = vld [vmem:[%s1 + $0x60] sm:$0xf]
  %v48 = vld [vmem:[%s1 + $0x64] sm:$0xf]
  %v49 = vld [vmem:[%s1 + $0x68] sm:$0xf]
  %v50 = vld [vmem:[%s1 + $0x6c] sm:$0xf]
  %v51 = vld [vmem:[%s1 + $0x70] sm:$0xf]
  %v52 = vld [vmem:[%s1 + $0x74] sm:$0xf]
  %v53 = vld [vmem:[%s1 + $0x78] sm:$0xf]
  %v54 = vld [vmem:[%s1 + $0x7c] sm:$0xf]
  %v55 = vld [vmem:[%s1 + $0x80] sm:$0xf]
  %v56 = vld [vmem:[%s1 + $0x84] sm:$0xf]
  %v57 = vld [vmem:[%s1 + $0x88] sm:$0xf]
  %v58 = vld [vmem:[%s1 + $0x8c] sm:$0xf]
  %v59 = vld [vmem:[%s1 + $0x90] sm:$0xf]
  %v60 = vld [vmem:[%s1 + $0x94] sm:$0xf]
  %v61 = vld [vmem:[%s1 + $0x98] sm:$0xf]
  %v62 = vld [vmem:[%s1 + $0x9c] sm:$0xf]
  %v63 = vld [vmem:[%s1 + $0xa0] sm:$0xf]
  %v64 = vld [vmem:[%s1 + $0xa4] sm:$0xf]
  %v65 = vld [vmem:[%s1 + $0xa8] sm:$0xf]
  %v66 = vld [vmem:[%s1 + $0xac] sm:$0xf]
  %v67 = vld [vmem:[%s1 + $0xb0] sm:$0xf]
  %v68 = vld [vmem:[%s1 + $0xb4] sm:$0xf]
  %v69 = vld [vmem:[%s1 + $0xb8] sm:$0xf]
  %v70 = vld [vmem:[%s1 + $0xbc] sm:$0xf]
  %v71 = vld [vmem:[%s1 + $0xc0] sm:$0xf]
  %v72 = vld [vmem:[%s1 + $0xc4] sm:$0xf]
  %v73 = vld [vmem:[%s1 + $0xc8] sm:$0xf]
  %v74 = vld [vmem:[%s1 + $0xcc] sm:$0xf]
  %v75 = vld [vmem:[%s1 + $0xd0] sm:$0xf]
  %v76 = vld [vmem:[%s1 + $0xd4] sm:$0xf]
  %v77 = vld [vmem:[%s1 + $0xd8] sm:$0xf]
  %v78 = vld [vmem:[%s1 + $0xdc] sm:$0xf]
  %v79 = vld [vmem:[%s1 + $0xe0] sm:$0xf]
  %v80 = vld [vmem:[%s1 + $0xe4] sm:$0xf]
  %v81 = vld [vmem:[%s1 + $0xe8] sm:$0xf]
  %v82 = vld [vmem:[%s1 + $0xec] sm:$0xf]
  %v83 = vld [vmem:[%s1 + $0xf0] sm:$0xf]
  %v84 = vld [vmem:[%s1 + $0xf4] sm:$0xf]
  %v85 = vld [vmem:[%s1 + $0xf8] sm:$0xf]
  %v86 = vld [vmem:[%s1 + $0xfc] sm:$0xf]
  %v87 = vld [vmem:[%s2] sm:$0x1]
  %v89 = vlaneseq
  %v90 = vshrl.u32 %v89, 7
  %v91 = vsub.s32 0, %v90
  %v92 = vrot.slane %v87, %v91
  %v102 = vunpack.c.l.b16 %v15
  %v103 = vunpack.c.h.b16 %v15
  %v104 = vunpack.c.l.b16 %v16
  %v105 = vunpack.c.h.b16 %v16
  %v106 = vunpack.c.l.b16 %v17
  %v107 = vunpack.c.h.b16 %v17
  %v108 = vunpack.c.l.b16 %v18
  %v109 = vunpack.c.h.b16 %v18
  %v110 = vunpack.c.l.b16 %v19
  %v111 = vunpack.c.h.b16 %v19
  %v112 = vunpack.c.l.b16 %v20
  %v113 = vunpack.c.h.b16 %v20
  %v114 = vunpack.c.l.b16 %v21
  %v115 = vunpack.c.h.b16 %v21
  %v116 = vunpack.c.l.b16 %v22
  %v117 = vunpack.c.h.b16 %v22
  %v118 = vpack.c.b16 %v106, %v102
  %v119 = vpack.c.b16 %v107, %v103
  %v120 = vpack.c.b16 %v108, %v104
  %v121 = vpack.c.b16 %v109, %v105
  %v122 = vpack.c.b16 %v114, %v110
  %v123 = vpack.c.b16 %v115, %v111
  %v124 = vpack.c.b16 %v116, %v112
  %v125 = vpack.c.b16 %v117, %v113
  %v198 = vunpack.c.l.b16 %v23
  %v199 = vunpack.c.l.b16 %v24
  %v200 = vunpack.c.l.b16 %v25
  %v201 = vunpack.c.l.b16 %v26
  %v202 = vunpack.c.l.b16 %v27
  %v203 = vunpack.c.l.b16 %v28
  %v204 = vunpack.c.l.b16 %v29
  %v205 = vunpack.c.l.b16 %v30
  %v206 = vunpack.c.l.b16 %v31
  %v207 = vunpack.c.l.b16 %v32
  %v208 = vunpack.c.l.b16 %v33
  %v209 = vunpack.c.l.b16 %v34
  %v210 = vunpack.c.l.b16 %v35
  %v211 = vunpack.c.l.b16 %v36
  %v212 = vunpack.c.l.b16 %v37
  %v213 = vunpack.c.l.b16 %v38
  %v214 = vunpack.c.l.b16 %v39
  %v215 = vunpack.c.l.b16 %v40
  %v216 = vunpack.c.l.b16 %v41
  %v217 = vunpack.c.l.b16 %v42
  %v218 = vunpack.c.l.b16 %v43
  %v219 = vunpack.c.l.b16 %v44
  %v220 = vunpack.c.l.b16 %v45
  %v221 = vunpack.c.l.b16 %v46
  %v222 = vunpack.c.l.b16 %v47
  %v223 = vunpack.c.l.b16 %v48
  %v224 = vunpack.c.l.b16 %v49
  %v225 = vunpack.c.l.b16 %v50
  %v226 = vunpack.c.l.b16 %v51
  %v227 = vunpack.c.l.b16 %v52
  %v228 = vunpack.c.l.b16 %v53
  %v229 = vunpack.c.l.b16 %v54
  %v230 = vunpack.c.l.b16 %v55
  %v231 = vunpack.c.l.b16 %v56
  %v232 = vunpack.c.l.b16 %v57
  %v233 = vunpack.c.l.b16 %v58
  %v234 = vunpack.c.l.b16 %v59
  %v235 = vunpack.c.l.b16 %v60
  %v236 = vunpack.c.l.b16 %v61
  %v237 = vunpack.c.l.b16 %v62
  %v238 = vunpack.c.l.b16 %v63
  %v239 = vunpack.c.l.b16 %v64
  %v240 = vunpack.c.l.b16 %v65
  %v241 = vunpack.c.l.b16 %v66
  %v242 = vunpack.c.l.b16 %v67
  %v243 = vunpack.c.l.b16 %v68
  %v244 = vunpack.c.l.b16 %v69
  %v245 = vunpack.c.l.b16 %v70
  %v246 = vunpack.c.l.b16 %v71
  %v247 = vunpack.c.l.b16 %v72
  %v248 = vunpack.c.l.b16 %v73
  %v249 = vunpack.c.l.b16 %v74
  %v250 = vunpack.c.l.b16 %v75
  %v251 = vunpack.c.l.b16 %v76
  %v252 = vunpack.c.l.b16 %v77
  %v253 = vunpack.c.l.b16 %v78
  %v254 = vunpack.c.l.b16 %v79
  %v255 = vunpack.c.l.b16 %v80
  %v256 = vunpack.c.l.b16 %v81
  %v257 = vunpack.c.l.b16 %v82
  %v258 = vunpack.c.l.b16 %v83
  %v259 = vunpack.c.l.b16 %v84
  %v260 = vunpack.c.l.b16 %v85
  %v261 = vunpack.c.l.b16 %v86
  %v262 = vpack.c.b16 %v199, %v198
  %v263 = vpack.c.b16 %v201, %v200
  %v264 = vpack.c.b16 %v203, %v202
  %v265 = vpack.c.b16 %v205, %v204
  %v266 = vpack.c.b16 %v207, %v206
  %v267 = vpack.c.b16 %v209, %v208
  %v268 = vpack.c.b16 %v211, %v210
  %v269 = vpack.c.b16 %v213, %v212
  %v270 = vpack.c.b16 %v215, %v214
  %v271 = vpack.c.b16 %v217, %v216
  %v272 = vpack.c.b16 %v219, %v218
  %v273 = vpack.c.b16 %v221, %v220
  %v274 = vpack.c.b16 %v223, %v222
  %v275 = vpack.c.b16 %v225, %v224
  %v276 = vpack.c.b16 %v227, %v226
  %v277 = vpack.c.b16 %v229, %v228
  %v278 = vpack.c.b16 %v231, %v230
  %v279 = vpack.c.b16 %v233, %v232
  %v280 = vpack.c.b16 %v235, %v234
  %v281 = vpack.c.b16 %v237, %v236
  %v282 = vpack.c.b16 %v239, %v238
  %v283 = vpack.c.b16 %v241, %v240
  %v284 = vpack.c.b16 %v243, %v242
  %v285 = vpack.c.b16 %v245, %v244
  %v286 = vpack.c.b16 %v247, %v246
  %v287 = vpack.c.b16 %v249, %v248
  %v288 = vpack.c.b16 %v251, %v250
  %v289 = vpack.c.b16 %v253, %v252
  %v290 = vpack.c.b16 %v255, %v254
  %v291 = vpack.c.b16 %v257, %v256
  %v292 = vpack.c.b16 %v259, %v258
  %v293 = vpack.c.b16 %v261, %v260
  %326 = vmatprep.subr.bf16.mxu0 0
  %327 = vmatpush1.bf16.msra.mxu0 %v262
  %328 = vmatprep.subr.bf16.mxu0 0
  %329 = vmatpush1.bf16.msra.mxu0 %v263
  %330 = vmatprep.subr.bf16.mxu0 0
  %331 = vmatpush1.bf16.msra.mxu0 %v264
  %332 = vmatprep.subr.bf16.mxu0 0
  %333 = vmatpush1.bf16.msra.mxu0 %v265
  %334 = vmatprep.subr.bf16.mxu0 0
  %335 = vmatpush1.bf16.msra.mxu0 %v266
  %336 = vmatprep.subr.bf16.mxu0 0
  %337 = vmatpush1.bf16.msra.mxu0 %v267
  %338 = vmatprep.subr.bf16.mxu0 0
  %339 = vmatpush1.bf16.msra.mxu0 %v268
  %340 = vmatprep.subr.bf16.mxu0 0
  %341 = vmatpush1.bf16.msra.mxu0 %v269
  %342 = vmatprep.subr.bf16.mxu0 0
  %343 = vmatpush1.bf16.msra.mxu0 %v270
  %344 = vmatprep.subr.bf16.mxu0 0
  %345 = vmatpush1.bf16.msra.mxu0 %v271
  %346 = vmatprep.subr.bf16.mxu0 0
  %347 = vmatpush1.bf16.msra.mxu0 %v272
  %348 = vmatprep.subr.bf16.mxu0 0
  %349 = vmatpush1.bf16.msra.mxu0 %v273
  %350 = vmatprep.subr.bf16.mxu0 0
  %351 = vmatpush1.bf16.msra.mxu0 %v274
  %352 = vmatprep.subr.bf16.mxu0 0
  %353 = vmatpush1.bf16.msra.mxu0 %v275
  %354 = vmatprep.subr.bf16.mxu0 0
  %355 = vmatpush1.bf16.msra.mxu0 %v276
  %356 = vmatprep.subr.bf16.mxu0 0
  %357 = vmatpush1.bf16.msra.mxu0 %v277
  %358 = vmatprep.mubr.bf16.mxu0 %v119
  %359 = vmatmul.mubr.bf16.gmra.mrb[0].mxu0 %v118
  %v360 = vpop.f32.mrb[0].mxu0
  %v361 = vadd.f32 %v92, %v360
  %v362 = vpop.f32.mrb[0].mxu0
  %v363 = vpop.f32.mrb[0].mxu0
  %v364 = vadd.f32 %v92, %v363
  %v365 = vpop.f32.mrb[0].mxu0
  %366 = vmatprep.mubr.bf16.mxu0 %v123
  %367 = vmatmul.mubr.bf16.gmra.mrb[0].mxu0 %v122
  %v368 = vpop.f32.mrb[0].mxu0
  %v369 = vadd.f32 %v92, %v368
  %v370 = vpop.f32.mrb[0].mxu0
  %v371 = vpop.f32.mrb[0].mxu0
  %v372 = vadd.f32 %v92, %v371
  %v373 = vpop.f32.mrb[0].mxu0
  %374 = vdwg.mxu0
  %375 = vmatprep.subr.bf16.mxu0 0
  %376 = vmatpush1.bf16.msra.mxu0 %v278
  %377 = vmatprep.subr.bf16.mxu0 0
  %378 = vmatpush1.bf16.msra.mxu0 %v279
  %379 = vmatprep.subr.bf16.mxu0 0
  %380 = vmatpush1.bf16.msra.mxu0 %v280
  %381 = vmatprep.subr.bf16.mxu0 0
  %382 = vmatpush1.bf16.msra.mxu0 %v281
  %383 = vmatprep.subr.bf16.mxu0 0
  %384 = vmatpush1.bf16.msra.mxu0 %v282
  %385 = vmatprep.subr.bf16.mxu0 0
  %386 = vmatpush1.bf16.msra.mxu0 %v283
  %387 = vmatprep.subr.bf16.mxu0 0
  %388 = vmatpush1.bf16.msra.mxu0 %v284
  %389 = vmatprep.subr.bf16.mxu0 0
  %390 = vmatpush1.bf16.msra.mxu0 %v285
  %391 = vmatprep.subr.bf16.mxu0 0
  %392 = vmatpush1.bf16.msra.mxu0 %v286
  %393 = vmatprep.subr.bf16.mxu0 0
  %394 = vmatpush1.bf16.msra.mxu0 %v287
  %395 = vmatprep.subr.bf16.mxu0 0
  %396 = vmatpush1.bf16.msra.mxu0 %v288
  %397 = vmatprep.subr.bf16.mxu0 0
  %398 = vmatpush1.bf16.msra.mxu0 %v289
  %399 = vmatprep.subr.bf16.mxu0 0
  %400 = vmatpush1.bf16.msra.mxu0 %v290
  %401 = vmatprep.subr.bf16.mxu0 0
  %402 = vmatpush1.bf16.msra.mxu0 %v291
  %403 = vmatprep.subr.bf16.mxu0 0
  %404 = vmatpush1.bf16.msra.mxu0 %v292
  %405 = vmatprep.subr.bf16.mxu0 0
  %406 = vmatpush1.bf16.msra.mxu0 %v293
  %407 = vmatprep.mubr.bf16.mxu0 %v121
  %408 = vmatmul.mubr.bf16.gmra.mrb[0].mxu0 %v120
  %v409 = vpop.f32.mrb[0].mxu0
  %v410 = vadd.f32 %v361, %v409
  %v411 = vpop.f32.mrb[0].mxu0
  %v412 = vpop.f32.mrb[0].mxu0
  %v413 = vadd.f32 %v364, %v412
  %v414 = vpop.f32.mrb[0].mxu0
  %415 = vmatprep.mubr.bf16.mxu0 %v125
  %416 = vmatmul.mubr.bf16.gmra.mrb[0].mxu0 %v124
  %v417 = vpop.f32.mrb[0].mxu0
  %v418 = vadd.f32 %v369, %v417
  %v419 = vpop.f32.mrb[0].mxu0
  %v420 = vpop.f32.mrb[0].mxu0
  %v421 = vadd.f32 %v372, %v420
  %v422 = vpop.f32.mrb[0].mxu0
  %423 = vdwg.mxu0
  %v424 = vmax.f32 %v410, 0.0
  %v425 = vmax.f32 %v413, 0.0
  %v426 = vmax.f32 %v418, 0.0
  %v427 = vmax.f32 %v421, 0.0
  %v428 = vpack.c.bf16 %v425, %v424
  %v429 = vpack.c.bf16 %v427, %v426
  %v432 = vunpack.c.l.b16 %v428
  %v433 = vunpack.c.h.b16 %v428
  %v434 = vunpack.c.l.b16 %v429
  %v435 = vunpack.c.h.b16 %v429
  %v436 = vpack.c.b16 %v432, %v432
  %v437 = vpack.c.b16 %v433, %v433
  %v438 = vpack.c.b16 %v434, %v434
  %v439 = vpack.c.b16 %v435, %v435
  %444 = vst [vmem:[%s3] sm:$0xf] %v436
  %445 = vst [vmem:[%s3 + $0x4] sm:$0xf] %v437
  %446 = vst [vmem:[%s3 + $0x8] sm:$0xf] %v438
  %447 = vst [vmem:[%s3 + $0xc] sm:$0xf] %v439
  // Predicated region
  $region14: #{discrete_vae_forward.16} parent=0 // pred_check
    _
  $region15: #{discrete_vae_forward.16} parent=0 // pred_check_branch
    %449 = sbr.rel (0) target = $region17
  $region16: #{discrete_vae_forward.16} parent=0 // pred_region
    _
  $region17: #{discrete_vae_forward.16} parent=0 // pred_fallthru
    _
  // Predicated region
  $region18: #{discrete_vae_forward.16} parent=0 // pred_check
    _
  $region19: #{discrete_vae_forward.16} parent=0 // pred_check_branch
    %451 = sbr.rel (0) target = $region21
  $region20: #{discrete_vae_forward.16} parent=0 // pred_region
    _
  $region21: #{discrete_vae_forward.16} parent=0 // pred_fallthru
    _

// kernel: discrete_vae_forward.17
$region0: #{discrete_vae_forward.17}
  #allocation0 [shape = 'u32[]', space=smem, size = 0x4, offset = 0x4, fixed_abs, tag = 'smem constant byte address 0x4 - core index']
  #allocation1 [shape = 'u32[144,128]{1,0:T(1,128)}', space=vmem, size = 0x12000, scoped, tag = 'internal scratch']
  %s0 = inlined_call_operand.vmem [shape: bf16[32,288], index: 0, kind: input, shape index: {}]
  %s1 = inlined_call_operand.vmem [shape: bf16[288,128], index: 1, kind: input, shape index: {}]
  %s2 = inlined_call_operand.vmem [shape: f32[1,128], index: 2, kind: input, shape index: {}]
  %s3 = inlined_call_operand.vmem [shape: bf16[32,128], index: 3, kind: output, shape index: {}]
  %s4 = sld [smem:[#allocation0]]
  $region22: #{discrete_vae_forward.17} parent=0
    _
  %s6 = ssub.s32 1, %s4
  %s7 = scalar_select 0, %s6, %s4
  // Predicated region
  $region2: #{discrete_vae_forward.17} parent=0 // pred_check
    _
  $region3: #{discrete_vae_forward.17} parent=0 // pred_check_branch
    %9 = sbr.rel (0) target = $region5
  $region4: #{discrete_vae_forward.17} parent=0 // pred_region
    _
  $region5: #{discrete_vae_forward.17} parent=0 // pred_fallthru
    _
  // Predicated region
  $region6: #{discrete_vae_forward.17} parent=0 // pred_check
    _
  $region7: #{discrete_vae_forward.17} parent=0 // pred_check_branch
    %11 = sbr.rel (0) target = $region9
  $region8: #{discrete_vae_forward.17} parent=0 // pred_region
    _
  $region9: #{discrete_vae_forward.17} parent=0 // pred_fallthru
    _
  // Predicated region
  $region10: #{discrete_vae_forward.17} parent=0 // pred_check
    _
  $region11: #{discrete_vae_forward.17} parent=0 // pred_check_branch
    %13 = sbr.rel (0) target = $region13
  $region12: #{discrete_vae_forward.17} parent=0 // pred_region
    _
  $region13: #{discrete_vae_forward.17} parent=0 // pred_fallthru
    _
  %v15 = vld [vmem:[%s0] sm:$0xff]
  %v16 = vld [vmem:[%s0 + $0x8] sm:$0xf]
  %v17 = vld [vmem:[%s0 + $0xc] sm:$0xff]
  %v18 = vld [vmem:[%s0 + $0x14] sm:$0xf]
  %v19 = vld [vmem:[%s0 + $0x18] sm:$0xff]
  %v20 = vld [vmem:[%s0 + $0x20] sm:$0xf]
  %v21 = vld [vmem:[%s0 + $0x24] sm:$0xff]
  %v22 = vld [vmem:[%s0 + $0x2c] sm:$0xf]
  %v23 = vld [vmem:[%s1] sm:$0xf]
  %v24 = vld [vmem:[%s1 + $0x4] sm:$0xf]
  %v25 = vld [vmem:[%s1 + $0x8] sm:$0xf]
  %v26 = vld [vmem:[%s1 + $0xc] sm:$0xf]
  %v27 = vld [vmem:[%s1 + $0x10] sm:$0xf]
  %v28 = vld [vmem:[%s1 + $0x14] sm:$0xf]
  %v29 = vld [vmem:[%s1 + $0x18] sm:$0xf]
  %v30 = vld [vmem:[%s1 + $0x1c] sm:$0xf]
  %v31 = vld [vmem:[%s1 + $0x20] sm:$0xf]
  %v32 = vld [vmem:[%s1 + $0x24] sm:$0xf]
  %v33 = vld [vmem:[%s1 + $0x28] sm:$0xf]
  %v34 = vld [vmem:[%s1 + $0x2c] sm:$0xf]
  %v35 = vld [vmem:[%s1 + $0x30] sm:$0xf]
  %v36 = vld [vmem:[%s1 + $0x34] sm:$0xf]
  %v37 = vld [vmem:[%s1 + $0x38] sm:$0xf]
  %v38 = vld [vmem:[%s1 + $0x3c] sm:$0xf]
  %v39 = vld [vmem:[%s1 + $0x40] sm:$0xf]
  %v40 = vld [vmem:[%s1 + $0x44] sm:$0xf]
  %v41 = vld [vmem:[%s1 + $0x48] sm:$0xf]
  %v42 = vld [vmem:[%s1 + $0x4c] sm:$0xf]
  %v43 = vld [vmem:[%s1 + $0x50] sm:$0xf]
  %v44 = vld [vmem:[%s1 + $0x54] sm:$0xf]
  %v45 = vld [vmem:[%s1 + $0x58] sm:$0xf]
  %v46 = vld [vmem:[%s1 + $0x5c] sm:$0xf]
  %v47 = vld [vmem:[%s1 + $0x60] sm:$0xf]
  %v48 = vld [vmem:[%s1 + $0x64] sm:$0xf]
  %v49 = vld [vmem:[%s1 + $0x68] sm:$0xf]
  %v50 = vld [vmem:[%s1 + $0x6c] sm:$0xf]
  %v51 = vld [vmem:[%s1 + $0x70] sm:$0xf]
  %v52 = vld [vmem:[%s1 + $0x74] sm:$0xf]
  %v53 = vld [vmem:[%s1 + $0x78] sm:$0xf]
  %v54 = vld [vmem:[%s1 + $0x7c] sm:$0xf]
  %v55 = vld [vmem:[%s1 + $0x80] sm:$0xf]
  %v56 = vld [vmem:[%s1 + $0x84] sm:$0xf]
  %v57 = vld [vmem:[%s1 + $0x88] sm:$0xf]
  %v58 = vld [vmem:[%s1 + $0x8c] sm:$0xf]
  %v59 = vld [vmem:[%s2] sm:$0x1]
  %v61 = vlaneseq
  %v62 = vshrl.u32 %v61, 7
  %v63 = vsub.s32 0, %v62
  %v64 = vrot.slane %v59, %v63
  %v74 = vunpack.c.l.b16 %v15
  %v75 = vunpack.c.h.b16 %v15
  %v76 = vunpack.c.l.b16 %v16
  %v77 = vunpack.c.l.b16 %v17
  %v78 = vunpack.c.h.b16 %v17
  %v79 = vunpack.c.l.b16 %v18
  %v80 = vunpack.c.l.b16 %v19
  %v81 = vunpack.c.h.b16 %v19
  %v82 = vunpack.c.l.b16 %v20
  %v83 = vunpack.c.l.b16 %v21
  %v84 = vunpack.c.h.b16 %v21
  %v85 = vunpack.c.l.b16 %v22
  %v86 = vpack.c.b16 %v77, %v74
  %v87 = vpack.c.b16 %v78, %v75
  %v88 = vpack.c.b16 %v79, %v76
  %v89 = vpack.c.b16 %v83, %v80
  %v90 = vpack.c.b16 %v84, %v81
  %v91 = vpack.c.b16 %v85, %v82
  %v132 = vunpack.c.l.b16 %v23
  %v133 = vunpack.c.l.b16 %v24
  %v134 = vunpack.c.l.b16 %v25
  %v135 = vunpack.c.l.b16 %v26
  %v136 = vunpack.c.l.b16 %v27
  %v137 = vunpack.c.l.b16 %v28
  %v138 = vunpack.c.l.b16 %v29
  %v139 = vunpack.c.l.b16 %v30
  %v140 = vunpack.c.l.b16 %v31
  %v141 = vunpack.c.l.b16 %v32
  %v142 = vunpack.c.l.b16 %v33
  %v143 = vunpack.c.l.b16 %v34
  %v144 = vunpack.c.l.b16 %v35
  %v145 = vunpack.c.l.b16 %v36
  %v146 = vunpack.c.l.b16 %v37
  %v147 = vunpack.c.l.b16 %v38
  %v148 = vunpack.c.l.b16 %v39
  %v149 = vunpack.c.l.b16 %v40
  %v150 = vunpack.c.l.b16 %v41
  %v151 = vunpack.c.l.b16 %v42
  %v152 = vunpack.c.l.b16 %v43
  %v153 = vunpack.c.l.b16 %v44
  %v154 = vunpack.c.l.b16 %v45
  %v155 = vunpack.c.l.b16 %v46
  %v156 = vunpack.c.l.b16 %v47
  %v157 = vunpack.c.l.b16 %v48
  %v158 = vunpack.c.l.b16 %v49
  %v159 = vunpack.c.l.b16 %v50
  %v160 = vunpack.c.l.b16 %v51
  %v161 = vunpack.c.l.b16 %v52
  %v162 = vunpack.c.l.b16 %v53
  %v163 = vunpack.c.l.b16 %v54
  %v164 = vunpack.c.l.b16 %v55
  %v165 = vunpack.c.l.b16 %v56
  %v166 = vunpack.c.l.b16 %v57
  %v167 = vunpack.c.l.b16 %v58
  %v168 = vpack.c.b16 %v133, %v132
  %v169 = vpack.c.b16 %v135, %v134
  %v170 = vpack.c.b16 %v137, %v136
  %v171 = vpack.c.b16 %v139, %v138
  %v172 = vpack.c.b16 %v141, %v140
  %v173 = vpack.c.b16 %v143, %v142
  %v174 = vpack.c.b16 %v145, %v144
  %v175 = vpack.c.b16 %v147, %v146
  %v176 = vpack.c.b16 %v149, %v148
  %v177 = vpack.c.b16 %v151, %v150
  %v178 = vpack.c.b16 %v153, %v152
  %v179 = vpack.c.b16 %v155, %v154
  %v180 = vpack.c.b16 %v157, %v156
  %v181 = vpack.c.b16 %v159, %v158
  %v182 = vpack.c.b16 %v161, %v160
  %v183 = vpack.c.b16 %v163, %v162
  %v184 = vpack.c.b16 %v165, %v164
  %v185 = vpack.c.b16 %v167, %v166
  %vm204 = vcmask 261120
  %v206 = vsel %vm204, %v88, 0
  %v209 = vsel %vm204, %v91, 0
  %211 = vmatprep.subr.bf16.mxu0 0
  %212 = vmatpush1.bf16.msra.mxu0 %v168
  %213 = vmatprep.subr.bf16.mxu0 0
  %214 = vmatpush1.bf16.msra.mxu0 %v169
  %215 = vmatprep.subr.bf16.mxu0 0
  %216 = vmatpush1.bf16.msra.mxu0 %v170
  %217 = vmatprep.subr.bf16.mxu0 0
  %218 = vmatpush1.bf16.msra.mxu0 %v171
  %219 = vmatprep.subr.bf16.mxu0 0
  %220 = vmatpush1.bf16.msra.mxu0 %v172
  %221 = vmatprep.subr.bf16.mxu0 0
  %222 = vmatpush1.bf16.msra.mxu0 %v173
  %223 = vmatprep.subr.bf16.mxu0 0
  %224 = vmatpush1.bf16.msra.mxu0 %v174
  %225 = vmatprep.subr.bf16.mxu0 0
  %226 = vmatpush1.bf16.msra.mxu0 %v175
  %227 = vmatprep.subr.bf16.mxu0 0
  %228 = vmatpush1.bf16.msra.mxu0 %v176
  %229 = vmatprep.subr.bf16.mxu0 0
  %230 = vmatpush1.bf16.msra.mxu0 %v177
  %231 = vmatprep.subr.bf16.mxu0 0
  %232 = vmatpush1.bf16.msra.mxu0 %v178
  %233 = vmatprep.subr.bf16.mxu0 0
  %234 = vmatpush1.bf16.msra.mxu0 %v179
  %235 = vmatprep.subr.bf16.mxu0 0
  %236 = vmatpush1.bf16.msra.mxu0 %v180
  %237 = vmatprep.subr.bf16.mxu0 0
  %238 = vmatpush1.bf16.msra.mxu0 %v181
  %239 = vmatprep.subr.bf16.mxu0 0
  %240 = vmatpush1.bf16.msra.mxu0 %v182
  %241 = vmatprep.subr.bf16.mxu0 0
  %242 = vmatpush1.bf16.msra.mxu0 %v183
  %243 = vmatprep.mubr.bf16.mxu0 %v87
  %244 = vmatmul.mubr.bf16.gmra.mrb[0].mxu0 %v86
  %v245 = vpop.f32.mrb[0].mxu0
  %v246 = vadd.f32 %v64, %v245
  %v247 = vpop.f32.mrb[0].mxu0
  %v248 = vpop.f32.mrb[0].mxu0
  %v249 = vadd.f32 %v64, %v248
  %v250 = vpop.f32.mrb[0].mxu0
  %251 = vmatprep.mubr.bf16.mxu0 %v90
  %252 = vmatmul.mubr.bf16.gmra.mrb[0].mxu0 %v89
  %v253 = vpop.f32.mrb[0].mxu0
  %v254 = vadd.f32 %v64, %v253
  %v255 = vpop.f32.mrb[0].mxu0
  %v256 = vpop.f32.mrb[0].mxu0
  %v257 = vadd.f32 %v64, %v256
  %v258 = vpop.f32.mrb[0].mxu0
  %259 = vdwg.mxu0
  %260 = vmatprep.subr.bf16.mxu0 0
  %261 = vmatpush1.bf16.msra.mxu0 %v184
  %262 = vmatprep.subr.bf16.mxu0 0
  %263 = vmatpush1.bf16.msra.mxu0 %v185
  %264 = vmatprep.subr.bf16.mxu0 0
  %265 = vmatpush1.bf16.msra.mxu0 0
  %266 = vmatprep.subr.bf16.mxu0 0
  %267 = vmatpush1.bf16.msra.mxu0 0
  %268 = vmatprep.subr.bf16.mxu0 0
  %269 = vmatpush1.bf16.msra.mxu0 0
  %270 = vmatprep.subr.bf16.mxu0 0
  %271 = vmatpush1.bf16.msra.mxu0 0
  %272 = vmatprep.subr.bf16.mxu0 0
  %273 = vmatpush1.bf16.msra.mxu0 0
  %274 = vmatprep.subr.bf16.mxu0 0
  %275 = vmatpush1.bf16.msra.mxu0 0
  %276 = vmatprep.subr.bf16.mxu0 0
  %277 = vmatpush1.bf16.msra.mxu0 0
  %278 = vmatprep.subr.bf16.mxu0 0
  %279 = vmatpush1.bf16.msra.mxu0 0
  %280 = vmatprep.subr.bf16.mxu0 0
  %281 = vmatpush1.bf16.msra.mxu0 0
  %282 = vmatprep.subr.bf16.mxu0 0
  %283 = vmatpush1.bf16.msra.mxu0 0
  %284 = vmatprep.subr.bf16.mxu0 0
  %285 = vmatpush1.bf16.msra.mxu0 0
  %286 = vmatprep.subr.bf16.mxu0 0
  %287 = vmatpush1.bf16.msra.mxu0 0
  %288 = vmatprep.subr.bf16.mxu0 0
  %289 = vmatpush1.bf16.msra.mxu0 0
  %290 = vmatprep.subr.bf16.mxu0 0
  %291 = vmatpush1.bf16.msra.mxu0 0
  %292 = vmatprep.mubr.bf16.mxu0 0
  %293 = vmatmul.mubr.bf16.gmra.mrb[0].mxu0 %v206
  %v294 = vpop.f32.mrb[0].mxu0
  %v295 = vadd.f32 %v246, %v294
  %v296 = vpop.f32.mrb[0].mxu0
  %v297 = vpop.f32.mrb[0].mxu0
  %v298 = vadd.f32 %v249, %v297
  %v299 = vpop.f32.mrb[0].mxu0
  %300 = vmatprep.mubr.bf16.mxu0 0
  %301 = vmatmul.mubr.bf16.gmra.mrb[0].mxu0 %v209
  %v302 = vpop.f32.mrb[0].mxu0
  %v303 = vadd.f32 %v254, %v302
  %v304 = vpop.f32.mrb[0].mxu0
  %v305 = vpop.f32.mrb[0].mxu0
  %v306 = vadd.f32 %v257, %v305
  %v307 = vpop.f32.mrb[0].mxu0
  %308 = vdwg.mxu0
  %v309 = vmax.f32 %v295, 0.0
  %v310 = vmax.f32 %v298, 0.0
  %v311 = vmax.f32 %v303, 0.0
  %v312 = vmax.f32 %v306, 0.0
  %v313 = vpack.c.bf16 %v310, %v309
  %v314 = vpack.c.bf16 %v312, %v311
  %v317 = vunpack.c.l.b16 %v313
  %v318 = vunpack.c.h.b16 %v313
  %v319 = vunpack.c.l.b16 %v314
  %v320 = vunpack.c.h.b16 %v314
  %v321 = vpack.c.b16 %v317, %v317
  %v322 = vpack.c.b16 %v318, %v318
  %v323 = vpack.c.b16 %v319, %v319
  %v324 = vpack.c.b16 %v320, %v320
  %329 = vst [vmem:[%s3] sm:$0xf] %v321
  %330 = vst [vmem:[%s3 + $0x4] sm:$0xf] %v322
  %331 = vst [vmem:[%s3 + $0x8] sm:$0xf] %v323
  %332 = vst [vmem:[%s3 + $0xc] sm:$0xf] %v324
  // Predicated region
  $region14: #{discrete_vae_forward.17} parent=0 // pred_check
    _
  $region15: #{discrete_vae_forward.17} parent=0 // pred_check_branch
    %334 = sbr.rel (0) target = $region17
  $region16: #{discrete_vae_forward.17} parent=0 // pred_region
    _
  $region17: #{discrete_vae_forward.17} parent=0 // pred_fallthru
    _
  // Predicated region
  $region18: #{discrete_vae_forward.17} parent=0 // pred_check
    _
  $region19: #{discrete_vae_forward.17} parent=0 // pred_check_branch
    %336 = sbr.rel (0) target = $region21
  $region20: #{discrete_vae_forward.17} parent=0 // pred_region
    _
  $region21: #{discrete_vae_forward.17} parent=0 // pred_fallthru
    _

// kernel: discrete_vae_forward.19
$region0: #{discrete_vae_forward.19}
  #allocation0 [shape = 'u32[]', space=smem, size = 0x4, offset = 0x4, fixed_abs, tag = 'smem constant byte address 0x4 - core index']
  #allocation1 [shape = 'u32[144,128]{1,0:T(1,128)}', space=vmem, size = 0x12000, scoped, tag = 'internal scratch']
  %s0 = inlined_call_operand.vmem [shape: bf16[32,32], index: 0, kind: input, shape index: {}]
  %s1 = inlined_call_operand.vmem [shape: bf16[32,128], index: 1, kind: input, shape index: {}]
  %s2 = inlined_call_operand.vmem [shape: f32[1,128], index: 2, kind: input, shape index: {}]
  %s3 = inlined_call_operand.vmem [shape: bf16[32,128], index: 3, kind: input, shape index: {}]
  %s4 = inlined_call_operand.vmem [shape: bf16[32,128], index: 4, kind: output, shape index: {}]
  %s5 = sld [smem:[#allocation0]]
  $region26: #{discrete_vae_forward.19} parent=0
    _
  %s7 = ssub.s32 1, %s5
  %s8 = scalar_select 0, %s7, %s5
  // Predicated region
  $region2: #{discrete_vae_forward.19} parent=0 // pred_check
    _
  $region3: #{discrete_vae_forward.19} parent=0 // pred_check_branch
    %10 = sbr.rel (0) target = $region5
  $region4: #{discrete_vae_forward.19} parent=0 // pred_region
    _
  $region5: #{discrete_vae_forward.19} parent=0 // pred_fallthru
    _
  // Predicated region
  $region6: #{discrete_vae_forward.19} parent=0 // pred_check
    _
  $region7: #{discrete_vae_forward.19} parent=0 // pred_check_branch
    %12 = sbr.rel (0) target = $region9
  $region8: #{discrete_vae_forward.19} parent=0 // pred_region
    _
  $region9: #{discrete_vae_forward.19} parent=0 // pred_fallthru
    _
  // Predicated region
  $region10: #{discrete_vae_forward.19} parent=0 // pred_check
    _
  $region11: #{discrete_vae_forward.19} parent=0 // pred_check_branch
    %14 = sbr.rel (0) target = $region13
  $region12: #{discrete_vae_forward.19} parent=0 // pred_region
    _
  $region13: #{discrete_vae_forward.19} parent=0 // pred_fallthru
    _
  // Predicated region
  $region14: #{discrete_vae_forward.19} parent=0 // pred_check
    _
  $region15: #{discrete_vae_forward.19} parent=0 // pred_check_branch
    %16 = sbr.rel (0) target = $region17
  $region16: #{discrete_vae_forward.19} parent=0 // pred_region
    _
  $region17: #{discrete_vae_forward.19} parent=0 // pred_fallthru
    _
  %v18 = vld [vmem:[%s0] sm:$0xf]
  %v19 = vld [vmem:[%s0 + $0x4] sm:$0xf]
  %v20 = vld [vmem:[%s0 + $0x8] sm:$0xf]
  %v21 = vld [vmem:[%s0 + $0xc] sm:$0xf]
  %v22 = vld [vmem:[%s1] sm:$0xf]
  %v23 = vld [vmem:[%s1 + $0x4] sm:$0xf]
  %v24 = vld [vmem:[%s1 + $0x8] sm:$0xf]
  %v25 = vld [vmem:[%s1 + $0xc] sm:$0xf]
  %v26 = vld [vmem:[%s2] sm:$0x1]
  %v28 = vlaneseq
  %v29 = vshrl.u32 %v28, 7
  %v30 = vsub.s32 0, %v29
  %v31 = vrot.slane %v26, %v30
  %v37 = vunpack.c.l.b16 %v18
  %v38 = vunpack.c.l.b16 %v19
  %v39 = vunpack.c.l.b16 %v20
  %v40 = vunpack.c.l.b16 %v21
  %v41 = vpack.c.b16 %v38, %v37
  %v42 = vpack.c.b16 %v40, %v39
  %v47 = vunpack.c.l.b16 %v22
  %v48 = vunpack.c.l.b16 %v23
  %v49 = vunpack.c.l.b16 %v24
  %v50 = vunpack.c.l.b16 %v25
  %v51 = vpack.c.b16 %v48, %v47
  %v52 = vpack.c.b16 %v50, %v49
  %vm55 = vcmask 261120
  %v57 = vsel %vm55, %v41, 0
  %v60 = vsel %vm55, %v42, 0
  %62 = vmatprep.subr.bf16.mxu0 0
  %63 = vmatpush1.bf16.msra.mxu0 %v51
  %64 = vmatprep.subr.bf16.mxu0 0
  %65 = vmatpush1.bf16.msra.mxu0 %v52
  %66 = vmatprep.subr.bf16.mxu0 0
  %67 = vmatpush1.bf16.msra.mxu0 0
  %68 = vmatprep.subr.bf16.mxu0 0
  %69 = vmatpush1.bf16.msra.mxu0 0
  %70 = vmatprep.subr.bf16.mxu0 0
  %71 = vmatpush1.bf16.msra.mxu0 0
  %72 = vmatprep.subr.bf16.mxu0 0
  %73 = vmatpush1.bf16.msra.mxu0 0
  %74 = vmatprep.subr.bf16.mxu0 0
  %75 = vmatpush1.bf16.msra.mxu0 0
  %76 = vmatprep.subr.bf16.mxu0 0
  %77 = vmatpush1.bf16.msra.mxu0 0
  %78 = vmatprep.subr.bf16.mxu0 0
  %79 = vmatpush1.bf16.msra.mxu0 0
  %80 = vmatprep.subr.bf16.mxu0 0
  %81 = vmatpush1.bf16.msra.mxu0 0
  %82 = vmatprep.subr.bf16.mxu0 0
  %83 = vmatpush1.bf16.msra.mxu0 0
  %84 = vmatprep.subr.bf16.mxu0 0
  %85 = vmatpush1.bf16.msra.mxu0 0
  %86 = vmatprep.subr.bf16.mxu0 0
  %87 = vmatpush1.bf16.msra.mxu0 0
  %88 = vmatprep.subr.bf16.mxu0 0
  %89 = vmatpush1.bf16.msra.mxu0 0
  %90 = vmatprep.subr.bf16.mxu0 0
  %91 = vmatpush1.bf16.msra.mxu0 0
  %92 = vmatprep.subr.bf16.mxu0 0
  %93 = vmatpush1.bf16.msra.mxu0 0
  %94 = vmatprep.mubr.bf16.mxu0 0
  %95 = vmatmul.mubr.bf16.gmra.mrb[0].mxu0 %v57
  %v96 = vpop.f32.mrb[0].mxu0
  %v97 = vadd.f32 %v31, %v96
  %v98 = vpop.f32.mrb[0].mxu0
  %v99 = vpop.f32.mrb[0].mxu0
  %v100 = vadd.f32 %v31, %v99
  %v101 = vpop.f32.mrb[0].mxu0
  %102 = vmatprep.mubr.bf16.mxu0 0
  %103 = vmatmul.mubr.bf16.gmra.mrb[0].mxu0 %v60
  %v104 = vpop.f32.mrb[0].mxu0
  %v105 = vadd.f32 %v31, %v104
  %v106 = vpop.f32.mrb[0].mxu0
  %v107 = vpop.f32.mrb[0].mxu0
  %v108 = vadd.f32 %v31, %v107
  %v109 = vpop.f32.mrb[0].mxu0
  %110 = vdwg.mxu0
  %v111 = vld [vmem:[%s3] sm:$0xf]
  %v112 = vld [vmem:[%s3 + $0x4] sm:$0xf]
  %v113 = vld [vmem:[%s3 + $0x8] sm:$0xf]
  %v114 = vld [vmem:[%s3 + $0xc] sm:$0xf]
  %v115 = vunpack.c.l.bf16 %v111
  %v116 = vunpack.c.l.bf16 %v112
  %v117 = vunpack.c.l.bf16 %v113
  %v118 = vunpack.c.l.bf16 %v114
  %v119 = vadd.f32 %v97, %v115
  %v120 = vadd.f32 %v100, %v116
  %v121 = vadd.f32 %v105, %v117
  %v122 = vadd.f32 %v108, %v118
  %v123 = vpack.c.bf16 %v120, %v119
  %v124 = vpack.c.bf16 %v122, %v121
  %v127 = vunpack.c.l.b16 %v123
  %v128 = vunpack.c.h.b16 %v123
  %v129 = vunpack.c.l.b16 %v124
  %v130 = vunpack.c.h.b16 %v124
  %v131 = vpack.c.b16 %v127, %v127
  %v132 = vpack.c.b16 %v128, %v128
  %v133 = vpack.c.b16 %v129, %v129
  %v134 = vpack.c.b16 %v130, %v130
  %139 = vst [vmem:[%s4] sm:$0xf] %v131
  %140 = vst [vmem:[%s4 + $0x4] sm:$0xf] %v132
  %141 = vst [vmem:[%s4 + $0x8] sm:$0xf] %v133
  %142 = vst [vmem:[%s4 + $0xc] sm:$0xf] %v134
  // Predicated region
  $region18: #{discrete_vae_forward.19} parent=0 // pred_check
    _
  $region19: #{discrete_vae_forward.19} parent=0 // pred_check_branch
    %144 = sbr.rel (0) target = $region21
  $region20: #{discrete_vae_forward.19} parent=0 // pred_region
    _
  $region21: #{discrete_vae_forward.19} parent=0 // pred_fallthru
    _
  // Predicated region
  $region22: #{discrete_vae_forward.19} parent=0 // pred_check
    _
  $region23: #{discrete_vae_forward.19} parent=0 // pred_check_branch
    %146 = sbr.rel (0) target = $region25
  $region24: #{discrete_vae_forward.19} parent=0 // pred_region
    _
  $region25: #{discrete_vae_forward.19} parent=0 // pred_fallthru
    _

// kernel: discrete_vae_forward.20
$region0: #{discrete_vae_forward.20}
  #allocation0 [shape = 'u32[]', space=smem, size = 0x4, offset = 0x4, fixed_abs, tag = 'smem constant byte address 0x4 - core index']
  #allocation1 [shape = 'u32[144,128]{1,0:T(1,128)}', space=vmem, size = 0x12000, scoped, tag = 'internal scratch']
  %s0 = inlined_call_operand.vmem [shape: bf16[32,32], index: 0, kind: input, shape index: {}]
  %s1 = inlined_call_operand.vmem [shape: bf16[32,128], index: 1, kind: input, shape index: {}]
  %s2 = inlined_call_operand.vmem [shape: f32[1,128], index: 2, kind: input, shape index: {}]
  %s3 = inlined_call_operand.vmem [shape: f32[32,128], index: 3, kind: output, shape index: {}]
  %s4 = sld [smem:[#allocation0]]
  $region22: #{discrete_vae_forward.20} parent=0
    _
  %s6 = ssub.s32 1, %s4
  %s7 = scalar_select 0, %s6, %s4
  // Predicated region
  $region2: #{discrete_vae_forward.20} parent=0 // pred_check
    _
  $region3: #{discrete_vae_forward.20} parent=0 // pred_check_branch
    %9 = sbr.rel (0) target = $region5
  $region4: #{discrete_vae_forward.20} parent=0 // pred_region
    _
  $region5: #{discrete_vae_forward.20} parent=0 // pred_fallthru
    _
  // Predicated region
  $region6: #{discrete_vae_forward.20} parent=0 // pred_check
    _
  $region7: #{discrete_vae_forward.20} parent=0 // pred_check_branch
    %11 = sbr.rel (0) target = $region9
  $region8: #{discrete_vae_forward.20} parent=0 // pred_region
    _
  $region9: #{discrete_vae_forward.20} parent=0 // pred_fallthru
    _
  // Predicated region
  $region10: #{discrete_vae_forward.20} parent=0 // pred_check
    _
  $region11: #{discrete_vae_forward.20} parent=0 // pred_check_branch
    %13 = sbr.rel (0) target = $region13
  $region12: #{discrete_vae_forward.20} parent=0 // pred_region
    _
  $region13: #{discrete_vae_forward.20} parent=0 // pred_fallthru
    _
  %v15 = vld [vmem:[%s0] sm:$0xf]
  %v16 = vld [vmem:[%s0 + $0x4] sm:$0xf]
  %v17 = vld [vmem:[%s0 + $0x8] sm:$0xf]
  %v18 = vld [vmem:[%s0 + $0xc] sm:$0xf]
  %v19 = vld [vmem:[%s1] sm:$0xf]
  %v20 = vld [vmem:[%s1 + $0x4] sm:$0xf]
  %v21 = vld [vmem:[%s1 + $0x8] sm:$0xf]
  %v22 = vld [vmem:[%s1 + $0xc] sm:$0xf]
  %v23 = vld [vmem:[%s2] sm:$0x1]
  %v25 = vlaneseq
  %v26 = vshrl.u32 %v25, 7
  %v27 = vsub.s32 0, %v26
  %v28 = vrot.slane %v23, %v27
  %v34 = vunpack.c.l.b16 %v15
  %v35 = vunpack.c.l.b16 %v16
  %v36 = vunpack.c.l.b16 %v17
  %v37 = vunpack.c.l.b16 %v18
  %v38 = vpack.c.b16 %v35, %v34
  %v39 = vpack.c.b16 %v37, %v36
  %v44 = vunpack.c.l.b16 %v19
  %v45 = vunpack.c.l.b16 %v20
  %v46 = vunpack.c.l.b16 %v21
  %v47 = vunpack.c.l.b16 %v22
  %v48 = vpack.c.b16 %v45, %v44
  %v49 = vpack.c.b16 %v47, %v46
  %vm52 = vcmask 261120
  %v54 = vsel %vm52, %v38, 0
  %v57 = vsel %vm52, %v39, 0
  %59 = vmatprep.subr.bf16.mxu0 0
  %60 = vmatpush1.bf16.msra.mxu0 %v48
  %61 = vmatprep.subr.bf16.mxu0 0
  %62 = vmatpush1.bf16.msra.mxu0 %v49
  %63 = vmatprep.subr.bf16.mxu0 0
  %64 = vmatpush1.bf16.msra.mxu0 0
  %65 = vmatprep.subr.bf16.mxu0 0
  %66 = vmatpush1.bf16.msra.mxu0 0
  %67 = vmatprep.subr.bf16.mxu0 0
  %68 = vmatpush1.bf16.msra.mxu0 0
  %69 = vmatprep.subr.bf16.mxu0 0
  %70 = vmatpush1.bf16.msra.mxu0 0
  %71 = vmatprep.subr.bf16.mxu0 0
  %72 = vmatpush1.bf16.msra.mxu0 0
  %73 = vmatprep.subr.bf16.mxu0 0
  %74 = vmatpush1.bf16.msra.mxu0 0
  %75 = vmatprep.subr.bf16.mxu0 0
  %76 = vmatpush1.bf16.msra.mxu0 0
  %77 = vmatprep.subr.bf16.mxu0 0
  %78 = vmatpush1.bf16.msra.mxu0 0
  %79 = vmatprep.subr.bf16.mxu0 0
  %80 = vmatpush1.bf16.msra.mxu0 0
  %81 = vmatprep.subr.bf16.mxu0 0
  %82 = vmatpush1.bf16.msra.mxu0 0
  %83 = vmatprep.subr.bf16.mxu0 0
  %84 = vmatpush1.bf16.msra.mxu0 0
  %85 = vmatprep.subr.bf16.mxu0 0
  %86 = vmatpush1.bf16.msra.mxu0 0
  %87 = vmatprep.subr.bf16.mxu0 0
  %88 = vmatpush1.bf16.msra.mxu0 0
  %89 = vmatprep.subr.bf16.mxu0 0
  %90 = vmatpush1.bf16.msra.mxu0 0
  %91 = vmatprep.mubr.bf16.mxu0 0
  %92 = vmatmul.mubr.bf16.gmra.mrb[0].mxu0 %v54
  %v93 = vpop.f32.mrb[0].mxu0
  %v94 = vadd.f32 %v28, %v93
  %v95 = vpop.f32.mrb[0].mxu0
  %v96 = vpop.f32.mrb[0].mxu0
  %v97 = vadd.f32 %v28, %v96
  %v98 = vpop.f32.mrb[0].mxu0
  %99 = vmatprep.mubr.bf16.mxu0 0
  %100 = vmatmul.mubr.bf16.gmra.mrb[0].mxu0 %v57
  %v101 = vpop.f32.mrb[0].mxu0
  %v102 = vadd.f32 %v28, %v101
  %v103 = vpop.f32.mrb[0].mxu0
  %v104 = vpop.f32.mrb[0].mxu0
  %v105 = vadd.f32 %v28, %v104
  %v106 = vpop.f32.mrb[0].mxu0
  %107 = vdwg.mxu0
  %108 = vst [vmem:[%s3] sm:$0xff] %v94
  %109 = vst [vmem:[%s3 + $0x8] sm:$0xff] %v97
  %110 = vst [vmem:[%s3 + $0x10] sm:$0xff] %v102
  %111 = vst [vmem:[%s3 + $0x18] sm:$0xff] %v105
  // Predicated region
  $region14: #{discrete_vae_forward.20} parent=0 // pred_check
    _
  $region15: #{discrete_vae_forward.20} parent=0 // pred_check_branch
    %113 = sbr.rel (0) target = $region17
  $region16: #{discrete_vae_forward.20} parent=0 // pred_region
    _
  $region17: #{discrete_vae_forward.20} parent=0 // pred_fallthru
    _
  // Predicated region
  $region18: #{discrete_vae_forward.20} parent=0 // pred_check
    _
  $region19: #{discrete_vae_forward.20} parent=0 // pred_check_branch
    %115 = sbr.rel (0) target = $region21
  $region20: #{discrete_vae_forward.20} parent=0 // pred_region
    _
  $region21: #{discrete_vae_forward.20} parent=0 // pred_fallthru
    _

// kernel: discrete_vae_forward.22
$region0: #{discrete_vae_forward.22}
  #allocation0 [shape = 'u32[]', space=smem, size = 0x4, offset = 0x4, fixed_abs, tag = 'smem constant byte address 0x4 - core index']
  #allocation1 [shape = 'u32[144,128]{1,0:T(1,128)}', space=vmem, size = 0x12000, scoped, tag = 'internal scratch']
  %s0 = inlined_call_operand.vmem [shape: bf16[32,32], index: 0, kind: input, shape index: {}]
  %s1 = inlined_call_operand.vmem [shape: bf16[32,128], index: 1, kind: input, shape index: {}]
  %s2 = inlined_call_operand.vmem [shape: f32[1,128], index: 2, kind: input, shape index: {}]
  %s3 = inlined_call_operand.vmem [shape: bf16[32,128], index: 3, kind: output, shape index: {}]
  %s4 = sld [smem:[#allocation0]]
  $region22: #{discrete_vae_forward.22} parent=0
    _
  %s6 = ssub.s32 1, %s4
  %s7 = scalar_select 0, %s6, %s4
  // Predicated region
  $region2: #{discrete_vae_forward.22} parent=0 // pred_check
    _
  $region3: #{discrete_vae_forward.22} parent=0 // pred_check_branch
    %9 = sbr.rel (0) target = $region5
  $region4: #{discrete_vae_forward.22} parent=0 // pred_region
    _
  $region5: #{discrete_vae_forward.22} parent=0 // pred_fallthru
    _
  // Predicated region
  $region6: #{discrete_vae_forward.22} parent=0 // pred_check
    _
  $region7: #{discrete_vae_forward.22} parent=0 // pred_check_branch
    %11 = sbr.rel (0) target = $region9
  $region8: #{discrete_vae_forward.22} parent=0 // pred_region
    _
  $region9: #{discrete_vae_forward.22} parent=0 // pred_fallthru
    _
  // Predicated region
  $region10: #{discrete_vae_forward.22} parent=0 // pred_check
    _
  $region11: #{discrete_vae_forward.22} parent=0 // pred_check_branch
    %13 = sbr.rel (0) target = $region13
  $region12: #{discrete_vae_forward.22} parent=0 // pred_region
    _
  $region13: #{discrete_vae_forward.22} parent=0 // pred_fallthru
    _
  %v15 = vld [vmem:[%s0] sm:$0xf]
  %v16 = vld [vmem:[%s0 + $0x4] sm:$0xf]
  %v17 = vld [vmem:[%s0 + $0x8] sm:$0xf]
  %v18 = vld [vmem:[%s0 + $0xc] sm:$0xf]
  %v19 = vld [vmem:[%s1] sm:$0xf]
  %v20 = vld [vmem:[%s1 + $0x4] sm:$0xf]
  %v21 = vld [vmem:[%s1 + $0x8] sm:$0xf]
  %v22 = vld [vmem:[%s1 + $0xc] sm:$0xf]
  %v23 = vld [vmem:[%s2] sm:$0x1]
  %v25 = vlaneseq
  %v26 = vshrl.u32 %v25, 7
  %v27 = vsub.s32 0, %v26
  %v28 = vrot.slane %v23, %v27
  %v34 = vunpack.c.l.b16 %v15
  %v35 = vunpack.c.l.b16 %v16
  %v36 = vunpack.c.l.b16 %v17
  %v37 = vunpack.c.l.b16 %v18
  %v38 = vpack.c.b16 %v35, %v34
  %v39 = vpack.c.b16 %v37, %v36
  %v44 = vunpack.c.l.b16 %v19
  %v45 = vunpack.c.l.b16 %v20
  %v46 = vunpack.c.l.b16 %v21
  %v47 = vunpack.c.l.b16 %v22
  %v48 = vpack.c.b16 %v45, %v44
  %v49 = vpack.c.b16 %v47, %v46
  %vm52 = vcmask 261120
  %v54 = vsel %vm52, %v38, 0
  %v57 = vsel %vm52, %v39, 0
  %59 = vmatprep.subr.bf16.mxu0 0
  %60 = vmatpush1.bf16.msra.mxu0 %v48
  %61 = vmatprep.subr.bf16.mxu0 0
  %62 = vmatpush1.bf16.msra.mxu0 %v49
  %63 = vmatprep.subr.bf16.mxu0 0
  %64 = vmatpush1.bf16.msra.mxu0 0
  %65 = vmatprep.subr.bf16.mxu0 0
  %66 = vmatpush1.bf16.msra.mxu0 0
  %67 = vmatprep.subr.bf16.mxu0 0
  %68 = vmatpush1.bf16.msra.mxu0 0
  %69 = vmatprep.subr.bf16.mxu0 0
  %70 = vmatpush1.bf16.msra.mxu0 0
  %71 = vmatprep.subr.bf16.mxu0 0
  %72 = vmatpush1.bf16.msra.mxu0 0
  %73 = vmatprep.subr.bf16.mxu0 0
  %74 = vmatpush1.bf16.msra.mxu0 0
  %75 = vmatprep.subr.bf16.mxu0 0
  %76 = vmatpush1.bf16.msra.mxu0 0
  %77 = vmatprep.subr.bf16.mxu0 0
  %78 = vmatpush1.bf16.msra.mxu0 0
  %79 = vmatprep.subr.bf16.mxu0 0
  %80 = vmatpush1.bf16.msra.mxu0 0
  %81 = vmatprep.subr.bf16.mxu0 0
  %82 = vmatpush1.bf16.msra.mxu0 0
  %83 = vmatprep.subr.bf16.mxu0 0
  %84 = vmatpush1.bf16.msra.mxu0 0
  %85 = vmatprep.subr.bf16.mxu0 0
  %86 = vmatpush1.bf16.msra.mxu0 0
  %87 = vmatprep.subr.bf16.mxu0 0
  %88 = vmatpush1.bf16.msra.mxu0 0
  %89 = vmatprep.subr.bf16.mxu0 0
  %90 = vmatpush1.bf16.msra.mxu0 0
  %91 = vmatprep.mubr.bf16.mxu0 0
  %92 = vmatmul.mubr.bf16.gmra.mrb[0].mxu0 %v54
  %v93 = vpop.f32.mrb[0].mxu0
  %v94 = vadd.f32 %v28, %v93
  %v95 = vpop.f32.mrb[0].mxu0
  %v96 = vpop.f32.mrb[0].mxu0
  %v97 = vadd.f32 %v28, %v96
  %v98 = vpop.f32.mrb[0].mxu0
  %99 = vmatprep.mubr.bf16.mxu0 0
  %100 = vmatmul.mubr.bf16.gmra.mrb[0].mxu0 %v57
  %v101 = vpop.f32.mrb[0].mxu0
  %v102 = vadd.f32 %v28, %v101
  %v103 = vpop.f32.mrb[0].mxu0
  %v104 = vpop.f32.mrb[0].mxu0
  %v105 = vadd.f32 %v28, %v104
  %v106 = vpop.f32.mrb[0].mxu0
  %107 = vdwg.mxu0
  %v108 = vpack.c.bf16 %v97, %v94
  %v109 = vpack.c.bf16 %v105, %v102
  %v112 = vunpack.c.l.b16 %v108
  %v113 = vunpack.c.h.b16 %v108
  %v114 = vunpack.c.l.b16 %v109
  %v115 = vunpack.c.h.b16 %v109
  %v116 = vpack.c.b16 %v112, %v112
  %v117 = vpack.c.b16 %v113, %v113
  %v118 = vpack.c.b16 %v114, %v114
  %v119 = vpack.c.b16 %v115, %v115
  %124 = vst [vmem:[%s3] sm:$0xf] %v116
  %125 = vst [vmem:[%s3 + $0x4] sm:$0xf] %v117
  %126 = vst [vmem:[%s3 + $0x8] sm:$0xf] %v118
  %127 = vst [vmem:[%s3 + $0xc] sm:$0xf] %v119
  // Predicated region
  $region14: #{discrete_vae_forward.22} parent=0 // pred_check
    _
  $region15: #{discrete_vae_forward.22} parent=0 // pred_check_branch
    %129 = sbr.rel (0) target = $region17
  $region16: #{discrete_vae_forward.22} parent=0 // pred_region
    _
  $region17: #{discrete_vae_forward.22} parent=0 // pred_fallthru
    _
  // Predicated region
  $region18: #{discrete_vae_forward.22} parent=0 // pred_check
    _
  $region19: #{discrete_vae_forward.22} parent=0 // pred_check_branch
    %131 = sbr.rel (0) target = $region21
  $region20: #{discrete_vae_forward.22} parent=0 // pred_region
    _
  $region21: #{discrete_vae_forward.22} parent=0 // pred_fallthru
    _

// kernel: discrete_vae_forward.21
$region0: #{discrete_vae_forward.21}
  #allocation0 [shape = 'u32[]', space=smem, size = 0x4, offset = 0x4, fixed_abs, tag = 'smem constant byte address 0x4 - core index']
  #allocation1 [shape = 'u32[144,128]{1,0:T(1,128)}', space=vmem, size = 0x12000, scoped, tag = 'internal scratch']
  %s0 = inlined_call_operand.vmem [shape: f32[32,128], index: 0, kind: input, shape index: {}]
  %s1 = inlined_call_operand.vmem [shape: f32[32,128], index: 1, kind: input, shape index: {}]
  %s2 = inlined_call_operand.vmem [shape: bf16[128,128], index: 2, kind: input, shape index: {}]
  %s3 = inlined_call_operand.vmem [shape: bf16[32,128], index: 3, kind: output, shape index: {0}]
  %s4 = inlined_call_operand.hbm [shape: f32[1,1], index: 4, kind: output, shape index: {1}]
  %5 = xla_tuple %s3, %s4
  %s6 = sld [smem:[#allocation0]]
  $region34: #{discrete_vae_forward.21} parent=0
    _
  %s8 = ssub.s32 1, %s6
  %s9 = scalar_select 0, %s8, %s6
  $region1: #{discrete_vae_forward.21} parent=0
    #allocation2 [shape = 'u8[512]{0}', space=vmem, size = 0x400, scoped, tag = 'output window, operand 1, single buffered']
    #allocation3 [shape = 's32[1]{0}', space=sflag, size = 0x4, scoped, tag = 'scoped memory for discrete_vae_forward.21']
    %10 = vsyncpa [#allocation3], 0
    // Predicated region
    $region2: #{discrete_vae_forward.21} parent=1 // pred_check
      _
    $region3: #{discrete_vae_forward.21} parent=1 // pred_check_branch
      %12 = sbr.rel (0) target = $region5
    $region4: #{discrete_vae_forward.21} parent=1 // pred_region
      _
    $region5: #{discrete_vae_forward.21} parent=1 // pred_fallthru
      _
    // Predicated region
    $region6: #{discrete_vae_forward.21} parent=1 // pred_check
      _
    $region7: #{discrete_vae_forward.21} parent=1 // pred_check_branch
      %14 = sbr.rel (0) target = $region9
    $region8: #{discrete_vae_forward.21} parent=1 // pred_region
      _
    $region9: #{discrete_vae_forward.21} parent=1 // pred_fallthru
      _
    // Predicated region
    $region10: #{discrete_vae_forward.21} parent=1 // pred_check
      _
    $region11: #{discrete_vae_forward.21} parent=1 // pred_check_branch
      %16 = sbr.rel (0) target = $region13
    $region12: #{discrete_vae_forward.21} parent=1 // pred_region
      _
    $region13: #{discrete_vae_forward.21} parent=1 // pred_fallthru
      _
    %v18 = vld [vmem:[%s0] sm:$0xff]
    %v19 = vld [vmem:[%s0 + $0x8] sm:$0xff]
    %v20 = vld [vmem:[%s0 + $0x10] sm:$0xff]
    %v21 = vld [vmem:[%s0 + $0x18] sm:$0xff]
    %v22 = vlaneseq
    %v23 = vand.u32 %v22, 127
    %v24 = vlaneseq
    %v25 = vshrl.u32 %v24, 7
    %v26 = vadd.s32 %v25, 8
    %v27 = vadd.s32 %v25, 16
    %v28 = vadd.s32 %v25, 24
    %s29 = smul.u32 0, 32
    %v30 = vstv %s29
    %v31 = vadd.s32 %v25, %v30
    %v32 = vadd.s32 %v26, %v30
    %v33 = vadd.s32 %v27, %v30
    %v34 = vadd.s32 %v28, %v30
    %vm35 = vcmp.lt.s32.totalorder %v23, 64
    %vm36 = vcmp.lt.s32.totalorder %v31, 32
    %vm37 = vcmp.lt.s32.totalorder %v32, 32
    %vm38 = vcmp.lt.s32.totalorder %v33, 32
    %vm39 = vcmp.lt.s32.totalorder %v34, 32
    %vm40 = vmand %vm35, %vm36
    %vm41 = vmand %vm35, %vm37
    %vm42 = vmand %vm35, %vm38
    %vm43 = vmand %vm35, %vm39
    %v44 = vsel %vm35, %v18, -1e+30
    %v45 = vsel %vm35, %v19, -1e+30
    %v46 = vsel %vm35, %v20, -1e+30
    %v47 = vsel %vm35, %v21, -1e+30
    %48 = vmax.xlane.f32.xlu0 %v44
    %v49 = vpop.xlane.xlu0 %48
    %50 = vmax.xlane.f32.xlu0 %v45
    %v51 = vpop.xlane.xlu0 %50
    %52 = vmax.xlane.f32.xlu0 %v46
    %v53 = vpop.xlane.xlu0 %52
    %54 = vmax.xlane.f32.xlu0 %v47
    %v55 = vpop.xlane.xlu0 %54
    %v56 = vsub.f32 %v44, %v49
    %v57 = vsub.f32 %v45, %v51
    %v58 = vsub.f32 %v46, %v53
    %v59 = vsub.f32 %v47, %v55
    %v60 = vmul.f32 %v56, 1.442695
    %v61 = vpow.pop %v60
    %v62 = vmul.f32 %v57, 1.442695
    %v63 = vpow.pop %v62
    %v64 = vmul.f32 %v58, 1.442695
    %v65 = vpow.pop %v64
    %v66 = vmul.f32 %v59, 1.442695
    %v67 = vpow.pop %v66
    %v68 = vsel %vm35, %v61, 0.0
    %v69 = vsel %vm35, %v63, 0.0
    %v70 = vsel %vm35, %v65, 0.0
    %v71 = vsel %vm35, %v67, 0.0
    %72 = vadd.xlane.f32.xlu0 %v68
    %v73 = vpop.xlane.xlu0 %72
    %74 = vadd.xlane.f32.xlu0 %v69
    %v75 = vpop.xlane.xlu0 %74
    %76 = vadd.xlane.f32.xlu0 %v70
    %v77 = vpop.xlane.xlu0 %76
    %78 = vadd.xlane.f32.xlu0 %v71
    %v79 = vpop.xlane.xlu0 %78
    %v80 = vlog2.pop %v73
    %v81 = vmul.f32 %v80, 0.6931472
    %v82 = vlog2.pop %v75
    %v83 = vmul.f32 %v82, 0.6931472
    %v84 = vlog2.pop %v77
    %v85 = vmul.f32 %v84, 0.6931472
    %v86 = vlog2.pop %v79
    %v87 = vmul.f32 %v86, 0.6931472
    %v88 = vsub.f32 %v56, %v81
    %v89 = vsub.f32 %v57, %v83
    %v90 = vsub.f32 %v58, %v85
    %v91 = vsub.f32 %v59, %v87
    %v92 = vrcp.pop %v73
    %v93 = vmul.f32 %v68, %v92
    %v94 = vrcp.pop %v75
    %v95 = vmul.f32 %v69, %v94
    %v96 = vrcp.pop %v77
    %v97 = vmul.f32 %v70, %v96
    %v98 = vrcp.pop %v79
    %v99 = vmul.f32 %v71, %v98
    %v100 = vsub.f32 %v88, -4.158883
    %v101 = vsub.f32 %v89, -4.158883
    %v102 = vsub.f32 %v90, -4.158883
    %v103 = vsub.f32 %v91, -4.158883
    %v104 = vmul.f32 %v93, %v100
    %v105 = vmul.f32 %v95, %v101
    %v106 = vmul.f32 %v97, %v102
    %v107 = vmul.f32 %v99, %v103
    %v108 = vsel %vm40, %v104, 0.0
    %v109 = vsel %vm41, %v105, 0.0
    %v110 = vsel %vm42, %v106, 0.0
    %v111 = vsel %vm43, %v107, 0.0
    %112 = vadd.xlane.f32.xlu0 %v108
    %v113 = vpop.xlane.xlu0 %112
    %114 = vadd.xlane.f32.xlu0 %v109
    %v115 = vpop.xlane.xlu0 %114
    %116 = vadd.xlane.f32.xlu0 %v110
    %v117 = vpop.xlane.xlu0 %116
    %118 = vadd.xlane.f32.xlu0 %v111
    %v119 = vpop.xlane.xlu0 %118
    %v120 = vadd.f32 %v113, %v115
    %v121 = vadd.f32 %v120, %v117
    %v122 = vadd.f32 %v121, %v119
    %v123 = vrot.slane %v122, 4
    %v124 = vadd.f32 %v122, %v123
    %v125 = vrot.slane %v124, 2
    %v126 = vadd.f32 %v124, %v125
    %v127 = vrot.slane %v126, 1
    %v128 = vadd.f32 %v126, %v127
    %p129 = scmp.eq.s32.totalorder 0, 0
    // Predicated region
    $region14: #{discrete_vae_forward.21} parent=1 // pred_check
      %p130 = pneg %p129
    $region15: #{discrete_vae_forward.21} parent=1 // pred_check_branch
      %132 = sbr.rel (%p130) target = $region17
    $region16: #{discrete_vae_forward.21} parent=1 // pred_region
      %vm133 = vcmask 0
      %134 = vst.msk [vmem:[#allocation2] sm:$0x1] %vm133, 0.0
    $region17: #{discrete_vae_forward.21} parent=1 // pred_fallthru
      _
    %v135 = vld [vmem:[#allocation2] sm:$0x1]
    %v136 = vadd.f32 %v135, %v128
    %vm137 = vcmask 0
    %138 = vst.msk [vmem:[#allocation2] sm:$0x1] %vm137, %v136
    %v139 = vld [vmem:[%s1] sm:$0xff]
    %v140 = vld [vmem:[%s1 + $0x8] sm:$0xff]
    %v141 = vld [vmem:[%s1 + $0x10] sm:$0xff]
    %v142 = vld [vmem:[%s1 + $0x18] sm:$0xff]
    %v143 = vadd.f32 %v18, %v139
    %v144 = vadd.f32 %v19, %v140
    %v145 = vadd.f32 %v20, %v141
    %v146 = vadd.f32 %v21, %v142
    %v147 = vmul.f32 %v143, 1.1111112
    %v148 = vmul.f32 %v144, 1.1111112
    %v149 = vmul.f32 %v145, 1.1111112
    %v150 = vmul.f32 %v146, 1.1111112
    %v151 = vsel %vm35, %v147, -1e+30
    %v152 = vsel %vm35, %v148, -1e+30
    %v153 = vsel %vm35, %v149, -1e+30
    %v154 = vsel %vm35, %v150, -1e+30
    %155 = vmax.xlane.f32.xlu0 %v151
    %v156 = vpop.xlane.xlu0 %155
    %157 = vmax.xlane.f32.xlu0 %v152
    %v158 = vpop.xlane.xlu0 %157
    %159 = vmax.xlane.f32.xlu0 %v153
    %v160 = vpop.xlane.xlu0 %159
    %161 = vmax.xlane.f32.xlu0 %v154
    %v162 = vpop.xlane.xlu0 %161
    %v163 = vsub.f32 %v151, %v156
    %v164 = vsub.f32 %v152, %v158
    %v165 = vsub.f32 %v153, %v160
    %v166 = vsub.f32 %v154, %v162
    %v167 = vmul.f32 %v163, 1.442695
    %v168 = vpow.pop %v167
    %v169 = vmul.f32 %v164, 1.442695
    %v170 = vpow.pop %v169
    %v171 = vmul.f32 %v165, 1.442695
    %v172 = vpow.pop %v171
    %v173 = vmul.f32 %v166, 1.442695
    %v174 = vpow.pop %v173
    %v175 = vsel %vm35, %v168, 0.0
    %v176 = vsel %vm35, %v170, 0.0
    %v177 = vsel %vm35, %v172, 0.0
    %v178 = vsel %vm35, %v174, 0.0
    %179 = vadd.xlane.f32.xlu0 %v175
    %v180 = vpop.xlane.xlu0 %179
    %181 = vadd.xlane.f32.xlu0 %v176
    %v182 = vpop.xlane.xlu0 %181
    %183 = vadd.xlane.f32.xlu0 %v177
    %v184 = vpop.xlane.xlu0 %183
    %185 = vadd.xlane.f32.xlu0 %v178
    %v186 = vpop.xlane.xlu0 %185
    %v187 = vrcp.pop %v180
    %v188 = vmul.f32 %v175, %v187
    %v189 = vrcp.pop %v182
    %v190 = vmul.f32 %v176, %v189
    %v191 = vrcp.pop %v184
    %v192 = vmul.f32 %v177, %v191
    %v193 = vrcp.pop %v186
    %v194 = vmul.f32 %v178, %v193
    %v195 = vpack.c.bf16 %v190, %v188
    %v196 = vpack.c.bf16 %v194, %v192
    %v197 = vld [vmem:[%s2] sm:$0xf]
    %v198 = vld [vmem:[%s2 + $0x4] sm:$0xf]
    %v199 = vld [vmem:[%s2 + $0x8] sm:$0xf]
    %v200 = vld [vmem:[%s2 + $0xc] sm:$0xf]
    %v201 = vld [vmem:[%s2 + $0x10] sm:$0xf]
    %v202 = vld [vmem:[%s2 + $0x14] sm:$0xf]
    %v203 = vld [vmem:[%s2 + $0x18] sm:$0xf]
    %v204 = vld [vmem:[%s2 + $0x1c] sm:$0xf]
    %v205 = vld [vmem:[%s2 + $0x20] sm:$0xf]
    %v206 = vld [vmem:[%s2 + $0x24] sm:$0xf]
    %v207 = vld [vmem:[%s2 + $0x28] sm:$0xf]
    %v208 = vld [vmem:[%s2 + $0x2c] sm:$0xf]
    %v209 = vld [vmem:[%s2 + $0x30] sm:$0xf]
    %v210 = vld [vmem:[%s2 + $0x34] sm:$0xf]
    %v211 = vld [vmem:[%s2 + $0x38] sm:$0xf]
    %v212 = vld [vmem:[%s2 + $0x3c] sm:$0xf]
    %v229 = vunpack.c.l.b16 %v197
    %v230 = vunpack.c.l.b16 %v198
    %v231 = vunpack.c.l.b16 %v199
    %v232 = vunpack.c.l.b16 %v200
    %v233 = vunpack.c.l.b16 %v201
    %v234 = vunpack.c.l.b16 %v202
    %v235 = vunpack.c.l.b16 %v203
    %v236 = vunpack.c.l.b16 %v204
    %v237 = vunpack.c.l.b16 %v205
    %v238 = vunpack.c.l.b16 %v206
    %v239 = vunpack.c.l.b16 %v207
    %v240 = vunpack.c.l.b16 %v208
    %v241 = vunpack.c.l.b16 %v209
    %v242 = vunpack.c.l.b16 %v210
    %v243 = vunpack.c.l.b16 %v211
    %v244 = vunpack.c.l.b16 %v212
    %v245 = vpack.c.b16 %v230, %v229
    %v246 = vpack.c.b16 %v232, %v231
    %v247 = vpack.c.b16 %v234, %v233
    %v248 = vpack.c.b16 %v236, %v235
    %v249 = vpack.c.b16 %v238, %v237
    %v250 = vpack.c.b16 %v240, %v239
    %v251 = vpack.c.b16 %v242, %v241
    %v252 = vpack.c.b16 %v244, %v243
    %261 = vmatprep.subr.bf16.mxu0 0
    %262 = vmatpush1.bf16.msra.mxu0 %v245
    %263 = vmatprep.subr.bf16.mxu0 0
    %264 = vmatpush1.bf16.msra.mxu0 %v246
    %265 = vmatprep.subr.bf16.mxu0 0
    %266 = vmatpush1.bf16.msra.mxu0 %v247
    %267 = vmatprep.subr.bf16.mxu0 0
    %268 = vmatpush1.bf16.msra.mxu0 %v248
    %269 = vmatprep.subr.bf16.mxu0 0
    %270 = vmatpush1.bf16.msra.mxu0 %v249
    %271 = vmatprep.subr.bf16.mxu0 0
    %272 = vmatpush1.bf16.msra.mxu0 %v250
    %273 = vmatprep.subr.bf16.mxu0 0
    %274 = vmatpush1.bf16.msra.mxu0 %v251
    %275 = vmatprep.subr.bf16.mxu0 0
    %276 = vmatpush1.bf16.msra.mxu0 %v252
    %277 = vmatprep.subr.bf16.mxu0 0
    %278 = vmatpush1.bf16.msra.mxu0 0
    %279 = vmatprep.subr.bf16.mxu0 0
    %280 = vmatpush1.bf16.msra.mxu0 0
    %281 = vmatprep.subr.bf16.mxu0 0
    %282 = vmatpush1.bf16.msra.mxu0 0
    %283 = vmatprep.subr.bf16.mxu0 0
    %284 = vmatpush1.bf16.msra.mxu0 0
    %285 = vmatprep.subr.bf16.mxu0 0
    %286 = vmatpush1.bf16.msra.mxu0 0
    %287 = vmatprep.subr.bf16.mxu0 0
    %288 = vmatpush1.bf16.msra.mxu0 0
    %289 = vmatprep.subr.bf16.mxu0 0
    %290 = vmatpush1.bf16.msra.mxu0 0
    %291 = vmatprep.subr.bf16.mxu0 0
    %292 = vmatpush1.bf16.msra.mxu0 0
    %293 = vmatprep.mubr.bf16.mxu0 0
    %294 = vmatmul.mubr.bf16.gmra.mrb[0].mxu0 %v195
    %v295 = vpop.f32.mrb[0].mxu0
    %v296 = vadd.f32 0.0, %v295
    %v297 = vpop.f32.mrb[0].mxu0
    %v298 = vpop.f32.mrb[0].mxu0
    %v299 = vadd.f32 0.0, %v298
    %v300 = vpop.f32.mrb[0].mxu0
    %301 = vmatprep.mubr.bf16.mxu0 0
    %302 = vmatmul.mubr.bf16.gmra.mrb[0].mxu0 %v196
    %v303 = vpop.f32.mrb[0].mxu0
    %v304 = vadd.f32 0.0, %v303
    %v305 = vpop.f32.mrb[0].mxu0
    %v306 = vpop.f32.mrb[0].mxu0
    %v307 = vadd.f32 0.0, %v306
    %v308 = vpop.f32.mrb[0].mxu0
    %309 = vdwg.mxu0
    %v310 = vpack.c.bf16 %v299, %v296
    %v311 = vpack.c.bf16 %v307, %v304
    %v314 = vunpack.c.l.b16 %v310
    %v315 = vunpack.c.h.b16 %v310
    %v316 = vunpack.c.l.b16 %v311
    %v317 = vunpack.c.h.b16 %v311
    %v318 = vpack.c.b16 %v314, %v314
    %v319 = vpack.c.b16 %v315, %v315
    %v320 = vpack.c.b16 %v316, %v316
    %v321 = vpack.c.b16 %v317, %v317
    %326 = vst [vmem:[%s3] sm:$0xf] %v318
    %327 = vst [vmem:[%s3 + $0x4] sm:$0xf] %v319
    %328 = vst [vmem:[%s3 + $0x8] sm:$0xf] %v320
    %329 = vst [vmem:[%s3 + $0xc] sm:$0xf] %v321
    // Predicated region
    $region18: #{discrete_vae_forward.21} parent=1 // pred_check
      _
    $region19: #{discrete_vae_forward.21} parent=1 // pred_check_branch
      %331 = sbr.rel (0) target = $region21
    $region20: #{discrete_vae_forward.21} parent=1 // pred_region
      _
    $region21: #{discrete_vae_forward.21} parent=1 // pred_fallthru
      _
    // Predicated region
    $region22: #{discrete_vae_forward.21} parent=1 // pred_check
      _
    $region23: #{discrete_vae_forward.21} parent=1 // pred_check_branch
      %333 = sbr.rel (0) target = $region25
    $region24: #{discrete_vae_forward.21} parent=1 // pred_region
      %s335 = ssub.s32 16, 16
      %336 = vsyncadd [#allocation3], %s335
      %s338 = sshll.u32 [#allocation2], 4
      %s339 = int_to_ptr.vmem [resolvable:$true] %s338
      %341 = dma.vmem_to_hbm [thread:$0]  %s339, 16, %s4, [#allocation3]
    $region25: #{discrete_vae_forward.21} parent=1 // pred_fallthru
      _
    // Predicated region
    $region26: #{discrete_vae_forward.21} parent=1 // pred_check
      _
    $region27: #{discrete_vae_forward.21} parent=1 // pred_check_branch
      %343 = sbr.rel (0) target = $region29
    $region28: #{discrete_vae_forward.21} parent=1 // pred_region
      _
    $region29: #{discrete_vae_forward.21} parent=1 // pred_fallthru
      _
    // Predicated region
    $region30: #{discrete_vae_forward.21} parent=1 // pred_check
      _
    $region31: #{discrete_vae_forward.21} parent=1 // pred_check_branch
      %345 = sbr.rel (0) target = $region33
    $region32: #{discrete_vae_forward.21} parent=1 // pred_region
      %346 = dma.done [#allocation3], 16
    $region33: #{discrete_vae_forward.21} parent=1 // pred_fallthru
      _
    %347 = vsyncpa [#allocation3], 1

// kernel: discrete_vae_forward.27
$region0: #{discrete_vae_forward.27}
  #allocation0 [shape = 'u32[]', space=smem, size = 0x4, offset = 0x4, fixed_abs, tag = 'smem constant byte address 0x4 - core index']
  #allocation1 [shape = 'u32[144,128]{1,0:T(1,128)}', space=vmem, size = 0x12000, scoped, tag = 'internal scratch']
  %s0 = inlined_call_operand.vmem [shape: bf16[128,288], index: 0, kind: input, shape index: {}]
  %s1 = inlined_call_operand.vmem [shape: bf16[288,128], index: 1, kind: input, shape index: {}]
  %s2 = inlined_call_operand.vmem [shape: f32[1,128], index: 2, kind: input, shape index: {}]
  %s3 = inlined_call_operand.vmem [shape: bf16[128,128], index: 3, kind: output, shape index: {}]
  %s4 = sld [smem:[#allocation0]]
  $region22: #{discrete_vae_forward.27} parent=0
    _
  %s6 = ssub.s32 1, %s4
  %s7 = scalar_select 0, %s6, %s4
  // Predicated region
  $region2: #{discrete_vae_forward.27} parent=0 // pred_check
    _
  $region3: #{discrete_vae_forward.27} parent=0 // pred_check_branch
    %9 = sbr.rel (0) target = $region5
  $region4: #{discrete_vae_forward.27} parent=0 // pred_region
    _
  $region5: #{discrete_vae_forward.27} parent=0 // pred_fallthru
    _
  // Predicated region
  $region6: #{discrete_vae_forward.27} parent=0 // pred_check
    _
  $region7: #{discrete_vae_forward.27} parent=0 // pred_check_branch
    %11 = sbr.rel (0) target = $region9
  $region8: #{discrete_vae_forward.27} parent=0 // pred_region
    _
  $region9: #{discrete_vae_forward.27} parent=0 // pred_fallthru
    _
  // Predicated region
  $region10: #{discrete_vae_forward.27} parent=0 // pred_check
    _
  $region11: #{discrete_vae_forward.27} parent=0 // pred_check_branch
    %13 = sbr.rel (0) target = $region13
  $region12: #{discrete_vae_forward.27} parent=0 // pred_region
    _
  $region13: #{discrete_vae_forward.27} parent=0 // pred_fallthru
    _
  %v15 = vld [vmem:[%s0] sm:$0xff]
  %v16 = vld [vmem:[%s0 + $0x8] sm:$0xf]
  %v17 = vld [vmem:[%s0 + $0xc] sm:$0xff]
  %v18 = vld [vmem:[%s0 + $0x14] sm:$0xf]
  %v19 = vld [vmem:[%s0 + $0x18] sm:$0xff]
  %v20 = vld [vmem:[%s0 + $0x20] sm:$0xf]
  %v21 = vld [vmem:[%s0 + $0x24] sm:$0xff]
  %v22 = vld [vmem:[%s0 + $0x2c] sm:$0xf]
  %v23 = vld [vmem:[%s0 + $0x30] sm:$0xff]
  %v24 = vld [vmem:[%s0 + $0x38] sm:$0xf]
  %v25 = vld [vmem:[%s0 + $0x3c] sm:$0xff]
  %v26 = vld [vmem:[%s0 + $0x44] sm:$0xf]
  %v27 = vld [vmem:[%s0 + $0x48] sm:$0xff]
  %v28 = vld [vmem:[%s0 + $0x50] sm:$0xf]
  %v29 = vld [vmem:[%s0 + $0x54] sm:$0xff]
  %v30 = vld [vmem:[%s0 + $0x5c] sm:$0xf]
  %v31 = vld [vmem:[%s0 + $0x60] sm:$0xff]
  %v32 = vld [vmem:[%s0 + $0x68] sm:$0xf]
  %v33 = vld [vmem:[%s0 + $0x6c] sm:$0xff]
  %v34 = vld [vmem:[%s0 + $0x74] sm:$0xf]
  %v35 = vld [vmem:[%s0 + $0x78] sm:$0xff]
  %v36 = vld [vmem:[%s0 + $0x80] sm:$0xf]
  %v37 = vld [vmem:[%s0 + $0x84] sm:$0xff]
  %v38 = vld [vmem:[%s0 + $0x8c] sm:$0xf]
  %v39 = vld [vmem:[%s0 + $0x90] sm:$0xff]
  %v40 = vld [vmem:[%s0 + $0x98] sm:$0xf]
  %v41 = vld [vmem:[%s0 + $0x9c] sm:$0xff]
  %v42 = vld [vmem:[%s0 + $0xa4] sm:$0xf]
  %v43 = vld [vmem:[%s0 + $0xa8] sm:$0xff]
  %v44 = vld [vmem:[%s0 + $0xb0] sm:$0xf]
  %v45 = vld [vmem:[%s0 + $0xb4] sm:$0xff]
  %v46 = vld [vmem:[%s0 + $0xbc] sm:$0xf]
  %v47 = vld [vmem:[%s1] sm:$0xf]
  %v48 = vld [vmem:[%s1 + $0x4] sm:$0xf]
  %v49 = vld [vmem:[%s1 + $0x8] sm:$0xf]
  %v50 = vld [vmem:[%s1 + $0xc] sm:$0xf]
  %v51 = vld [vmem:[%s1 + $0x10] sm:$0xf]
  %v52 = vld [vmem:[%s1 + $0x14] sm:$0xf]
  %v53 = vld [vmem:[%s1 + $0x18] sm:$0xf]
  %v54 = vld [vmem:[%s1 + $0x1c] sm:$0xf]
  %v55 = vld [vmem:[%s1 + $0x20] sm:$0xf]
  %v56 = vld [vmem:[%s1 + $0x24] sm:$0xf]
  %v57 = vld [vmem:[%s1 + $0x28] sm:$0xf]
  %v58 = vld [vmem:[%s1 + $0x2c] sm:$0xf]
  %v59 = vld [vmem:[%s1 + $0x30] sm:$0xf]
  %v60 = vld [vmem:[%s1 + $0x34] sm:$0xf]
  %v61 = vld [vmem:[%s1 + $0x38] sm:$0xf]
  %v62 = vld [vmem:[%s1 + $0x3c] sm:$0xf]
  %v63 = vld [vmem:[%s1 + $0x40] sm:$0xf]
  %v64 = vld [vmem:[%s1 + $0x44] sm:$0xf]
  %v65 = vld [vmem:[%s1 + $0x48] sm:$0xf]
  %v66 = vld [vmem:[%s1 + $0x4c] sm:$0xf]
  %v67 = vld [vmem:[%s1 + $0x50] sm:$0xf]
  %v68 = vld [vmem:[%s1 + $0x54] sm:$0xf]
  %v69 = vld [vmem:[%s1 + $0x58] sm:$0xf]
  %v70 = vld [vmem:[%s1 + $0x5c] sm:$0xf]
  %v71 = vld [vmem:[%s1 + $0x60] sm:$0xf]
  %v72 = vld [vmem:[%s1 + $0x64] sm:$0xf]
  %v73 = vld [vmem:[%s1 + $0x68] sm:$0xf]
  %v74 = vld [vmem:[%s1 + $0x6c] sm:$0xf]
  %v75 = vld [vmem:[%s1 + $0x70] sm:$0xf]
  %v76 = vld [vmem:[%s1 + $0x74] sm:$0xf]
  %v77 = vld [vmem:[%s1 + $0x78] sm:$0xf]
  %v78 = vld [vmem:[%s1 + $0x7c] sm:$0xf]
  %v79 = vld [vmem:[%s1 + $0x80] sm:$0xf]
  %v80 = vld [vmem:[%s1 + $0x84] sm:$0xf]
  %v81 = vld [vmem:[%s1 + $0x88] sm:$0xf]
  %v82 = vld [vmem:[%s1 + $0x8c] sm:$0xf]
  %v83 = vld [vmem:[%s2] sm:$0x1]
  %v85 = vlaneseq
  %v86 = vshrl.u32 %v85, 7
  %v87 = vsub.s32 0, %v86
  %v88 = vrot.slane %v83, %v87
  %v122 = vunpack.c.l.b16 %v15
  %v123 = vunpack.c.h.b16 %v15
  %v124 = vunpack.c.l.b16 %v16
  %v125 = vunpack.c.l.b16 %v17
  %v126 = vunpack.c.h.b16 %v17
  %v127 = vunpack.c.l.b16 %v18
  %v128 = vunpack.c.l.b16 %v19
  %v129 = vunpack.c.h.b16 %v19
  %v130 = vunpack.c.l.b16 %v20
  %v131 = vunpack.c.l.b16 %v21
  %v132 = vunpack.c.h.b16 %v21
  %v133 = vunpack.c.l.b16 %v22
  %v134 = vunpack.c.l.b16 %v23
  %v135 = vunpack.c.h.b16 %v23
  %v136 = vunpack.c.l.b16 %v24
  %v137 = vunpack.c.l.b16 %v25
  %v138 = vunpack.c.h.b16 %v25
  %v139 = vunpack.c.l.b16 %v26
  %v140 = vunpack.c.l.b16 %v27
  %v141 = vunpack.c.h.b16 %v27
  %v142 = vunpack.c.l.b16 %v28
  %v143 = vunpack.c.l.b16 %v29
  %v144 = vunpack.c.h.b16 %v29
  %v145 = vunpack.c.l.b16 %v30
  %v146 = vunpack.c.l.b16 %v31
  %v147 = vunpack.c.h.b16 %v31
  %v148 = vunpack.c.l.b16 %v32
  %v149 = vunpack.c.l.b16 %v33
  %v150 = vunpack.c.h.b16 %v33
  %v151 = vunpack.c.l.b16 %v34
  %v152 = vunpack.c.l.b16 %v35
  %v153 = vunpack.c.h.b16 %v35
  %v154 = vunpack.c.l.b16 %v36
  %v155 = vunpack.c.l.b16 %v37
  %v156 = vunpack.c.h.b16 %v37
  %v157 = vunpack.c.l.b16 %v38
  %v158 = vunpack.c.l.b16 %v39
  %v159 = vunpack.c.h.b16 %v39
  %v160 = vunpack.c.l.b16 %v40
  %v161 = vunpack.c.l.b16 %v41
  %v162 = vunpack.c.h.b16 %v41
  %v163 = vunpack.c.l.b16 %v42
  %v164 = vunpack.c.l.b16 %v43
  %v165 = vunpack.c.h.b16 %v43
  %v166 = vunpack.c.l.b16 %v44
  %v167 = vunpack.c.l.b16 %v45
  %v168 = vunpack.c.h.b16 %v45
  %v169 = vunpack.c.l.b16 %v46
  %v170 = vpack.c.b16 %v125, %v122
  %v171 = vpack.c.b16 %v126, %v123
  %v172 = vpack.c.b16 %v127, %v124
  %v173 = vpack.c.b16 %v131, %v128
  %v174 = vpack.c.b16 %v132, %v129
  %v175 = vpack.c.b16 %v133, %v130
  %v176 = vpack.c.b16 %v137, %v134
  %v177 = vpack.c.b16 %v138, %v135
  %v178 = vpack.c.b16 %v139, %v136
  %v179 = vpack.c.b16 %v143, %v140
  %v180 = vpack.c.b16 %v144, %v141
  %v181 = vpack.c.b16 %v145, %v142
  %v182 = vpack.c.b16 %v149, %v146
  %v183 = vpack.c.b16 %v150, %v147
  %v184 = vpack.c.b16 %v151, %v148
  %v185 = vpack.c.b16 %v155, %v152
  %v186 = vpack.c.b16 %v156, %v153
  %v187 = vpack.c.b16 %v157, %v154
  %v188 = vpack.c.b16 %v161, %v158
  %v189 = vpack.c.b16 %v162, %v159
  %v190 = vpack.c.b16 %v163, %v160
  %v191 = vpack.c.b16 %v167, %v164
  %v192 = vpack.c.b16 %v168, %v165
  %v193 = vpack.c.b16 %v169, %v166
  %v246 = vunpack.c.l.b16 %v47
  %v247 = vunpack.c.l.b16 %v48
  %v248 = vunpack.c.l.b16 %v49
  %v249 = vunpack.c.l.b16 %v50
  %v250 = vunpack.c.l.b16 %v51
  %v251 = vunpack.c.l.b16 %v52
  %v252 = vunpack.c.l.b16 %v53
  %v253 = vunpack.c.l.b16 %v54
  %v254 = vunpack.c.l.b16 %v55
  %v255 = vunpack.c.l.b16 %v56
  %v256 = vunpack.c.l.b16 %v57
  %v257 = vunpack.c.l.b16 %v58
  %v258 = vunpack.c.l.b16 %v59
  %v259 = vunpack.c.l.b16 %v60
  %v260 = vunpack.c.l.b16 %v61
  %v261 = vunpack.c.l.b16 %v62
  %v262 = vunpack.c.l.b16 %v63
  %v263 = vunpack.c.l.b16 %v64
  %v264 = vunpack.c.l.b16 %v65
  %v265 = vunpack.c.l.b16 %v66
  %v266 = vunpack.c.l.b16 %v67
  %v267 = vunpack.c.l.b16 %v68
  %v268 = vunpack.c.l.b16 %v69
  %v269 = vunpack.c.l.b16 %v70
  %v270 = vunpack.c.l.b16 %v71
  %v271 = vunpack.c.l.b16 %v72
  %v272 = vunpack.c.l.b16 %v73
  %v273 = vunpack.c.l.b16 %v74
  %v274 = vunpack.c.l.b16 %v75
  %v275 = vunpack.c.l.b16 %v76
  %v276 = vunpack.c.l.b16 %v77
  %v277 = vunpack.c.l.b16 %v78
  %v278 = vunpack.c.l.b16 %v79
  %v279 = vunpack.c.l.b16 %v80
  %v280 = vunpack.c.l.b16 %v81
  %v281 = vunpack.c.l.b16 %v82
  %v282 = vpack.c.b16 %v247, %v246
  %v283 = vpack.c.b16 %v249, %v248
  %v284 = vpack.c.b16 %v251, %v250
  %v285 = vpack.c.b16 %v253, %v252
  %v286 = vpack.c.b16 %v255, %v254
  %v287 = vpack.c.b16 %v257, %v256
  %v288 = vpack.c.b16 %v259, %v258
  %v289 = vpack.c.b16 %v261, %v260
  %v290 = vpack.c.b16 %v263, %v262
  %v291 = vpack.c.b16 %v265, %v264
  %v292 = vpack.c.b16 %v267, %v266
  %v293 = vpack.c.b16 %v269, %v268
  %v294 = vpack.c.b16 %v271, %v270
  %v295 = vpack.c.b16 %v273, %v272
  %v296 = vpack.c.b16 %v275, %v274
  %v297 = vpack.c.b16 %v277, %v276
  %v298 = vpack.c.b16 %v279, %v278
  %v299 = vpack.c.b16 %v281, %v280
  %vm318 = vcmask 261120
  %v320 = vsel %vm318, %v172, 0
  %v323 = vsel %vm318, %v175, 0
  %v326 = vsel %vm318, %v178, 0
  %v329 = vsel %vm318, %v181, 0
  %v332 = vsel %vm318, %v184, 0
  %v335 = vsel %vm318, %v187, 0
  %v338 = vsel %vm318, %v190, 0
  %v341 = vsel %vm318, %v193, 0
  %343 = vmatprep.subr.bf16.mxu0 0
  %344 = vmatpush1.bf16.msra.mxu0 %v282
  %345 = vmatprep.subr.bf16.mxu0 0
  %346 = vmatpush1.bf16.msra.mxu0 %v283
  %347 = vmatprep.subr.bf16.mxu0 0
  %348 = vmatpush1.bf16.msra.mxu0 %v284
  %349 = vmatprep.subr.bf16.mxu0 0
  %350 = vmatpush1.bf16.msra.mxu0 %v285
  %351 = vmatprep.subr.bf16.mxu0 0
  %352 = vmatpush1.bf16.msra.mxu0 %v286
  %353 = vmatprep.subr.bf16.mxu0 0
  %354 = vmatpush1.bf16.msra.mxu0 %v287
  %355 = vmatprep.subr.bf16.mxu0 0
  %356 = vmatpush1.bf16.msra.mxu0 %v288
  %357 = vmatprep.subr.bf16.mxu0 0
  %358 = vmatpush1.bf16.msra.mxu0 %v289
  %359 = vmatprep.subr.bf16.mxu0 0
  %360 = vmatpush1.bf16.msra.mxu0 %v290
  %361 = vmatprep.subr.bf16.mxu0 0
  %362 = vmatpush1.bf16.msra.mxu0 %v291
  %363 = vmatprep.subr.bf16.mxu0 0
  %364 = vmatpush1.bf16.msra.mxu0 %v292
  %365 = vmatprep.subr.bf16.mxu0 0
  %366 = vmatpush1.bf16.msra.mxu0 %v293
  %367 = vmatprep.subr.bf16.mxu0 0
  %368 = vmatpush1.bf16.msra.mxu0 %v294
  %369 = vmatprep.subr.bf16.mxu0 0
  %370 = vmatpush1.bf16.msra.mxu0 %v295
  %371 = vmatprep.subr.bf16.mxu0 0
  %372 = vmatpush1.bf16.msra.mxu0 %v296
  %373 = vmatprep.subr.bf16.mxu0 0
  %374 = vmatpush1.bf16.msra.mxu0 %v297
  %375 = vmatprep.mubr.bf16.mxu0 %v171
  %376 = vmatmul.mubr.bf16.gmra.mrb[0].mxu0 %v170
  %v377 = vpop.f32.mrb[0].mxu0
  %v378 = vadd.f32 %v88, %v377
  %v379 = vpop.f32.mrb[0].mxu0
  %v380 = vpop.f32.mrb[0].mxu0
  %v381 = vadd.f32 %v88, %v380
  %v382 = vpop.f32.mrb[0].mxu0
  %383 = vmatprep.mubr.bf16.mxu0 %v174
  %384 = vmatmul.mubr.bf16.gmra.mrb[0].mxu0 %v173
  %v385 = vpop.f32.mrb[0].mxu0
  %v386 = vadd.f32 %v88, %v385
  %v387 = vpop.f32.mrb[0].mxu0
  %v388 = vpop.f32.mrb[0].mxu0
  %v389 = vadd.f32 %v88, %v388
  %v390 = vpop.f32.mrb[0].mxu0
  %391 = vmatprep.mubr.bf16.mxu0 %v177
  %392 = vmatmul.mubr.bf16.gmra.mrb[0].mxu0 %v176
  %v393 = vpop.f32.mrb[0].mxu0
  %v394 = vadd.f32 %v88, %v393
  %v395 = vpop.f32.mrb[0].mxu0
  %v396 = vpop.f32.mrb[0].mxu0
  %v397 = vadd.f32 %v88, %v396
  %v398 = vpop.f32.mrb[0].mxu0
  %399 = vmatprep.mubr.bf16.mxu0 %v180
  %400 = vmatmul.mubr.bf16.gmra.mrb[0].mxu0 %v179
  %v401 = vpop.f32.mrb[0].mxu0
  %v402 = vadd.f32 %v88, %v401
  %v403 = vpop.f32.mrb[0].mxu0
  %v404 = vpop.f32.mrb[0].mxu0
  %v405 = vadd.f32 %v88, %v404
  %v406 = vpop.f32.mrb[0].mxu0
  %407 = vmatprep.mubr.bf16.mxu0 %v183
  %408 = vmatmul.mubr.bf16.gmra.mrb[0].mxu0 %v182
  %v409 = vpop.f32.mrb[0].mxu0
  %v410 = vadd.f32 %v88, %v409
  %v411 = vpop.f32.mrb[0].mxu0
  %v412 = vpop.f32.mrb[0].mxu0
  %v413 = vadd.f32 %v88, %v412
  %v414 = vpop.f32.mrb[0].mxu0
  %415 = vmatprep.mubr.bf16.mxu0 %v186
  %416 = vmatmul.mubr.bf16.gmra.mrb[0].mxu0 %v185
  %v417 = vpop.f32.mrb[0].mxu0
  %v418 = vadd.f32 %v88, %v417
  %v419 = vpop.f32.mrb[0].mxu0
  %v420 = vpop.f32.mrb[0].mxu0
  %v421 = vadd.f32 %v88, %v420
  %v422 = vpop.f32.mrb[0].mxu0
  %423 = vmatprep.mubr.bf16.mxu0 %v189
  %424 = vmatmul.mubr.bf16.gmra.mrb[0].mxu0 %v188
  %v425 = vpop.f32.mrb[0].mxu0
  %v426 = vadd.f32 %v88, %v425
  %v427 = vpop.f32.mrb[0].mxu0
  %v428 = vpop.f32.mrb[0].mxu0
  %v429 = vadd.f32 %v88, %v428
  %v430 = vpop.f32.mrb[0].mxu0
  %431 = vmatprep.mubr.bf16.mxu0 %v192
  %432 = vmatmul.mubr.bf16.gmra.mrb[0].mxu0 %v191
  %v433 = vpop.f32.mrb[0].mxu0
  %v434 = vadd.f32 %v88, %v433
  %v435 = vpop.f32.mrb[0].mxu0
  %v436 = vpop.f32.mrb[0].mxu0
  %v437 = vadd.f32 %v88, %v436
  %v438 = vpop.f32.mrb[0].mxu0
  %439 = vdwg.mxu0
  %440 = vmatprep.subr.bf16.mxu0 0
  %441 = vmatpush1.bf16.msra.mxu0 %v298
  %442 = vmatprep.subr.bf16.mxu0 0
  %443 = vmatpush1.bf16.msra.mxu0 %v299
  %444 = vmatprep.subr.bf16.mxu0 0
  %445 = vmatpush1.bf16.msra.mxu0 0
  %446 = vmatprep.subr.bf16.mxu0 0
  %447 = vmatpush1.bf16.msra.mxu0 0
  %448 = vmatprep.subr.bf16.mxu0 0
  %449 = vmatpush1.bf16.msra.mxu0 0
  %450 = vmatprep.subr.bf16.mxu0 0
  %451 = vmatpush1.bf16.msra.mxu0 0
  %452 = vmatprep.subr.bf16.mxu0 0
  %453 = vmatpush1.bf16.msra.mxu0 0
  %454 = vmatprep.subr.bf16.mxu0 0
  %455 = vmatpush1.bf16.msra.mxu0 0
  %456 = vmatprep.subr.bf16.mxu0 0
  %457 = vmatpush1.bf16.msra.mxu0 0
  %458 = vmatprep.subr.bf16.mxu0 0
  %459 = vmatpush1.bf16.msra.mxu0 0
  %460 = vmatprep.subr.bf16.mxu0 0
  %461 = vmatpush1.bf16.msra.mxu0 0
  %462 = vmatprep.subr.bf16.mxu0 0
  %463 = vmatpush1.bf16.msra.mxu0 0
  %464 = vmatprep.subr.bf16.mxu0 0
  %465 = vmatpush1.bf16.msra.mxu0 0
  %466 = vmatprep.subr.bf16.mxu0 0
  %467 = vmatpush1.bf16.msra.mxu0 0
  %468 = vmatprep.subr.bf16.mxu0 0
  %469 = vmatpush1.bf16.msra.mxu0 0
  %470 = vmatprep.subr.bf16.mxu0 0
  %471 = vmatpush1.bf16.msra.mxu0 0
  %472 = vmatprep.mubr.bf16.mxu0 0
  %473 = vmatmul.mubr.bf16.gmra.mrb[0].mxu0 %v320
  %v474 = vpop.f32.mrb[0].mxu0
  %v475 = vadd.f32 %v378, %v474
  %v476 = vpop.f32.mrb[0].mxu0
  %v477 = vpop.f32.mrb[0].mxu0
  %v478 = vadd.f32 %v381, %v477
  %v479 = vpop.f32.mrb[0].mxu0
  %480 = vmatprep.mubr.bf16.mxu0 0
  %481 = vmatmul.mubr.bf16.gmra.mrb[0].mxu0 %v323
  %v482 = vpop.f32.mrb[0].mxu0
  %v483 = vadd.f32 %v386, %v482
  %v484 = vpop.f32.mrb[0].mxu0
  %v485 = vpop.f32.mrb[0].mxu0
  %v486 = vadd.f32 %v389, %v485
  %v487 = vpop.f32.mrb[0].mxu0
  %488 = vmatprep.mubr.bf16.mxu0 0
  %489 = vmatmul.mubr.bf16.gmra.mrb[0].mxu0 %v326
  %v490 = vpop.f32.mrb[0].mxu0
  %v491 = vadd.f32 %v394, %v490
  %v492 = vpop.f32.mrb[0].mxu0
  %v493 = vpop.f32.mrb[0].mxu0
  %v494 = vadd.f32 %v397, %v493
  %v495 = vpop.f32.mrb[0].mxu0
  %496 = vmatprep.mubr.bf16.mxu0 0
  %497 = vmatmul.mubr.bf16.gmra.mrb[0].mxu0 %v329
  %v498 = vpop.f32.mrb[0].mxu0
  %v499 = vadd.f32 %v402, %v498
  %v500 = vpop.f32.mrb[0].mxu0
  %v501 = vpop.f32.mrb[0].mxu0
  %v502 = vadd.f32 %v405, %v501
  %v503 = vpop.f32.mrb[0].mxu0
  %504 = vmatprep.mubr.bf16.mxu0 0
  %505 = vmatmul.mubr.bf16.gmra.mrb[0].mxu0 %v332
  %v506 = vpop.f32.mrb[0].mxu0
  %v507 = vadd.f32 %v410, %v506
  %v508 = vpop.f32.mrb[0].mxu0
  %v509 = vpop.f32.mrb[0].mxu0
  %v510 = vadd.f32 %v413, %v509
  %v511 = vpop.f32.mrb[0].mxu0
  %512 = vmatprep.mubr.bf16.mxu0 0
  %513 = vmatmul.mubr.bf16.gmra.mrb[0].mxu0 %v335
  %v514 = vpop.f32.mrb[0].mxu0
  %v515 = vadd.f32 %v418, %v514
  %v516 = vpop.f32.mrb[0].mxu0
  %v517 = vpop.f32.mrb[0].mxu0
  %v518 = vadd.f32 %v421, %v517
  %v519 = vpop.f32.mrb[0].mxu0
  %520 = vmatprep.mubr.bf16.mxu0 0
  %521 = vmatmul.mubr.bf16.gmra.mrb[0].mxu0 %v338
  %v522 = vpop.f32.mrb[0].mxu0
  %v523 = vadd.f32 %v426, %v522
  %v524 = vpop.f32.mrb[0].mxu0
  %v525 = vpop.f32.mrb[0].mxu0
  %v526 = vadd.f32 %v429, %v525
  %v527 = vpop.f32.mrb[0].mxu0
  %528 = vmatprep.mubr.bf16.mxu0 0
  %529 = vmatmul.mubr.bf16.gmra.mrb[0].mxu0 %v341
  %v530 = vpop.f32.mrb[0].mxu0
  %v531 = vadd.f32 %v434, %v530
  %v532 = vpop.f32.mrb[0].mxu0
  %v533 = vpop.f32.mrb[0].mxu0
  %v534 = vadd.f32 %v437, %v533
  %v535 = vpop.f32.mrb[0].mxu0
  %536 = vdwg.mxu0
  %v537 = vmax.f32 %v475, 0.0
  %v538 = vmax.f32 %v478, 0.0
  %v539 = vmax.f32 %v483, 0.0
  %v540 = vmax.f32 %v486, 0.0
  %v541 = vmax.f32 %v491, 0.0
  %v542 = vmax.f32 %v494, 0.0
  %v543 = vmax.f32 %v499, 0.0
  %v544 = vmax.f32 %v502, 0.0
  %v545 = vmax.f32 %v507, 0.0
  %v546 = vmax.f32 %v510, 0.0
  %v547 = vmax.f32 %v515, 0.0
  %v548 = vmax.f32 %v518, 0.0
  %v549 = vmax.f32 %v523, 0.0
  %v550 = vmax.f32 %v526, 0.0
  %v551 = vmax.f32 %v531, 0.0
  %v552 = vmax.f32 %v534, 0.0
  %v553 = vpack.c.bf16 %v538, %v537
  %v554 = vpack.c.bf16 %v540, %v539
  %v555 = vpack.c.bf16 %v542, %v541
  %v556 = vpack.c.bf16 %v544, %v543
  %v557 = vpack.c.bf16 %v546, %v545
  %v558 = vpack.c.bf16 %v548, %v547
  %v559 = vpack.c.bf16 %v550, %v549
  %v560 = vpack.c.bf16 %v552, %v551
  %v569 = vunpack.c.l.b16 %v553
  %v570 = vunpack.c.h.b16 %v553
  %v571 = vunpack.c.l.b16 %v554
  %v572 = vunpack.c.h.b16 %v554
  %v573 = vunpack.c.l.b16 %v555
  %v574 = vunpack.c.h.b16 %v555
  %v575 = vunpack.c.l.b16 %v556
  %v576 = vunpack.c.h.b16 %v556
  %v577 = vunpack.c.l.b16 %v557
  %v578 = vunpack.c.h.b16 %v557
  %v579 = vunpack.c.l.b16 %v558
  %v580 = vunpack.c.h.b16 %v558
  %v581 = vunpack.c.l.b16 %v559
  %v582 = vunpack.c.h.b16 %v559
  %v583 = vunpack.c.l.b16 %v560
  %v584 = vunpack.c.h.b16 %v560
  %v585 = vpack.c.b16 %v569, %v569
  %v586 = vpack.c.b16 %v570, %v570
  %v587 = vpack.c.b16 %v571, %v571
  %v588 = vpack.c.b16 %v572, %v572
  %v589 = vpack.c.b16 %v573, %v573
  %v590 = vpack.c.b16 %v574, %v574
  %v591 = vpack.c.b16 %v575, %v575
  %v592 = vpack.c.b16 %v576, %v576
  %v593 = vpack.c.b16 %v577, %v577
  %v594 = vpack.c.b16 %v578, %v578
  %v595 = vpack.c.b16 %v579, %v579
  %v596 = vpack.c.b16 %v580, %v580
  %v597 = vpack.c.b16 %v581, %v581
  %v598 = vpack.c.b16 %v582, %v582
  %v599 = vpack.c.b16 %v583, %v583
  %v600 = vpack.c.b16 %v584, %v584
  %617 = vst [vmem:[%s3] sm:$0xf] %v585
  %618 = vst [vmem:[%s3 + $0x4] sm:$0xf] %v586
  %619 = vst [vmem:[%s3 + $0x8] sm:$0xf] %v587
  %620 = vst [vmem:[%s3 + $0xc] sm:$0xf] %v588
  %621 = vst [vmem:[%s3 + $0x10] sm:$0xf] %v589
  %622 = vst [vmem:[%s3 + $0x14] sm:$0xf] %v590
  %623 = vst [vmem:[%s3 + $0x18] sm:$0xf] %v591
  %624 = vst [vmem:[%s3 + $0x1c] sm:$0xf] %v592
  %625 = vst [vmem:[%s3 + $0x20] sm:$0xf] %v593
  %626 = vst [vmem:[%s3 + $0x24] sm:$0xf] %v594
  %627 = vst [vmem:[%s3 + $0x28] sm:$0xf] %v595
  %628 = vst [vmem:[%s3 + $0x2c] sm:$0xf] %v596
  %629 = vst [vmem:[%s3 + $0x30] sm:$0xf] %v597
  %630 = vst [vmem:[%s3 + $0x34] sm:$0xf] %v598
  %631 = vst [vmem:[%s3 + $0x38] sm:$0xf] %v599
  %632 = vst [vmem:[%s3 + $0x3c] sm:$0xf] %v600
  // Predicated region
  $region14: #{discrete_vae_forward.27} parent=0 // pred_check
    _
  $region15: #{discrete_vae_forward.27} parent=0 // pred_check_branch
    %634 = sbr.rel (0) target = $region17
  $region16: #{discrete_vae_forward.27} parent=0 // pred_region
    _
  $region17: #{discrete_vae_forward.27} parent=0 // pred_fallthru
    _
  // Predicated region
  $region18: #{discrete_vae_forward.27} parent=0 // pred_check
    _
  $region19: #{discrete_vae_forward.27} parent=0 // pred_check_branch
    %636 = sbr.rel (0) target = $region21
  $region20: #{discrete_vae_forward.27} parent=0 // pred_region
    _
  $region21: #{discrete_vae_forward.27} parent=0 // pred_fallthru
    _

// kernel: tile.2
$region0: #{tile.2}
  #allocation0 [shape = 's32[1]{0}', space=sflag, size = 0x4, scoped, tag = 'scoped memory for tile.2']
  %s0 = inlined_call_operand.<no memory space> [shape: f32[], index: 0, kind: input, shape index: {}]
  %s1 = inlined_call_operand.vmem [shape: f32[1,48], index: 1, kind: output, shape index: {}]
  %v2 = vstv %s0
  %3 = vst [vmem:[%s1] sm:$0x1] %v2

// kernel: discrete_vae_forward.28
$region0: #{discrete_vae_forward.28}
  #allocation0 [shape = 'u32[]', space=smem, size = 0x4, offset = 0x4, fixed_abs, tag = 'smem constant byte address 0x4 - core index']
  #allocation1 [shape = 'u32[144,128]{1,0:T(1,128)}', space=vmem, size = 0x12000, scoped, tag = 'internal scratch']
  %s0 = inlined_call_operand.vmem [shape: bf16[512,32], index: 0, kind: input, shape index: {}]
  %s1 = inlined_call_operand.vmem [shape: bf16[32,128], index: 1, kind: input, shape index: {}]
  %s2 = inlined_call_operand.vmem [shape: f32[1,128], index: 2, kind: input, shape index: {}]
  %s3 = inlined_call_operand.vmem [shape: f32[512,128], index: 3, kind: output, shape index: {}]
  %s4 = sld [smem:[#allocation0]]
  $region45: #{discrete_vae_forward.28} parent=0
    _
  %s6 = ssub.s32 1, %s4
  %s7 = scalar_select 0, %s6, %s4
  loop: start=0, step=1, limit=4
  $region2: #{discrete_vae_forward.28} parent=0 // loop_pre_header
    _
  $region3: #{discrete_vae_forward.28} parent=0 // loop_header
    %s9 = sphi 0, %s13
    %p10 = scmp.ge.s32.totalorder %s9, 4
    %s16 = sphi 0, %s28
    %s17 = sphi 0, %s24
    %s18 = sphi 0, %s16
    %s19 = sphi 0, %s17
    %s20 = sphi 0, %s18
    %s21 = sphi 0, %s19
    %s31 = sphi 0, %s33
    %s34 = sphi 0, %s31
    %s35 = sphi 0, %s34
    %s51 = sphi 0, %s35
    %s57 = sphi 0, %s59
    %s60 = sphi 0, %s57
    %s61 = sphi 0, %s60
    %s77 = sphi 0, %s61
    %s83 = sphi 0, %s85
    %s86 = sphi 0, %s83
    %s87 = sphi 0, %s86
    %s103 = sphi 0, %s87
    %s111 = sphi 0, %s113
    %s114 = sphi 0, %s111
    %s115 = sphi 0, %s114
    %s131 = sphi 0, %s115
  $region4: #{discrete_vae_forward.28} parent=0 // loop_header_branch
    %12 = sbr.rel (%p10) target = $region8
  $region5: #{discrete_vae_forward.28} parent=0 // loop_body
    %s14 = ssub.s32 %s9, 1
    %s15 = ssub.s32 %s9, 2
    %s22 = sadd.s32 1, %s17
    %p23 = scmp.ge.s32.totalorder %s22, 1
    %s24 = scalar_select %p23, 0, %s22
    %s25 = sadd.s32 1, %s16
    %s26 = scalar_select %p23, %s25, %s16
    %p27 = scmp.ge.s32.totalorder %s26, 2
    %s28 = scalar_select %p27, 0, %s26
    %s29 = ssub.s32 %s16, %s28
    %p30 = scmp.eq.s32.totalorder %s29, 0
    %s32 = sadd.s32 %s31, 1
    %s33 = scalar_select %p30, %s31, %s32
    %p36 = pneg %p30
    %p37 = scmp.eq.s32.totalorder %s9, 1
    %p38 = por %p36, %p37
    %p39 = scmp.ne.s32.totalorder %s31, %s34
    %p40 = scmp.eq.s32.totalorder %s9, 0
    %p41 = por %p39, %p40
    %p42 = scmp.ne.s32.totalorder %s31, %s34
    %p43 = scmp.eq.s32.totalorder %s14, 1
    %p44 = por %p42, %p43
    %p45 = scmp.ne.s32.totalorder %s34, %s35
    %p46 = scmp.eq.s32.totalorder %s14, 0
    %p47 = por %p45, %p46
    %p48 = scmp.ne.s32.totalorder %s34, %s35
    %p49 = scmp.eq.s32.totalorder %s15, 1
    %p50 = por %p48, %p49
    %p52 = scmp.ne.s32.totalorder %s35, %s51
    %p53 = scmp.eq.s32.totalorder %s15, 0
    %p54 = por %p52, %p53
    %s55 = ssub.s32 %s17, %s24
    %p56 = scmp.eq.s32.totalorder %s55, 0
    %s58 = sadd.s32 %s57, 1
    %s59 = scalar_select %p56, %s57, %s58
    %p62 = pneg %p56
    %p63 = scmp.eq.s32.totalorder %s9, 1
    %p64 = por %p62, %p63
    %p65 = scmp.ne.s32.totalorder %s57, %s60
    %p66 = scmp.eq.s32.totalorder %s9, 0
    %p67 = por %p65, %p66
    %p68 = scmp.ne.s32.totalorder %s57, %s60
    %p69 = scmp.eq.s32.totalorder %s14, 1
    %p70 = por %p68, %p69
    %p71 = scmp.ne.s32.totalorder %s60, %s61
    %p72 = scmp.eq.s32.totalorder %s14, 0
    %p73 = por %p71, %p72
    %p74 = scmp.ne.s32.totalorder %s60, %s61
    %p75 = scmp.eq.s32.totalorder %s15, 1
    %p76 = por %p74, %p75
    %p78 = scmp.ne.s32.totalorder %s61, %s77
    %p79 = scmp.eq.s32.totalorder %s15, 0
    %p80 = por %p78, %p79
    %s81 = ssub.s32 %s17, %s24
    %p82 = scmp.eq.s32.totalorder %s81, 0
    %s84 = sadd.s32 %s83, 1
    %s85 = scalar_select %p82, %s83, %s84
    %p88 = pneg %p82
    %p89 = scmp.eq.s32.totalorder %s9, 1
    %p90 = por %p88, %p89
    %p91 = scmp.ne.s32.totalorder %s83, %s86
    %p92 = scmp.eq.s32.totalorder %s9, 0
    %p93 = por %p91, %p92
    %p94 = scmp.ne.s32.totalorder %s83, %s86
    %p95 = scmp.eq.s32.totalorder %s14, 1
    %p96 = por %p94, %p95
    %p97 = scmp.ne.s32.totalorder %s86, %s87
    %p98 = scmp.eq.s32.totalorder %s14, 0
    %p99 = por %p97, %p98
    %p100 = scmp.ne.s32.totalorder %s86, %s87
    %p101 = scmp.eq.s32.totalorder %s15, 1
    %p102 = por %p100, %p101
    %p104 = scmp.ne.s32.totalorder %s87, %s103
    %p105 = scmp.eq.s32.totalorder %s15, 0
    %p106 = por %p104, %p105
    %s107 = ssub.s32 %s16, %s28
    %s108 = ssub.s32 %s17, %s24
    %s109 = sor.u32 %s107, %s108
    %p110 = scmp.eq.s32.totalorder %s109, 0
    %s112 = sadd.s32 %s111, 1
    %s113 = scalar_select %p110, %s111, %s112
    %p116 = pneg %p110
    %p117 = scmp.eq.s32.totalorder %s9, 1
    %p118 = por %p116, %p117
    %p119 = scmp.ne.s32.totalorder %s111, %s114
    %p120 = scmp.eq.s32.totalorder %s9, 0
    %p121 = por %p119, %p120
    %p122 = scmp.ne.s32.totalorder %s111, %s114
    %p123 = scmp.eq.s32.totalorder %s14, 1
    %p124 = por %p122, %p123
    %p125 = scmp.ne.s32.totalorder %s114, %s115
    %p126 = scmp.eq.s32.totalorder %s14, 0
    %p127 = por %p125, %p126
    %p128 = scmp.ne.s32.totalorder %s114, %s115
    %p129 = scmp.eq.s32.totalorder %s15, 1
    %p130 = por %p128, %p129
    %p132 = scmp.ne.s32.totalorder %s115, %s131
    %p133 = scmp.eq.s32.totalorder %s15, 0
    %p134 = por %p132, %p133
    %p135 = scmp.le.s32.totalorder 1, %s9
    %p136 = scmp.lt.s32.totalorder %s9, 3
    %p137 = pnand %p135, %p136
    %p138 = pneg %p137
    // Predicated region
    $region9: #{discrete_vae_forward.28} parent=5 // pred_check
      _
    $region10: #{discrete_vae_forward.28} parent=5 // pred_check_branch
      %140 = sbr.rel (%p137) target = $region12
    $region11: #{discrete_vae_forward.28} parent=5 // pred_region
      %s141 = ssub.s32 %s9, 1
      // Predicated region
      $region13: #{discrete_vae_forward.28} parent=11 // pred_check
        %p142 = pneg %p73
      $region14: #{discrete_vae_forward.28} parent=11 // pred_check_branch
        %144 = sbr.rel (%p142) target = $region16
      $region15: #{discrete_vae_forward.28} parent=11 // pred_region
        %p145 = scmp.lt.s32.totalorder %s19, 0
        %s146 = scalar_select %p145, %s19, 0
        %s147 = smul.addr %s146, 4
        %s148 = scalar_lea.vmem %s1, %s147
      $region16: #{discrete_vae_forward.28} parent=11 // pred_fallthru
        _
      // Predicated region
      $region17: #{discrete_vae_forward.28} parent=11 // pred_check
        %p149 = pneg %p99
      $region18: #{discrete_vae_forward.28} parent=11 // pred_check_branch
        %151 = sbr.rel (%p149) target = $region20
      $region19: #{discrete_vae_forward.28} parent=11 // pred_region
        %p152 = scmp.lt.s32.totalorder %s19, 0
        %s153 = scalar_select %p152, %s19, 0
        %s154 = scalar_lea.vmem %s2, %s153
      $region20: #{discrete_vae_forward.28} parent=11 // pred_fallthru
        _
    $region12: #{discrete_vae_forward.28} parent=5 // pred_fallthru
      _
    %p155 = scmp.lt.s32.totalorder %s9, 2
    // Predicated region
    $region21: #{discrete_vae_forward.28} parent=5 // pred_check
      %p156 = pneg %p155
    $region22: #{discrete_vae_forward.28} parent=5 // pred_check_branch
      %158 = sbr.rel (%p156) target = $region24
    $region23: #{discrete_vae_forward.28} parent=5 // pred_region
      // Predicated region
      $region25: #{discrete_vae_forward.28} parent=23 // pred_check
        %p159 = pneg %p41
      $region26: #{discrete_vae_forward.28} parent=23 // pred_check_branch
        %161 = sbr.rel (%p159) target = $region28
      $region27: #{discrete_vae_forward.28} parent=23 // pred_region
        %s162 = smul.u32 32, %s16
        %p163 = scmp.lt.s32.totalorder %s162, 63
        %s164 = scalar_select %p163, %s162, 63
        %s165 = smul.addr %s164, 4
        %s166 = scalar_lea.vmem %s0, %s165
        %s167 = smul.u32 32, %s16
      $region28: #{discrete_vae_forward.28} parent=23 // pred_fallthru
        _
    $region24: #{discrete_vae_forward.28} parent=5 // pred_fallthru
      _
    %p168 = scmp.le.s32.totalorder 1, %s9
    %p169 = scmp.lt.s32.totalorder %s9, 3
    %p170 = pnand %p168, %p169
    %p171 = pneg %p170
    // Predicated region
    $region29: #{discrete_vae_forward.28} parent=5 // pred_check
      _
    $region30: #{discrete_vae_forward.28} parent=5 // pred_check_branch
      %173 = sbr.rel (%p170) target = $region32
    $region31: #{discrete_vae_forward.28} parent=5 // pred_region
      %s174 = ssub.s32 %s9, 1
      %s175 = smul.u32 32, %s18
      %p176 = scmp.lt.s32.totalorder %s175, 63
      %s177 = scalar_select %p176, %s175, 63
      %s178 = smul.addr %s177, 4
      %s179 = scalar_lea.vmem %s0, %s178
      %p180 = pneg %p47
      %p181 = pneg %p44
      %p182 = scmp.lt.s32.totalorder %s19, 0
      %s183 = scalar_select %p182, %s19, 0
      %s184 = smul.addr %s183, 4
      %s185 = scalar_lea.vmem %s1, %s184
      %p186 = pneg %p73
      %p187 = pneg %p70
      %p188 = scmp.lt.s32.totalorder %s19, 0
      %s189 = scalar_select %p188, %s19, 0
      %s190 = scalar_lea.vmem %s2, %s189
      %p191 = pneg %p99
      %p192 = pneg %p96
      %p193 = pneg %p127
      %p194 = pneg %p124
      %s195 = smul.u32 32, %s18
      %p196 = scmp.lt.s32.totalorder %s195, 63
      %s197 = scalar_select %p196, %s195, 63
      %p198 = scmp.lt.s32.totalorder %s19, 0
      %s199 = scalar_select %p198, %s19, 0
      %s200 = sadd.s32 %s199, %s197
      %s201 = smul.addr %s200, 8
      %s202 = scalar_lea.vmem %s3, %s201
      %s203 = smul.u32 32, %s18
      %p204 = scmp.lt.s32.totalorder %s203, 63
      %s205 = scalar_select %p204, %s203, 63
      %s206 = smul.addr %s205, 4
      %s207 = scalar_lea.vmem %s0, %s206
      %s208 = smul.u32 32, %s18
      %p209 = scmp.lt.s32.totalorder %s19, 0
      %s210 = scalar_select %p209, %s19, 0
      %s211 = smul.addr %s210, 4
      %s212 = scalar_lea.vmem %s1, %s211
      %p213 = scmp.lt.s32.totalorder %s19, 0
      %s214 = scalar_select %p213, %s19, 0
      %s215 = scalar_lea.vmem %s2, %s214
      %s216 = smul.u32 32, %s18
      %p217 = scmp.lt.s32.totalorder %s216, 63
      %s218 = scalar_select %p217, %s216, 63
      %p219 = scmp.lt.s32.totalorder %s19, 0
      %s220 = scalar_select %p219, %s19, 0
      %s221 = sadd.s32 %s220, %s218
      %s222 = smul.addr %s221, 8
      %s223 = scalar_lea.vmem %s3, %s222
      %s224 = smul.u32 32, %s18
      %v226 = vld [vmem:[%s207] sm:$0xf]
      %v227 = vld [vmem:[%s207 + $0x4] sm:$0xf]
      %v228 = vld [vmem:[%s207 + $0x8] sm:$0xf]
      %v229 = vld [vmem:[%s207 + $0xc] sm:$0xf]
      %v230 = vld [vmem:[%s207 + $0x10] sm:$0xf]
      %v231 = vld [vmem:[%s207 + $0x14] sm:$0xf]
      %v232 = vld [vmem:[%s207 + $0x18] sm:$0xf]
      %v233 = vld [vmem:[%s207 + $0x1c] sm:$0xf]
      %v234 = vld [vmem:[%s207 + $0x20] sm:$0xf]
      %v235 = vld [vmem:[%s207 + $0x24] sm:$0xf]
      %v236 = vld [vmem:[%s207 + $0x28] sm:$0xf]
      %v237 = vld [vmem:[%s207 + $0x2c] sm:$0xf]
      %v238 = vld [vmem:[%s207 + $0x30] sm:$0xf]
      %v239 = vld [vmem:[%s207 + $0x34] sm:$0xf]
      %v240 = vld [vmem:[%s207 + $0x38] sm:$0xf]
      %v241 = vld [vmem:[%s207 + $0x3c] sm:$0xf]
      %v242 = vld [vmem:[%s207 + $0x40] sm:$0xf]
      %v243 = vld [vmem:[%s207 + $0x44] sm:$0xf]
      %v244 = vld [vmem:[%s207 + $0x48] sm:$0xf]
      %v245 = vld [vmem:[%s207 + $0x4c] sm:$0xf]
      %v246 = vld [vmem:[%s207 + $0x50] sm:$0xf]
      %v247 = vld [vmem:[%s207 + $0x54] sm:$0xf]
      %v248 = vld [vmem:[%s207 + $0x58] sm:$0xf]
      %v249 = vld [vmem:[%s207 + $0x5c] sm:$0xf]
      %v250 = vld [vmem:[%s207 + $0x60] sm:$0xf]
      %v251 = vld [vmem:[%s207 + $0x64] sm:$0xf]
      %v252 = vld [vmem:[%s207 + $0x68] sm:$0xf]
      %v253 = vld [vmem:[%s207 + $0x6c] sm:$0xf]
      %v254 = vld [vmem:[%s207 + $0x70] sm:$0xf]
      %v255 = vld [vmem:[%s207 + $0x74] sm:$0xf]
      %v256 = vld [vmem:[%s207 + $0x78] sm:$0xf]
      %v257 = vld [vmem:[%s207 + $0x7c] sm:$0xf]
      %v258 = vld [vmem:[%s212] sm:$0xf]
      %v259 = vld [vmem:[%s212 + $0x4] sm:$0xf]
      %v260 = vld [vmem:[%s212 + $0x8] sm:$0xf]
      %v261 = vld [vmem:[%s212 + $0xc] sm:$0xf]
      %v262 = vld [vmem:[%s215] sm:$0x1]
      %v264 = vlaneseq
      %v265 = vshrl.u32 %v264, 7
      %v266 = vsub.s32 0, %v265
      %v267 = vrot.slane %v262, %v266
      %v301 = vunpack.c.l.b16 %v226
      %v302 = vunpack.c.l.b16 %v227
      %v303 = vunpack.c.l.b16 %v228
      %v304 = vunpack.c.l.b16 %v229
      %v305 = vunpack.c.l.b16 %v230
      %v306 = vunpack.c.l.b16 %v231
      %v307 = vunpack.c.l.b16 %v232
      %v308 = vunpack.c.l.b16 %v233
      %v309 = vunpack.c.l.b16 %v234
      %v310 = vunpack.c.l.b16 %v235
      %v311 = vunpack.c.l.b16 %v236
      %v312 = vunpack.c.l.b16 %v237
      %v313 = vunpack.c.l.b16 %v238
      %v314 = vunpack.c.l.b16 %v239
      %v315 = vunpack.c.l.b16 %v240
      %v316 = vunpack.c.l.b16 %v241
      %v317 = vunpack.c.l.b16 %v242
      %v318 = vunpack.c.l.b16 %v243
      %v319 = vunpack.c.l.b16 %v244
      %v320 = vunpack.c.l.b16 %v245
      %v321 = vunpack.c.l.b16 %v246
      %v322 = vunpack.c.l.b16 %v247
      %v323 = vunpack.c.l.b16 %v248
      %v324 = vunpack.c.l.b16 %v249
      %v325 = vunpack.c.l.b16 %v250
      %v326 = vunpack.c.l.b16 %v251
      %v327 = vunpack.c.l.b16 %v252
      %v328 = vunpack.c.l.b16 %v253
      %v329 = vunpack.c.l.b16 %v254
      %v330 = vunpack.c.l.b16 %v255
      %v331 = vunpack.c.l.b16 %v256
      %v332 = vunpack.c.l.b16 %v257
      %v333 = vpack.c.b16 %v302, %v301
      %v334 = vpack.c.b16 %v304, %v303
      %v335 = vpack.c.b16 %v306, %v305
      %v336 = vpack.c.b16 %v308, %v307
      %v337 = vpack.c.b16 %v310, %v309
      %v338 = vpack.c.b16 %v312, %v311
      %v339 = vpack.c.b16 %v314, %v313
      %v340 = vpack.c.b16 %v316, %v315
      %v341 = vpack.c.b16 %v318, %v317
      %v342 = vpack.c.b16 %v320, %v319
      %v343 = vpack.c.b16 %v322, %v321
      %v344 = vpack.c.b16 %v324, %v323
      %v345 = vpack.c.b16 %v326, %v325
      %v346 = vpack.c.b16 %v328, %v327
      %v347 = vpack.c.b16 %v330, %v329
      %v348 = vpack.c.b16 %v332, %v331
      %v353 = vunpack.c.l.b16 %v258
      %v354 = vunpack.c.l.b16 %v259
      %v355 = vunpack.c.l.b16 %v260
      %v356 = vunpack.c.l.b16 %v261
      %v357 = vpack.c.b16 %v354, %v353
      %v358 = vpack.c.b16 %v356, %v355
      %vm361 = vcmask 261120
      %v363 = vsel %vm361, %v333, 0
      %v366 = vsel %vm361, %v334, 0
      %v369 = vsel %vm361, %v335, 0
      %v372 = vsel %vm361, %v336, 0
      %v375 = vsel %vm361, %v337, 0
      %v378 = vsel %vm361, %v338, 0
      %v381 = vsel %vm361, %v339, 0
      %v384 = vsel %vm361, %v340, 0
      %v387 = vsel %vm361, %v341, 0
      %v390 = vsel %vm361, %v342, 0
      %v393 = vsel %vm361, %v343, 0
      %v396 = vsel %vm361, %v344, 0
      %v399 = vsel %vm361, %v345, 0
      %v402 = vsel %vm361, %v346, 0
      %v405 = vsel %vm361, %v347, 0
      %v408 = vsel %vm361, %v348, 0
      %410 = vmatprep.subr.bf16.mxu0 0
      %411 = vmatpush1.bf16.msra.mxu0 %v357
      %412 = vmatprep.subr.bf16.mxu0 0
      %413 = vmatpush1.bf16.msra.mxu0 %v358
      %414 = vmatprep.subr.bf16.mxu0 0
      %415 = vmatpush1.bf16.msra.mxu0 0
      %416 = vmatprep.subr.bf16.mxu0 0
      %417 = vmatpush1.bf16.msra.mxu0 0
      %418 = vmatprep.subr.bf16.mxu0 0
      %419 = vmatpush1.bf16.msra.mxu0 0
      %420 = vmatprep.subr.bf16.mxu0 0
      %421 = vmatpush1.bf16.msra.mxu0 0
      %422 = vmatprep.subr.bf16.mxu0 0
      %423 = vmatpush1.bf16.msra.mxu0 0
      %424 = vmatprep.subr.bf16.mxu0 0
      %425 = vmatpush1.bf16.msra.mxu0 0
      %426 = vmatprep.subr.bf16.mxu0 0
      %427 = vmatpush1.bf16.msra.mxu0 0
      %428 = vmatprep.subr.bf16.mxu0 0
      %429 = vmatpush1.bf16.msra.mxu0 0
      %430 = vmatprep.subr.bf16.mxu0 0
      %431 = vmatpush1.bf16.msra.mxu0 0
      %432 = vmatprep.subr.bf16.mxu0 0
      %433 = vmatpush1.bf16.msra.mxu0 0
      %434 = vmatprep.subr.bf16.mxu0 0
      %435 = vmatpush1.bf16.msra.mxu0 0
      %436 = vmatprep.subr.bf16.mxu0 0
      %437 = vmatpush1.bf16.msra.mxu0 0
      %438 = vmatprep.subr.bf16.mxu0 0
      %439 = vmatpush1.bf16.msra.mxu0 0
      %440 = vmatprep.subr.bf16.mxu0 0
      %441 = vmatpush1.bf16.msra.mxu0 0
      %442 = vmatprep.mubr.bf16.mxu0 0
      %443 = vmatmul.mubr.bf16.gmra.mrb[0].mxu0 %v363
      %v444 = vpop.f32.mrb[0].mxu0
      %v445 = vadd.f32 %v267, %v444
      %v446 = vpop.f32.mrb[0].mxu0
      %v447 = vpop.f32.mrb[0].mxu0
      %v448 = vadd.f32 %v267, %v447
      %v449 = vpop.f32.mrb[0].mxu0
      %450 = vmatprep.mubr.bf16.mxu0 0
      %451 = vmatmul.mubr.bf16.gmra.mrb[0].mxu0 %v366
      %v452 = vpop.f32.mrb[0].mxu0
      %v453 = vadd.f32 %v267, %v452
      %v454 = vpop.f32.mrb[0].mxu0
      %v455 = vpop.f32.mrb[0].mxu0
      %v456 = vadd.f32 %v267, %v455
      %v457 = vpop.f32.mrb[0].mxu0
      %458 = vmatprep.mubr.bf16.mxu0 0
      %459 = vmatmul.mubr.bf16.gmra.mrb[0].mxu0 %v369
      %v460 = vpop.f32.mrb[0].mxu0
      %v461 = vadd.f32 %v267, %v460
      %v462 = vpop.f32.mrb[0].mxu0
      %v463 = vpop.f32.mrb[0].mxu0
      %v464 = vadd.f32 %v267, %v463
      %v465 = vpop.f32.mrb[0].mxu0
      %466 = vmatprep.mubr.bf16.mxu0 0
      %467 = vmatmul.mubr.bf16.gmra.mrb[0].mxu0 %v372
      %v468 = vpop.f32.mrb[0].mxu0
      %v469 = vadd.f32 %v267, %v468
      %v470 = vpop.f32.mrb[0].mxu0
      %v471 = vpop.f32.mrb[0].mxu0
      %v472 = vadd.f32 %v267, %v471
      %v473 = vpop.f32.mrb[0].mxu0
      %474 = vmatprep.mubr.bf16.mxu0 0
      %475 = vmatmul.mubr.bf16.gmra.mrb[0].mxu0 %v375
      %v476 = vpop.f32.mrb[0].mxu0
      %v477 = vadd.f32 %v267, %v476
      %v478 = vpop.f32.mrb[0].mxu0
      %v479 = vpop.f32.mrb[0].mxu0
      %v480 = vadd.f32 %v267, %v479
      %v481 = vpop.f32.mrb[0].mxu0
      %482 = vmatprep.mubr.bf16.mxu0 0
      %483 = vmatmul.mubr.bf16.gmra.mrb[0].mxu0 %v378
      %v484 = vpop.f32.mrb[0].mxu0
      %v485 = vadd.f32 %v267, %v484
      %v486 = vpop.f32.mrb[0].mxu0
      %v487 = vpop.f32.mrb[0].mxu0
      %v488 = vadd.f32 %v267, %v487
      %v489 = vpop.f32.mrb[0].mxu0
      %490 = vmatprep.mubr.bf16.mxu0 0
      %491 = vmatmul.mubr.bf16.gmra.mrb[0].mxu0 %v381
      %v492 = vpop.f32.mrb[0].mxu0
      %v493 = vadd.f32 %v267, %v492
      %v494 = vpop.f32.mrb[0].mxu0
      %v495 = vpop.f32.mrb[0].mxu0
      %v496 = vadd.f32 %v267, %v495
      %v497 = vpop.f32.mrb[0].mxu0
      %498 = vmatprep.mubr.bf16.mxu0 0
      %499 = vmatmul.mubr.bf16.gmra.mrb[0].mxu0 %v384
      %v500 = vpop.f32.mrb[0].mxu0
      %v501 = vadd.f32 %v267, %v500
      %v502 = vpop.f32.mrb[0].mxu0
      %v503 = vpop.f32.mrb[0].mxu0
      %v504 = vadd.f32 %v267, %v503
      %v505 = vpop.f32.mrb[0].mxu0
      %506 = vmatprep.mubr.bf16.mxu0 0
      %507 = vmatmul.mubr.bf16.gmra.mrb[0].mxu0 %v387
      %v508 = vpop.f32.mrb[0].mxu0
      %v509 = vadd.f32 %v267, %v508
      %v510 = vpop.f32.mrb[0].mxu0
      %v511 = vpop.f32.mrb[0].mxu0
      %v512 = vadd.f32 %v267, %v511
      %v513 = vpop.f32.mrb[0].mxu0
      %514 = vmatprep.mubr.bf16.mxu0 0
      %515 = vmatmul.mubr.bf16.gmra.mrb[0].mxu0 %v390
      %v516 = vpop.f32.mrb[0].mxu0
      %v517 = vadd.f32 %v267, %v516
      %v518 = vpop.f32.mrb[0].mxu0
      %v519 = vpop.f32.mrb[0].mxu0
      %v520 = vadd.f32 %v267, %v519
      %v521 = vpop.f32.mrb[0].mxu0
      %522 = vmatprep.mubr.bf16.mxu0 0
      %523 = vmatmul.mubr.bf16.gmra.mrb[0].mxu0 %v393
      %v524 = vpop.f32.mrb[0].mxu0
      %v525 = vadd.f32 %v267, %v524
      %v526 = vpop.f32.mrb[0].mxu0
      %v527 = vpop.f32.mrb[0].mxu0
      %v528 = vadd.f32 %v267, %v527
      %v529 = vpop.f32.mrb[0].mxu0
      %530 = vmatprep.mubr.bf16.mxu0 0
      %531 = vmatmul.mubr.bf16.gmra.mrb[0].mxu0 %v396
      %v532 = vpop.f32.mrb[0].mxu0
      %v533 = vadd.f32 %v267, %v532
      %v534 = vpop.f32.mrb[0].mxu0
      %v535 = vpop.f32.mrb[0].mxu0
      %v536 = vadd.f32 %v267, %v535
      %v537 = vpop.f32.mrb[0].mxu0
      %538 = vmatprep.mubr.bf16.mxu0 0
      %539 = vmatmul.mubr.bf16.gmra.mrb[0].mxu0 %v399
      %v540 = vpop.f32.mrb[0].mxu0
      %v541 = vadd.f32 %v267, %v540
      %v542 = vpop.f32.mrb[0].mxu0
      %v543 = vpop.f32.mrb[0].mxu0
      %v544 = vadd.f32 %v267, %v543
      %v545 = vpop.f32.mrb[0].mxu0
      %546 = vmatprep.mubr.bf16.mxu0 0
      %547 = vmatmul.mubr.bf16.gmra.mrb[0].mxu0 %v402
      %v548 = vpop.f32.mrb[0].mxu0
      %v549 = vadd.f32 %v267, %v548
      %v550 = vpop.f32.mrb[0].mxu0
      %v551 = vpop.f32.mrb[0].mxu0
      %v552 = vadd.f32 %v267, %v551
      %v553 = vpop.f32.mrb[0].mxu0
      %554 = vmatprep.mubr.bf16.mxu0 0
      %555 = vmatmul.mubr.bf16.gmra.mrb[0].mxu0 %v405
      %v556 = vpop.f32.mrb[0].mxu0
      %v557 = vadd.f32 %v267, %v556
      %v558 = vpop.f32.mrb[0].mxu0
      %v559 = vpop.f32.mrb[0].mxu0
      %v560 = vadd.f32 %v267, %v559
      %v561 = vpop.f32.mrb[0].mxu0
      %562 = vmatprep.mubr.bf16.mxu0 0
      %563 = vmatmul.mubr.bf16.gmra.mrb[0].mxu0 %v408
      %v564 = vpop.f32.mrb[0].mxu0
      %v565 = vadd.f32 %v267, %v564
      %v566 = vpop.f32.mrb[0].mxu0
      %v567 = vpop.f32.mrb[0].mxu0
      %v568 = vadd.f32 %v267, %v567
      %v569 = vpop.f32.mrb[0].mxu0
      %570 = vdwg.mxu0
      %571 = vst [vmem:[%s223] sm:$0xff] %v445
      %572 = vst [vmem:[%s223 + $0x8] sm:$0xff] %v448
      %573 = vst [vmem:[%s223 + $0x10] sm:$0xff] %v453
      %574 = vst [vmem:[%s223 + $0x18] sm:$0xff] %v456
      %575 = vst [vmem:[%s223 + $0x20] sm:$0xff] %v461
      %576 = vst [vmem:[%s223 + $0x28] sm:$0xff] %v464
      %577 = vst [vmem:[%s223 + $0x30] sm:$0xff] %v469
      %578 = vst [vmem:[%s223 + $0x38] sm:$0xff] %v472
      %579 = vst [vmem:[%s223 + $0x40] sm:$0xff] %v477
      %580 = vst [vmem:[%s223 + $0x48] sm:$0xff] %v480
      %581 = vst [vmem:[%s223 + $0x50] sm:$0xff] %v485
      %582 = vst [vmem:[%s223 + $0x58] sm:$0xff] %v488
      %583 = vst [vmem:[%s223 + $0x60] sm:$0xff] %v493
      %584 = vst [vmem:[%s223 + $0x68] sm:$0xff] %v496
      %585 = vst [vmem:[%s223 + $0x70] sm:$0xff] %v501
      %586 = vst [vmem:[%s223 + $0x78] sm:$0xff] %v504
      %587 = vst [vmem:[%s223 + $0x80] sm:$0xff] %v509
      %588 = vst [vmem:[%s223 + $0x88] sm:$0xff] %v512
      %589 = vst [vmem:[%s223 + $0x90] sm:$0xff] %v517
      %590 = vst [vmem:[%s223 + $0x98] sm:$0xff] %v520
      %591 = vst [vmem:[%s223 + $0xa0] sm:$0xff] %v525
      %592 = vst [vmem:[%s223 + $0xa8] sm:$0xff] %v528
      %593 = vst [vmem:[%s223 + $0xb0] sm:$0xff] %v533
      %594 = vst [vmem:[%s223 + $0xb8] sm:$0xff] %v536
      %595 = vst [vmem:[%s223 + $0xc0] sm:$0xff] %v541
      %596 = vst [vmem:[%s223 + $0xc8] sm:$0xff] %v544
      %597 = vst [vmem:[%s223 + $0xd0] sm:$0xff] %v549
      %598 = vst [vmem:[%s223 + $0xd8] sm:$0xff] %v552
      %599 = vst [vmem:[%s223 + $0xe0] sm:$0xff] %v557
      %600 = vst [vmem:[%s223 + $0xe8] sm:$0xff] %v560
      %601 = vst [vmem:[%s223 + $0xf0] sm:$0xff] %v565
      %602 = vst [vmem:[%s223 + $0xf8] sm:$0xff] %v568
      %s603 = smul.u32 32, %s18
      %p604 = scmp.lt.s32.totalorder %s603, 63
      %s605 = scalar_select %p604, %s603, 63
      %p606 = scmp.lt.s32.totalorder %s19, 0
      %s607 = scalar_select %p606, %s19, 0
      %s608 = sadd.s32 %s607, %s605
      %s609 = smul.addr %s608, 8
      %s610 = scalar_lea.vmem %s3, %s609
      // Predicated region
      $region33: #{discrete_vae_forward.28} parent=31 // pred_check
        %p611 = pneg %p124
      $region34: #{discrete_vae_forward.28} parent=31 // pred_check_branch
        %613 = sbr.rel (%p611) target = $region36
      $region35: #{discrete_vae_forward.28} parent=31 // pred_region
        %s614 = smul.u32 32, %s18
      $region36: #{discrete_vae_forward.28} parent=31 // pred_fallthru
        _
    $region32: #{discrete_vae_forward.28} parent=5 // pred_fallthru
      _
    %p615 = scmp.le.s32.totalorder 2, %s9
    // Predicated region
    $region37: #{discrete_vae_forward.28} parent=5 // pred_check
      %p616 = pneg %p615
    $region38: #{discrete_vae_forward.28} parent=5 // pred_check_branch
      %618 = sbr.rel (%p616) target = $region40
    $region39: #{discrete_vae_forward.28} parent=5 // pred_region
      %s619 = ssub.s32 %s9, 2
      // Predicated region
      $region41: #{discrete_vae_forward.28} parent=39 // pred_check
        %p620 = pneg %p130
      $region42: #{discrete_vae_forward.28} parent=39 // pred_check_branch
        %622 = sbr.rel (%p620) target = $region44
      $region43: #{discrete_vae_forward.28} parent=39 // pred_region
        %s623 = smul.u32 32, %s20
        %p624 = scmp.lt.s32.totalorder %s623, 63
        %s625 = scalar_select %p624, %s623, 63
        %p626 = scmp.lt.s32.totalorder %s21, 0
        %s627 = scalar_select %p626, %s21, 0
        %s628 = sadd.s32 %s627, %s625
        %s629 = smul.addr %s628, 8
        %s630 = scalar_lea.vmem %s3, %s629
      $region44: #{discrete_vae_forward.28} parent=39 // pred_fallthru
        _
    $region40: #{discrete_vae_forward.28} parent=5 // pred_fallthru
      _
  $region6: #{discrete_vae_forward.28} parent=0 // loop_footer
    %s13 = sadd.s32 1, %s9
  $region7: #{discrete_vae_forward.28} parent=0 // loop_footer_branch
    %8 = sbr.rel target = $region3
  $region8: #{discrete_vae_forward.28} parent=0 // loop_exit
    _

// kernel: discrete_vae_forward.29
$region0: #{discrete_vae_forward.29}
  #allocation0 [shape = 'u32[]', space=smem, size = 0x4, offset = 0x4, fixed_abs, tag = 'smem constant byte address 0x4 - core index']
  #allocation1 [shape = 'u32[144,128]{1,0:T(1,128)}', space=vmem, size = 0x12000, scoped, tag = 'internal scratch']
  %s0 = inlined_call_operand.vmem [shape: f32[32,48], index: 0, kind: input, shape index: {}]
  %s1 = inlined_call_operand.vmem [shape: f32[32,48], index: 1, kind: input, shape index: {}]
  %s2 = inlined_call_operand.vmem [shape: f32[1,48], index: 2, kind: input, shape index: {}]
  %s3 = inlined_call_operand.vmem [shape: f32[1,48], index: 3, kind: input, shape index: {}]
  %s4 = inlined_call_operand.hbm [shape: f32[1,1], index: 4, kind: output, shape index: {}]
  %s5 = sld [smem:[#allocation0]]
  $region30: #{discrete_vae_forward.29} parent=0
    _
  %s7 = ssub.s32 1, %s5
  %s8 = scalar_select 0, %s7, %s5
  $region1: #{discrete_vae_forward.29} parent=0
    #allocation2 [shape = 'u8[512]{0}', space=vmem, size = 0x400, scoped, tag = 'output window, operand 0, single buffered']
    #allocation3 [shape = 's32[1]{0}', space=sflag, size = 0x4, scoped, tag = 'scoped memory for discrete_vae_forward.29']
    %9 = vsyncpa [#allocation3], 0
    // Predicated region
    $region2: #{discrete_vae_forward.29} parent=1 // pred_check
      _
    $region3: #{discrete_vae_forward.29} parent=1 // pred_check_branch
      %11 = sbr.rel (0) target = $region5
    $region4: #{discrete_vae_forward.29} parent=1 // pred_region
      _
    $region5: #{discrete_vae_forward.29} parent=1 // pred_fallthru
      _
    // Predicated region
    $region6: #{discrete_vae_forward.29} parent=1 // pred_check
      _
    $region7: #{discrete_vae_forward.29} parent=1 // pred_check_branch
      %13 = sbr.rel (0) target = $region9
    $region8: #{discrete_vae_forward.29} parent=1 // pred_region
      _
    $region9: #{discrete_vae_forward.29} parent=1 // pred_fallthru
      _
    // Predicated region
    $region10: #{discrete_vae_forward.29} parent=1 // pred_check
      _
    $region11: #{discrete_vae_forward.29} parent=1 // pred_check_branch
      %15 = sbr.rel (0) target = $region13
    $region12: #{discrete_vae_forward.29} parent=1 // pred_region
      _
    $region13: #{discrete_vae_forward.29} parent=1 // pred_fallthru
      _
    // Predicated region
    $region14: #{discrete_vae_forward.29} parent=1 // pred_check
      _
    $region15: #{discrete_vae_forward.29} parent=1 // pred_check_branch
      %17 = sbr.rel (0) target = $region17
    $region16: #{discrete_vae_forward.29} parent=1 // pred_region
      _
    $region17: #{discrete_vae_forward.29} parent=1 // pred_fallthru
      _
    %p18 = scmp.eq.s32.totalorder 0, 0
    // Predicated region
    $region18: #{discrete_vae_forward.29} parent=1 // pred_check
      %p19 = pneg %p18
    $region19: #{discrete_vae_forward.29} parent=1 // pred_check_branch
      %21 = sbr.rel (%p19) target = $region21
    $region20: #{discrete_vae_forward.29} parent=1 // pred_region
      %vm22 = vcmask 0
      %23 = vst.msk [vmem:[#allocation2] sm:$0x1] %vm22, 0.0
    $region21: #{discrete_vae_forward.29} parent=1 // pred_fallthru
      _
    %v24 = vld [vmem:[%s0] sm:$0xff]
    %v25 = vld [vmem:[%s0 + $0x8] sm:$0xff]
    %v26 = vld [vmem:[%s0 + $0x10] sm:$0xff]
    %v27 = vld [vmem:[%s0 + $0x18] sm:$0xff]
    %v28 = vld [vmem:[%s2] sm:$0x1]
    %v30 = vlaneseq
    %v31 = vshrl.u32 %v30, 7
    %v32 = vsub.s32 0, %v31
    %v33 = vrot.slane %v28, %v32
    %v35 = vmul.f32 %v24, %v33
    %v36 = vmul.f32 %v25, %v33
    %v37 = vmul.f32 %v26, %v33
    %v38 = vmul.f32 %v27, %v33
    %v39 = vld [vmem:[%s3] sm:$0x1]
    %v41 = vlaneseq
    %v42 = vshrl.u32 %v41, 7
    %v43 = vsub.s32 0, %v42
    %v44 = vrot.slane %v39, %v43
    %v46 = vadd.f32 %v35, %v44
    %v47 = vadd.f32 %v36, %v44
    %v48 = vadd.f32 %v37, %v44
    %v49 = vadd.f32 %v38, %v44
    %v50 = vld [vmem:[%s1] sm:$0xff]
    %v51 = vld [vmem:[%s1 + $0x8] sm:$0xff]
    %v52 = vld [vmem:[%s1 + $0x10] sm:$0xff]
    %v53 = vld [vmem:[%s1 + $0x18] sm:$0xff]
    %v54 = vsub.f32 %v46, %v50
    %v55 = vsub.f32 %v47, %v51
    %v56 = vsub.f32 %v48, %v52
    %v57 = vsub.f32 %v49, %v53
    %v58 = vlaneseq
    %v59 = vshrl.u32 %v58, 7
    %v60 = vadd.s32 %v59, 8
    %v61 = vadd.s32 %v59, 16
    %v62 = vadd.s32 %v59, 24
    %s63 = smul.u32 0, 32
    %v64 = vstv %s63
    %v65 = vadd.s32 %v59, %v64
    %v66 = vadd.s32 %v60, %v64
    %v67 = vadd.s32 %v61, %v64
    %v68 = vadd.s32 %v62, %v64
    %vm69 = vcmp.lt.s32.totalorder %v65, 32
    %vm70 = vcmp.lt.s32.totalorder %v66, 32
    %vm71 = vcmp.lt.s32.totalorder %v67, 32
    %vm72 = vcmp.lt.s32.totalorder %v68, 32
    %v73 = vsel %vm69, %v54, 0.0
    %v74 = vsel %vm70, %v55, 0.0
    %v75 = vsel %vm71, %v56, 0.0
    %v76 = vsel %vm72, %v57, 0.0
    %v77 = vld [vmem:[#allocation2] sm:$0x1]
    %v78 = vmul.f32 %v73, %v73
    %v79 = vmul.f32 %v74, %v74
    %v80 = vmul.f32 %v75, %v75
    %v81 = vmul.f32 %v76, %v76
    %vm82 = vcmask 392192
    %v83 = vsel %vm82, %v78, 0.0
    %84 = vadd.xlane.f32.xlu0 %v83
    %v85 = vpop.xlane.xlu0 %84
    %v86 = vsel %vm82, %v79, 0.0
    %87 = vadd.xlane.f32.xlu0 %v86
    %v88 = vpop.xlane.xlu0 %87
    %v89 = vsel %vm82, %v80, 0.0
    %90 = vadd.xlane.f32.xlu0 %v89
    %v91 = vpop.xlane.xlu0 %90
    %v92 = vsel %vm82, %v81, 0.0
    %93 = vadd.xlane.f32.xlu0 %v92
    %v94 = vpop.xlane.xlu0 %93
    %v95 = vadd.f32 %v85, %v88
    %v96 = vadd.f32 %v95, %v91
    %v97 = vadd.f32 %v96, %v94
    %v98 = vrot.slane %v97, 4
    %v99 = vadd.f32 %v97, %v98
    %v100 = vrot.slane %v99, 2
    %v101 = vadd.f32 %v99, %v100
    %v102 = vrot.slane %v101, 1
    %v103 = vadd.f32 %v101, %v102
    %v104 = vadd.f32 %v77, %v103
    %vm105 = vcmask 0
    %106 = vst.msk [vmem:[#allocation2] sm:$0x1] %vm105, %v104
    // Predicated region
    $region22: #{discrete_vae_forward.29} parent=1 // pred_check
      _
    $region23: #{discrete_vae_forward.29} parent=1 // pred_check_branch
      %108 = sbr.rel (0) target = $region25
    $region24: #{discrete_vae_forward.29} parent=1 // pred_region
      %s110 = ssub.s32 16, 16
      %111 = vsyncadd [#allocation3], %s110
      %s113 = sshll.u32 [#allocation2], 4
      %s114 = int_to_ptr.vmem [resolvable:$true] %s113
      %116 = dma.vmem_to_hbm [thread:$0]  %s114, 16, %s4, [#allocation3]
    $region25: #{discrete_vae_forward.29} parent=1 // pred_fallthru
      _
    // Predicated region
    $region26: #{discrete_vae_forward.29} parent=1 // pred_check
      _
    $region27: #{discrete_vae_forward.29} parent=1 // pred_check_branch
      %118 = sbr.rel (0) target = $region29
    $region28: #{discrete_vae_forward.29} parent=1 // pred_region
      %119 = dma.done [#allocation3], 16
    $region29: #{discrete_vae_forward.29} parent=1 // pred_fallthru
      _
    %120 = vsyncpa [#allocation3], 1

</llo_original>
